<compile_context>
chip_gen: v7x
topology: tpu7x:2x2x1
jax: 0.10.0
libtpu: 0.0.40
codegen_flags: <defaults>
</compile_context>

<pallas_src>
import functools
import math

import jax
import jax.numpy as jnp
from jax.experimental import pallas as pl
from jax.experimental.pallas import tpu as pltpu


# ----------------------------- helpers -----------------------------

def _erf(x):
    # Abramowitz & Stegun 7.1.26 polynomial (abs err ~1.5e-7): exact-GELU
    # semantics using only ops guaranteed to lower in Mosaic.
    a1, a2, a3, a4, a5 = 0.254829592, -0.284496736, 1.421413741, -1.453152027, 1.061405429
    p = 0.3275911
    sgn = jnp.where(x >= 0.0, 1.0, -1.0)
    ax = jnp.abs(x)
    t = 1.0 / (1.0 + p * ax)
    poly = ((((a5 * t + a4) * t + a3) * t + a2) * t + a1) * t
    return sgn * (1.0 - poly * jnp.exp(-ax * ax))


def _gelu(x):
    return 0.5 * x * (1.0 + _erf(x * (1.0 / math.sqrt(2.0))))


def _pick_tile(dim, candidates):
    """Largest candidate tile that evenly divides `dim`, else the full dim."""
    # TODO(synk): dims not divisible by any candidate (e.g. odd vocab sizes) fall
    # back to a single full block; pad such dims to a multiple of 128 upstream.
    for c in candidates:
        if c <= dim and dim % c == 0:
            return c
    return dim


_TM_RES = (512, 256, 128, 64, 32, 16, 8)          # row tiles, resident-weight path
_TM_STREAM = (1024, 512, 256, 128, 64, 32, 16, 8)  # row tiles, streaming (LM head)
_TN_CAND = (512, 256, 128)                         # output-column tiles
_TK_CAND = (512, 256, 128)                         # contraction tiles (streaming)
_TQ_CAND = (256, 128, 64, 32, 16, 8)               # attention query tiles

_RESIDENT_WEIGHT_BYTES = 8 * 1024 * 1024           # bf16 weights <= 8 MiB stay VMEM-resident


def _vmem_limit_bytes():
    """Raise the scoped-VMEM limit, clamped to the detected chip capacity."""
    try:
        info = pltpu.get_tpu_info()
        cap = getattr(info, "vmem_capacity_bytes", None)
        if cap:
            return int(min(64 * 1024 * 1024, (cap * 3) // 4))
    except Exception:
        pass
    return None


_VMEM_LIMIT = _vmem_limit_bytes()


def _cparams(semantics):
    return pltpu.CompilerParams(dimension_semantics=semantics,
                                vmem_limit_bytes=_VMEM_LIMIT)


# ----------------------------- dense: resident-weight path --------------------

def _dense_res_kernel(*refs, has_bias, has_residual, activation, tn):
    it = iter(refs)
    x_ref, w_ref = next(it), next(it)
    b_ref = next(it) if has_bias else None
    r_ref = next(it) if has_residual else None
    o_ref = next(it)

    if tn == w_ref.shape[1]:
        w = w_ref[...]                                        # single column tile
    else:
        start = pl.multiple_of(pl.program_id(1) * tn, tn)
        w = w_ref[:, pl.ds(start, tn)]                        # slice resident weight in VMEM

    y = jnp.dot(x_ref[...].astype(jnp.bfloat16), w, preferred_element_type=jnp.float32)
    if has_bias:
        y = y + b_ref[...]
    if activation == "gelu":
        y = _gelu(y)
    if has_residual:
        y = y + r_ref[...]
    o_ref[...] = y.astype(o_ref.dtype)


def _dense_resident(x, w, b, residual, activation, out_dtype):
    M, K = x.shape
    N = w.shape[1]
    tm = _pick_tile(M, _TM_RES)
    tn = _pick_tile(N, _TN_CAND)

    in_specs = [pl.BlockSpec((tm, K), lambda i, j: (i, 0)),
                pl.BlockSpec((K, N), lambda i, j: (0, 0))]    # full weight, constant index
    inputs = [x, w]
    if b is not None:
        in_specs.append(pl.BlockSpec((1, tn), lambda i, j: (0, j)))
        inputs.append(b.reshape(1, N).astype(jnp.float32))
    if residual is not None:
        in_specs.append(pl.BlockSpec((tm, tn), lambda i, j: (i, j)))
        inputs.append(residual)

    kernel = functools.partial(
        _dense_res_kernel, has_bias=b is not None, has_residual=residual is not None,
        activation=activation, tn=tn)

    return pl.pallas_call(
        kernel,
        grid=(M // tm, N // tn),
        in_specs=in_specs,
        out_specs=pl.BlockSpec((tm, tn), lambda i, j: (i, j)),
        out_shape=jax.ShapeDtypeStruct((M, N), out_dtype),
        compiler_params=_cparams(("parallel", "parallel")),
    )(*inputs)


# ----------------------------- dense: streaming path (LM head) ----------------

def _dense_stream_kernel(*refs, has_bias, has_residual, activation, transpose_rhs):
    it = iter(refs)
    x_ref, w_ref = next(it), next(it)
    b_ref = next(it) if has_bias else None
    r_ref = next(it) if has_residual else None
    o_ref, acc_ref = next(it), next(it)

    k = pl.program_id(2)

    @pl.when(k == 0)
    def _():
        acc_ref[...] = jnp.zeros_like(acc_ref)

    x = x_ref[...].astype(jnp.bfloat16)
    w = w_ref[...]
    if transpose_rhs:                                         # w block is (tn, tk)
        acc_ref[...] += jax.lax.dot_general(
            x, w, (((1,), (1,)), ((), ())), preferred_element_type=jnp.float32)
    else:
        acc_ref[...] += jnp.dot(x, w, preferred_element_type=jnp.float32)

    @pl.when(k == pl.num_programs(2) - 1)
    def _():
        y = acc_ref[...]
        if has_bias:
            y = y + b_ref[...]
        if activation == "gelu":
            y = _gelu(y)
        if has_residual:
            y = y + r_ref[...]
        o_ref[...] = y.astype(o_ref.dtype)


def _dense_stream(x, w, b, residual, activation, transpose_rhs, out_dtype):
    M, K = x.shape
    N = w.shape[0] if transpose_rhs else w.shape[1]
    tm = _pick_tile(M, _TM_STREAM)          # big tm -> fewer full weight sweeps
    tn = _pick_tile(N, _TN_CAND)
    tk = _pick_tile(K, _TK_CAND)

    in_specs = [pl.BlockSpec((tm, tk), lambda i, j, k: (i, k))]
    inputs = [x, w]
    if transpose_rhs:
        in_specs.append(pl.BlockSpec((tn, tk), lambda i, j, k: (j, k)))
    else:
        in_specs.append(pl.BlockSpec((tk, tn), lambda i, j, k: (k, j)))
    if b is not None:
        in_specs.append(pl.BlockSpec((1, tn), lambda i, j, k: (0, j)))
        inputs.append(b.reshape(1, N).astype(jnp.float32))
    if residual is not None:
        in_specs.append(pl.BlockSpec((tm, tn), lambda i, j, k: (i, j)))
        inputs.append(residual)

    kernel = functools.partial(
        _dense_stream_kernel, has_bias=b is not None, has_residual=residual is not None,
        activation=activation, transpose_rhs=transpose_rhs)

    return pl.pallas_call(
        kernel,
        grid=(M // tm, N // tn, K // tk),
        in_specs=in_specs,
        out_specs=pl.BlockSpec((tm, tn), lambda i, j, k: (i, j)),
        out_shape=jax.ShapeDtypeStruct((M, N), out_dtype),
        scratch_shapes=[pltpu.VMEM((tm, tn), jnp.float32)],
        compiler_params=_cparams(("parallel", "parallel", "arbitrary")),
    )(*inputs)


def dense(x, w, b=None, residual=None, activation=None, transpose_rhs=False,
          out_dtype=jnp.float32, force_stream=False):
    """y = x @ w (+ b) (GELU?) (+ residual)."""
    w_bytes = w.size * w.dtype.itemsize
    if (not force_stream) and (not transpose_rhs) and w_bytes <= _RESIDENT_WEIGHT_BYTES:
        return _dense_resident(x, w, b, residual, activation, out_dtype)
    return _dense_stream(x, w, b, residual, activation, transpose_rhs, out_dtype)


# ----------------------------- fused layernorm + dense (resident weight) ------

def _ln_dense_kernel(*refs, has_bias, activation, eps, tn):
    it = iter(refs)
    x_ref, g_ref, bt_ref, w_ref = next(it), next(it), next(it), next(it)
    b_ref = next(it) if has_bias else None
    o_ref = next(it)
    xn_ref = next(it)                                         # bf16 (tm, K) LN cache

    j = pl.program_id(1)

    @pl.when(j == 0)                                          # LN once per row tile
    def _():
        x = x_ref[...]
        mean = jnp.mean(x, axis=-1, keepdims=True)
        xc = x - mean
        var = jnp.mean(xc * xc, axis=-1, keepdims=True)
        xn_ref[...] = (xc * jax.lax.rsqrt(var + eps) * g_ref[...] + bt_ref[...]
                       ).astype(jnp.bfloat16)

    if tn == w_ref.shape[1]:
        w = w_ref[...]
    else:
        start = pl.multiple_of(j * tn, tn)
        w = w_ref[:, pl.ds(start, tn)]

    y = jnp.dot(xn_ref[...], w, preferred_element_type=jnp.float32)
    if has_bias:
        y = y + b_ref[...]
    if activation == "gelu":
        y = _gelu(y)
    o_ref[...] = y.astype(o_ref.dtype)


def ln_dense(x, gamma, beta, w, b=None, activation=None, eps=1e-5,
             out_dtype=jnp.float32):
    """Pre-LN fused into the matmul prologue; weight VMEM-resident; LN cached."""
    M, K = x.shape
    N = w.shape[1]
    tm = _pick_tile(M, _TM_RES)
    tn = _pick_tile(N, _TN_CAND)

    in_specs = [pl.BlockSpec((tm, K), lambda i, j: (i, 0)),
                pl.BlockSpec((1, K), lambda i, j: (0, 0)),
                pl.BlockSpec((1, K), lambda i, j: (0, 0)),
                pl.BlockSpec((K, N), lambda i, j: (0, 0))]    # resident weight
    inputs = [x, gamma.reshape(1, K), beta.reshape(1, K), w]
    if b is not None:
        in_specs.append(pl.BlockSpec((1, tn), lambda i, j: (0, j)))
        inputs.append(b.reshape(1, N).astype(jnp.float32))

    kernel = functools.partial(
        _ln_dense_kernel, has_bias=b is not None, activation=activation, eps=eps, tn=tn)

    return pl.pallas_call(
        kernel,
        grid=(M // tm, N // tn),
        in_specs=in_specs,
        out_specs=pl.BlockSpec((tm, tn), lambda i, j: (i, j)),
        out_shape=jax.ShapeDtypeStruct((M, N), out_dtype),
        scratch_shapes=[pltpu.VMEM((tm, K), jnp.bfloat16)],
        compiler_params=_cparams(("parallel", "arbitrary")),   # j sequential: LN cache
    )(*inputs)


# ----------------------------- standalone layernorm ---------------------------

def _layernorm_kernel(x_ref, g_ref, b_ref, o_ref, *, eps):
    x = x_ref[...]
    mean = jnp.mean(x, axis=-1, keepdims=True)
    xc = x - mean
    var = jnp.mean(xc * xc, axis=-1, keepdims=True)
    o_ref[...] = (xc * jax.lax.rsqrt(var + eps) * g_ref[...] + b_ref[...]).astype(o_ref.dtype)


def layernorm(x, gamma, beta, eps=1e-5, out_dtype=jnp.float32):
    M, D = x.shape
    tm = _pick_tile(M, _TM_RES)
    return pl.pallas_call(
        functools.partial(_layernorm_kernel, eps=eps),
        grid=(M // tm,),
        in_specs=[pl.BlockSpec((tm, D), lambda i: (i, 0)),
                  pl.BlockSpec((1, D), lambda i: (0, 0)),
                  pl.BlockSpec((1, D), lambda i: (0, 0))],
        out_specs=pl.BlockSpec((tm, D), lambda i: (i, 0)),
        out_shape=jax.ShapeDtypeStruct((M, D), out_dtype),
        compiler_params=_cparams(("parallel",)),
    )(x, gamma.reshape(1, D), beta.reshape(1, D))


# ----------------------------- attention kernels ------------------------------
# Query-tiled; K/V for the batch element stay resident (bf16).  Heads are handled
# in-kernel (packed along lanes) and stored incrementally two heads at a time.
# TODO(synk): for very long sequences stream keys flash-style (online softmax)
# over a third grid axis instead of holding the full (T, 3D) bf16 K/V block.

def _attn_head(q_ref, k_cols, v_cols, bias, scale, h, dh):
    q = q_ref[0, :, h * dh:(h + 1) * dh]                       # bf16 (tq, dh)
    k = k_cols[:, h * dh:(h + 1) * dh]                         # bf16 (Tk, dh)
    v = v_cols[:, h * dh:(h + 1) * dh]
    s = jax.lax.dot_general(q, k, (((1,), (1,)), ((), ())),
                            preferred_element_type=jnp.float32) * scale
    if bias is not None:
        s = s + bias
    # NB: fully-masked rows (pad queries) degenerate to a uniform softmax over
    # masked keys, matching HF behaviour for pad positions.
    m = jnp.max(s, axis=-1, keepdims=True)
    p = jnp.exp(s - m)
    denom = jnp.sum(p, axis=-1, keepdims=True)
    o = jnp.dot(p.astype(jnp.bfloat16), v, preferred_element_type=jnp.float32)
    return o * pl.reciprocal(denom, approx=True)


def _store_heads(q_ref, k_cols, v_cols, bias, o_ref, H, dh, scale):
    step = 2 if H % 2 == 0 else 1                              # 2*dh-lane stores
    for h in range(0, H, step):
        if step == 2:
            pair = jnp.concatenate(
                [_attn_head(q_ref, k_cols, v_cols, bias, scale, h, dh),
                 _attn_head(q_ref, k_cols, v_cols, bias, scale, h + 1, dh)], axis=-1)
            o_ref[0, :, h * dh:(h + 2) * dh] = pair.astype(o_ref.dtype)
        else:
            o_ref[0, :, h * dh:(h + 1) * dh] = _attn_head(
                q_ref, k_cols, v_cols, bias, scale, h, dh).astype(o_ref.dtype)


def _self_attn_kernel(q_ref, kv_ref, valid_ref, o_ref, *, H, dh, scale, tq):
    D = H * dh
    T = kv_ref.shape[1]
    q0 = pl.program_id(1) * tq
    row = q0 + jax.lax.broadcasted_iota(jnp.int32, (tq, T), 0)
    col = jax.lax.broadcasted_iota(jnp.int32, (tq, T), 1)
    allowed = (col <= row) & (valid_ref[0] > 0.5)              # causal & key-pad
    bias = jnp.where(allowed, 0.0, -1e9).astype(jnp.float32)
    k_cols = kv_ref[0, :, D:2 * D]
    v_cols = kv_ref[0, :, 2 * D:3 * D]
    _store_heads(q_ref, k_cols, v_cols, bias, o_ref, H, dh, scale)


def _cross_attn_kernel(q_ref, kv_ref, o_ref, *, H, dh, scale):
    D = H * dh
    k_cols = kv_ref[0, :, 0:D]
    v_cols = kv_ref[0, :, D:2 * D]
    _store_heads(q_ref, k_cols, v_cols, None, o_ref, H, dh, scale)


def self_attention(qkv, key_valid, H, dh, scale):
    """qkv: (B,T,3D) bf16 fused projections; key_valid: (B,1,T) 0/1 f32."""
    B, T, threeD = qkv.shape
    D = H * dh
    tq = _pick_tile(T, _TQ_CAND)
    q_lane = D if D % 128 == 0 else threeD                     # lane-legal q block
    return pl.pallas_call(
        functools.partial(_self_attn_kernel, H=H, dh=dh, scale=scale, tq=tq),
        grid=(B, T // tq),
        in_specs=[pl.BlockSpec((1, tq, q_lane), lambda b, qi: (b, qi, 0)),
                  pl.BlockSpec((1, T, threeD), lambda b, qi: (b, 0, 0)),
                  pl.BlockSpec((1, 1, T), lambda b, qi: (b, 0, 0))],
        out_specs=pl.BlockSpec((1, tq, D), lambda b, qi: (b, qi, 0)),
        out_shape=jax.ShapeDtypeStruct((B, T, D), jnp.bfloat16),
        compiler_params=_cparams(("parallel", "parallel")),
    )(qkv, qkv, key_valid)


def cross_attention(q, kv, H, dh, scale):
    """q: (B,T,D) bf16; kv: (B,Te,2D) bf16 fused encoder K/V (no mask)."""
    B, T, D = q.shape
    Te = kv.shape[1]
    tq = _pick_tile(T, _TQ_CAND)
    return pl.pallas_call(
        functools.partial(_cross_attn_kernel, H=H, dh=dh, scale=scale),
        grid=(B, T // tq),
        in_specs=[pl.BlockSpec((1, tq, D), lambda b, qi: (b, qi, 0)),
                  pl.BlockSpec((1, Te, 2 * D), lambda b, qi: (b, 0, 0))],
        out_specs=pl.BlockSpec((1, tq, D), lambda b, qi: (b, qi, 0)),
        out_shape=jax.ShapeDtypeStruct((B, T, D), jnp.bfloat16),
        compiler_params=_cparams(("parallel", "parallel")),
    )(q, kv)


# ----------------------------- parameters -----------------------------

def init_params(key, cfg):
    V, D, F, L, P = cfg["vocab"], cfg["d_model"], cfg["ffn"], cfg["layers"], cfg["max_pos"]
    keys = iter(jax.random.split(key, 2 + 7 * L + 2))

    def nrm(shape, std=0.02):
        return (std * jax.random.normal(next(keys), shape, dtype=jnp.float32)
                ).astype(jnp.bfloat16)                         # matmul weights in bf16

    ones = lambda n: jnp.ones((n,), jnp.float32)
    zeros = lambda n: jnp.zeros((n,), jnp.float32)

    params = {
        "embed_tokens": nrm((V, D)),                           # tied with LM head (V,D)
        # MBartLearnedPositionalEmbedding allocates max_pos + 2 rows (offset 2)
        "embed_positions": 0.02 * jax.random.normal(next(keys), (P + 2, D), jnp.float32),
        "ln_emb_g": ones(D), "ln_emb_b": zeros(D),
        "final_ln_g": ones(D), "final_ln_b": zeros(D),
        "layers": [],
    }
    for _ in range(L):
        lp = {
            "sa_ln_g": ones(D), "sa_ln_b": zeros(D),
            "sa_qkv_w": nrm((D, 3 * D)), "sa_qkv_b": zeros(3 * D),   # fused Q|K|V
            "sa_o_w": nrm((D, D)), "sa_o_b": zeros(D),
            "ca_ln_g": ones(D), "ca_ln_b": zeros(D),
            "ca_q_w": nrm((D, D)), "ca_q_b": zeros(D),
            "ca_kv_w": nrm((D, 2 * D)), "ca_kv_b": zeros(2 * D),     # fused K|V
            "ca_o_w": nrm((D, D)), "ca_o_b": zeros(D),
            "fc_ln_g": ones(D), "fc_ln_b": zeros(D),
            "fc1_w": nrm((D, F)), "fc1_b": zeros(F),
            "fc2_w": nrm((F, D)), "fc2_b": zeros(D),
        }
        params["layers"].append(lp)
    return params


# ----------------------------- forward pass -----------------------------

def mbart_decoder_forward(params, input_ids, attention_mask, encoder_hidden_states, cfg):
    B, T = input_ids.shape
    D, H = cfg["d_model"], cfg["heads"]
    dh = D // H
    Te = encoder_hidden_states.shape[1]
    embed_scale = math.sqrt(D)                                 # scale_embedding=True
    scale = dh ** -0.5

    # ---- embeddings (gather / pos add = XLA glue; LN in Pallas) ----
    tok = params["embed_tokens"][input_ids].astype(jnp.float32) * embed_scale
    pos = params["embed_positions"][jnp.arange(T) + 2]         # MBart offset 2
    h2d = layernorm((tok + pos[None]).reshape(B * T, D),
                    params["ln_emb_g"], params["ln_emb_b"])    # residual stream: f32

    enc2d = encoder_hidden_states.reshape(B * Te, D).astype(jnp.bfloat16)
    key_valid = attention_mask.astype(jnp.float32).reshape(B, 1, T)

    # TODO(synk): incremental decoding with past_key_values (KV cache) not implemented.
    for lp in params["layers"]:
        # self-attention: fused LN+QKV (bf16) -> q-tiled attention -> o-proj + residual
        qkv = ln_dense(h2d, lp["sa_ln_g"], lp["sa_ln_b"], lp["sa_qkv_w"], lp["sa_qkv_b"],
                       out_dtype=jnp.bfloat16)
        attn = self_attention(qkv.reshape(B, T, 3 * D), key_valid, H, dh, scale)
        h2d = dense(attn.reshape(B * T, D), lp["sa_o_w"], lp["sa_o_b"],
                    residual=h2d, out_dtype=jnp.float32)

        # cross-attention: fused LN+Q (bf16), fused encoder K|V (bf16), no mask
        q = ln_dense(h2d, lp["ca_ln_g"], lp["ca_ln_b"], lp["ca_q_w"], lp["ca_q_b"],
                     out_dtype=jnp.bfloat16)
        kv = dense(enc2d, lp["ca_kv_w"], lp["ca_kv_b"], out_dtype=jnp.bfloat16)
        attn = cross_attention(q.reshape(B, T, D), kv.reshape(B, Te, 2 * D), H, dh, scale)
        h2d = dense(attn.reshape(B * T, D), lp["ca_o_w"], lp["ca_o_b"],
                    residual=h2d, out_dtype=jnp.float32)

        # feed-forward: fused LN+fc1+GELU (bf16), fc2 with fused residual
        f = ln_dense(h2d, lp["fc_ln_g"], lp["fc_ln_b"], lp["fc1_w"], lp["fc1_b"],
                     activation="gelu", out_dtype=jnp.bfloat16)
        h2d = dense(f, lp["fc2_w"], lp["fc2_b"], residual=h2d, out_dtype=jnp.float32)

    # final layer norm (standalone, bf16 out) + streaming tied LM head (V,D), no bias
    hn = layernorm(h2d, params["final_ln_g"], params["final_ln_b"], out_dtype=jnp.bfloat16)
    logits = dense(hn, params["embed_tokens"], b=None, transpose_rhs=True,
                   out_dtype=jnp.float32, force_stream=True)
    V = params["embed_tokens"].shape[0]
    return logits.reshape(B, T, V)


# ----------------------------- pure-JAX reference (for verification) ----------

def _reference_forward(params, input_ids, attention_mask, encoder_hidden_states, cfg):
    B, T = input_ids.shape
    D, H = cfg["d_model"], cfg["heads"]
    dh = D // H
    f32 = lambda a: a.astype(jnp.float32)

    def ln(x, g, b, eps=1e-5):
        m = x.mean(-1, keepdims=True)
        v = ((x - m) ** 2).mean(-1, keepdims=True)
        return (x - m) * jax.lax.rsqrt(v + eps) * g + b

    def mha(q, k, v, mask):
        q = q.reshape(B, -1, H, dh).transpose(0, 2, 1, 3) * (dh ** -0.5)
        k = k.reshape(B, -1, H, dh).transpose(0, 2, 1, 3)
        v = v.reshape(B, -1, H, dh).transpose(0, 2, 1, 3)
        s = jnp.einsum("bhqd,bhkd->bhqk", q, k)
        if mask is not None:
            s = s + mask
        p = jax.nn.softmax(s, axis=-1)
        return jnp.einsum("bhqk,bhkd->bhqd", p, v).transpose(0, 2, 1, 3).reshape(B, -1, D)

    x = f32(params["embed_tokens"])[input_ids] * math.sqrt(D)
    x = x + params["embed_positions"][jnp.arange(T) + 2][None]
    h = ln(x, params["ln_emb_g"], params["ln_emb_b"])

    causal = jnp.tril(jnp.ones((T, T), bool))
    valid = attention_mask.astype(bool)[:, None, None, :]
    self_mask = jnp.where(causal[None, None] & valid, 0.0, -1e9).astype(jnp.float32)

    enc = f32(encoder_hidden_states)
    for lp in params["layers"]:
        W = {k: f32(v) for k, v in lp.items()}
        hn = ln(h, W["sa_ln_g"], W["sa_ln_b"])
        qkv = hn @ W["sa_qkv_w"] + W["sa_qkv_b"]
        a = mha(qkv[..., :D], qkv[..., D:2 * D], qkv[..., 2 * D:], self_mask)
        h = h + a @ W["sa_o_w"] + W["sa_o_b"]

        hn = ln(h, W["ca_ln_g"], W["ca_ln_b"])
        q = hn @ W["ca_q_w"] + W["ca_q_b"]
        kv = enc @ W["ca_kv_w"] + W["ca_kv_b"]
        a = mha(q, kv[..., :D], kv[..., D:], None)
        h = h + a @ W["ca_o_w"] + W["ca_o_b"]

        hn = ln(h, W["fc_ln_g"], W["fc_ln_b"])
        h = h + _gelu(hn @ W["fc1_w"] + W["fc1_b"]) @ W["fc2_w"] + W["fc2_b"]

    h = ln(h, params["final_ln_g"], params["final_ln_b"])
    return h @ f32(params["embed_tokens"]).T


# ----------------------------- demo -----------------------------

if __name__ == "__main__":
    # Small synthetic config (decoder_layer=2, hidden_dimension=32, 4 heads,
    # ffn=64, vocab=64, max_position_embeddings=32).
    cfg = dict(vocab=64, d_model=32, heads=4, ffn=64, layers=2, max_pos=32)
    pad_id = 1   # MBart pad_token_id

    key = jax.random.PRNGKey(0)
    kp, kids, kenc = jax.random.split(key, 3)
    params = init_params(kp, cfg)

    B, T, Te = 2, 8, 16
    input_ids = jax.random.randint(kids, (B, T), 2, cfg["vocab"], dtype=jnp.int32)
    input_ids = input_ids.at[1, -2:].set(pad_id)               # exercise padding mask
    attention_mask = (input_ids != pad_id).astype(jnp.int32)
    encoder_hidden_states = 0.02 * jax.random.normal(
        kenc, (B, Te, cfg["d_model"]), dtype=jnp.float32)

    # TODO(synk): tokenizer utilities / generation helpers (add_tokens,
    # prepare_inputs_for_inference, resize_bart_abs_pos_emb) are host-side
    # bookkeeping, not forward compute, so they are not kernels.
    fwd = jax.jit(functools.partial(mbart_decoder_forward, cfg=cfg))
    logits = fwd(params, input_ids, attention_mask, encoder_hidden_states)
    jax.block_until_ready(logits)

    assert logits.shape == (B, T, cfg["vocab"])
    assert bool(jnp.all(jnp.isfinite(logits)))

    # verify against a pure-JAX f32 reference (same bf16-rounded weights);
    # remaining deltas come from bf16 MXU operands / bf16 activation stores /
    # the EUP approx reciprocal in the softmax denominator.
    ref = _reference_forward(params, input_ids, attention_mask,
                             encoder_hidden_states, cfg)
    err = float(jnp.max(jnp.abs(logits - ref)))
    assert err < 5e-2, f"max |kernel - reference| = {err}"
    print("KERNEL_OK")
</pallas_src>

<mosaic_0001>
module attributes {stable_mosaic.version = 11 : i64} {
  func.func @_layernorm_kernel(%arg0: i32, %arg1: memref<16x32xf32, #tpu.memory_space<vmem>>, %arg2: memref<1x32xf32, #tpu.memory_space<vmem>>, %arg3: memref<1x32xf32, #tpu.memory_space<vmem>>, %arg4: memref<16x32xf32, #tpu.memory_space<vmem>>) attributes {dimension_semantics = [#tpu.dimension_semantics<parallel>], iteration_bounds = array<i64: 1>, scalar_prefetch = 0 : i64, scratch_operands = 0 : i64, tpu.core_type = #tpu.core_type<tc>, window_params = [{transform_indices = @transform_0, window_bounds = array<i64: 16, 32>}, {pipeline_mode = #tpu.pipeline_mode<synchronous>, transform_indices = @transform_1, window_bounds = array<i64: 1, 32>}, {pipeline_mode = #tpu.pipeline_mode<synchronous>, transform_indices = @transform_2, window_bounds = array<i64: 1, 32>}, {transform_indices = @transform_3, window_bounds = array<i64: 16, 32>}]} {
    %c0 = arith.constant 0 : index
    %c0_0 = arith.constant 0 : index
    %0 = vector.load %arg1[%c0, %c0_0] : memref<16x32xf32, #tpu.memory_space<vmem>>, vector<16x32xf32>
    %cst = arith.constant dense<0.000000e+00> : vector<16xf32>
    %1 = vector.multi_reduction <add>, %0, %cst [1] : vector<16x32xf32> to vector<16xf32>
    %2 = vector.shape_cast %1 : vector<16xf32> to vector<16x1xf32>
    %cst_1 = arith.constant 3.200000e+01 : f32
    %3 = vector.broadcast %cst_1 : f32 to vector<16x1xf32>
    %4 = arith.divf %2, %3 : vector<16x1xf32>
    %5 = vector.broadcast %4 : vector<16x1xf32> to vector<16x32xf32>
    %6 = arith.subf %0, %5 : vector<16x32xf32>
    %7 = arith.mulf %6, %6 : vector<16x32xf32>
    %cst_2 = arith.constant dense<0.000000e+00> : vector<16xf32>
    %8 = vector.multi_reduction <add>, %7, %cst_2 [1] : vector<16x32xf32> to vector<16xf32>
    %9 = vector.shape_cast %8 : vector<16xf32> to vector<16x1xf32>
    %cst_3 = arith.constant 3.200000e+01 : f32
    %10 = vector.broadcast %cst_3 : f32 to vector<16x1xf32>
    %11 = arith.divf %9, %10 : vector<16x1xf32>
    %cst_4 = arith.constant 9.99999974E-6 : f32
    %12 = vector.broadcast %cst_4 : f32 to vector<16x1xf32>
    %13 = arith.addf %11, %12 : vector<16x1xf32>
    %14 = math.rsqrt %13 : vector<16x1xf32>
    %15 = vector.broadcast %14 : vector<16x1xf32> to vector<16x32xf32>
    %16 = arith.mulf %6, %15 : vector<16x32xf32>
    %c0_5 = arith.constant 0 : index
    %c0_6 = arith.constant 0 : index
    %17 = vector.load %arg2[%c0_5, %c0_6] : memref<1x32xf32, #tpu.memory_space<vmem>>, vector<1x32xf32>
    %18 = vector.broadcast %17 : vector<1x32xf32> to vector<16x32xf32>
    %19 = arith.mulf %16, %18 : vector<16x32xf32>
    %c0_7 = arith.constant 0 : index
    %c0_8 = arith.constant 0 : index
    %20 = vector.load %arg3[%c0_7, %c0_8] : memref<1x32xf32, #tpu.memory_space<vmem>>, vector<1x32xf32>
    %21 = vector.broadcast %20 : vector<1x32xf32> to vector<16x32xf32>
    %22 = arith.addf %19, %21 : vector<16x32xf32>
    %c0_9 = arith.constant 0 : index
    %c0_10 = arith.constant 0 : index
    %23 = vector.load %arg4[%c0_9, %c0_10] : memref<16x32xf32, #tpu.memory_space<vmem>>, vector<16x32xf32>
    tpu.vector_store %arg4[%c0_9, %c0_10], %22 {strides = array<i32>} : memref<16x32xf32, #tpu.memory_space<vmem>>, vector<16x32xf32>,
    return
  }
  func.func @transform_0(%arg0: i32) -> (i32, i32) {
    %c0_i32 = arith.constant 0 : i32
    %c0_i32_0 = arith.constant 0 : i32
    return %arg0, %c0_i32 : i32, i32
  }
  func.func @transform_1(%arg0: i32) -> (i32, i32) {
    %c0_i32 = arith.constant 0 : i32
    %c0_i32_0 = arith.constant 0 : i32
    %c0_i32_1 = arith.constant 0 : i32
    return %c0_i32, %c0_i32_0 : i32, i32
  }
  func.func @transform_2(%arg0: i32) -> (i32, i32) {
    %c0_i32 = arith.constant 0 : i32
    %c0_i32_0 = arith.constant 0 : i32
    %c0_i32_1 = arith.constant 0 : i32
    return %c0_i32, %c0_i32_0 : i32, i32
  }
  func.func @transform_3(%arg0: i32) -> (i32, i32) {
    %c0_i32 = arith.constant 0 : i32
    %c0_i32_0 = arith.constant 0 : i32
    return %arg0, %c0_i32 : i32, i32
  }
}

module attributes {stable_mosaic.version = 11 : i64} {
  func.func @_ln_dense_kernel(%arg0: i32, %arg1: i32, %arg2: memref<16x32xf32, #tpu.memory_space<vmem>>, %arg3: memref<1x32xf32, #tpu.memory_space<vmem>>, %arg4: memref<1x32xf32, #tpu.memory_space<vmem>>, %arg5: memref<32x96xbf16, #tpu.memory_space<vmem>>, %arg6: memref<1x96xf32, #tpu.memory_space<vmem>>, %arg7: memref<16x96xbf16, #tpu.memory_space<vmem>>, %arg8: memref<16x32xbf16, #tpu.memory_space<vmem>>) attributes {dimension_semantics = [#tpu.dimension_semantics<parallel>, #tpu.dimension_semantics<arbitrary>], iteration_bounds = array<i64: 1, 1>, scalar_prefetch = 0 : i64, scratch_operands = 1 : i64, tpu.core_type = #tpu.core_type<tc>, window_params = [{transform_indices = @transform_0, window_bounds = array<i64: 16, 32>}, {pipeline_mode = #tpu.pipeline_mode<synchronous>, transform_indices = @transform_1, window_bounds = array<i64: 1, 32>}, {pipeline_mode = #tpu.pipeline_mode<synchronous>, transform_indices = @transform_2, window_bounds = array<i64: 1, 32>}, {pipeline_mode = #tpu.pipeline_mode<synchronous>, transform_indices = @transform_3, window_bounds = array<i64: 32, 96>}, {transform_indices = @transform_4, window_bounds = array<i64: 1, 96>}, {transform_indices = @transform_5, window_bounds = array<i64: 16, 96>}]} {
    %c0_i32 = arith.constant 0 : i32
    %0 = arith.cmpi eq, %arg1, %c0_i32 : i32
    %1 = arith.extui %0 : i1 to i32
    %c0_i32_0 = arith.constant 0 : i32
    %2 = arith.cmpi ne, %1, %c0_i32_0 : i32
    scf.if %2 {
      %c0_8 = arith.constant 0 : index
      %c0_9 = arith.constant 0 : index
      %11 = vector.load %arg2[%c0_8, %c0_9] : memref<16x32xf32, #tpu.memory_space<vmem>>, vector<16x32xf32>
      %cst_10 = arith.constant dense<0.000000e+00> : vector<16xf32>
      %12 = vector.multi_reduction <add>, %11, %cst_10 [1] : vector<16x32xf32> to vector<16xf32>
      %13 = vector.shape_cast %12 : vector<16xf32> to vector<16x1xf32>
      %cst_11 = arith.constant 3.200000e+01 : f32
      %14 = vector.broadcast %cst_11 : f32 to vector<16x1xf32>
      %15 = arith.divf %13, %14 : vector<16x1xf32>
      %16 = vector.broadcast %15 : vector<16x1xf32> to vector<16x32xf32>
      %17 = arith.subf %11, %16 : vector<16x32xf32>
      %18 = arith.mulf %17, %17 : vector<16x32xf32>
      %cst_12 = arith.constant dense<0.000000e+00> : vector<16xf32>
      %19 = vector.multi_reduction <add>, %18, %cst_12 [1] : vector<16x32xf32> to vector<16xf32>
      %20 = vector.shape_cast %19 : vector<16xf32> to vector<16x1xf32>
      %cst_13 = arith.constant 3.200000e+01 : f32
      %21 = vector.broadcast %cst_13 : f32 to vector<16x1xf32>
      %22 = arith.divf %20, %21 : vector<16x1xf32>
      %cst_14 = arith.constant 9.99999974E-6 : f32
      %23 = vector.broadcast %cst_14 : f32 to vector<16x1xf32>
      %24 = arith.addf %22, %23 : vector<16x1xf32>
      %25 = math.rsqrt %24 : vector<16x1xf32>
      %26 = vector.broadcast %25 : vector<16x1xf32> to vector<16x32xf32>
      %27 = arith.mulf %17, %26 : vector<16x32xf32>
      %c0_15 = arith.constant 0 : index
      %c0_16 = arith.constant 0 : index
      %28 = vector.load %arg3[%c0_15, %c0_16] : memref<1x32xf32, #tpu.memory_space<vmem>>, vector<1x32xf32>
      %29 = vector.broadcast %28 : vector<1x32xf32> to vector<16x32xf32>
      %30 = arith.mulf %27, %29 : vector<16x32xf32>
      %c0_17 = arith.constant 0 : index
      %c0_18 = arith.constant 0 : index
      %31 = vector.load %arg4[%c0_17, %c0_18] : memref<1x32xf32, #tpu.memory_space<vmem>>, vector<1x32xf32>
      %32 = vector.broadcast %31 : vector<1x32xf32> to vector<16x32xf32>
      %33 = arith.addf %30, %32 : vector<16x32xf32>
      %34 = arith.truncf %33 : vector<16x32xf32> to vector<16x32xbf16>
      %c0_19 = arith.constant 0 : index
      %c0_20 = arith.constant 0 : index
      %35 = vector.load %arg8[%c0_19, %c0_20] : memref<16x32xbf16, #tpu.memory_space<vmem>>, vector<16x32xbf16>
      tpu.vector_store %arg8[%c0_19, %c0_20], %34 {strides = array<i32>} : memref<16x32xbf16, #tpu.memory_space<vmem>>, vector<16x32xbf16>,
    } else {
    }
    %c0 = arith.constant 0 : index
    %c0_1 = arith.constant 0 : index
    %3 = vector.load %arg5[%c0, %c0_1] : memref<32x96xbf16, #tpu.memory_space<vmem>>, vector<32x96xbf16>
    %c0_2 = arith.constant 0 : index
    %c0_3 = arith.constant 0 : index
    %4 = vector.load %arg8[%c0_2, %c0_3] : memref<16x32xbf16, #tpu.memory_space<vmem>>, vector<16x32xbf16>
    %cst = arith.constant dense<0.000000e+00> : vector<16x96xf32>
    %5 = tpu.matmul %4, %3, %cst {dimension_numbers = #tpu.dot_dimension_numbers<[1], [0], [0], [1], [0, 0, 1, 1], [], []>} : vector<16x32xbf16>, vector<32x96xbf16>, vector<16x96xf32> -> vector<16x96xf32>
    %c0_4 = arith.constant 0 : index
    %c0_5 = arith.constant 0 : index
    %6 = vector.load %arg6[%c0_4, %c0_5] : memref<1x96xf32, #tpu.memory_space<vmem>>, vector<1x96xf32>
    %7 = vector.broadcast %6 : vector<1x96xf32> to vector<16x96xf32>
    %8 = arith.addf %5, %7 : vector<16x96xf32>
    %9 = arith.truncf %8 : vector<16x96xf32> to vector<16x96xbf16>
    %c0_6 = arith.constant 0 : index
    %c0_7 = arith.constant 0 : index
    %10 = vector.load %arg7[%c0_6, %c0_7] : memref<16x96xbf16, #tpu.memory_space<vmem>>, vector<16x96xbf16>
    tpu.vector_store %arg7[%c0_6, %c0_7], %9 {strides = array<i32>} : memref<16x96xbf16, #tpu.memory_space<vmem>>, vector<16x96xbf16>,
    return
  }
  func.func @transform_0(%arg0: i32, %arg1: i32) -> (i32, i32) {
    %c0_i32 = arith.constant 0 : i32
    %c0_i32_0 = arith.constant 0 : i32
    return %arg0, %c0_i32 : i32, i32
  }
  func.func @transform_1(%arg0: i32, %arg1: i32) -> (i32, i32) {
    %c0_i32 = arith.constant 0 : i32
    %c0_i32_0 = arith.constant 0 : i32
    %c0_i32_1 = arith.constant 0 : i32
    return %c0_i32, %c0_i32_0 : i32, i32
  }
  func.func @transform_2(%arg0: i32, %arg1: i32) -> (i32, i32) {
    %c0_i32 = arith.constant 0 : i32
    %c0_i32_0 = arith.constant 0 : i32
    %c0_i32_1 = arith.constant 0 : i32
    return %c0_i32, %c0_i32_0 : i32, i32
  }
  func.func @transform_3(%arg0: i32, %arg1: i32) -> (i32, i32) {
    %c0_i32 = arith.constant 0 : i32
    %c0_i32_0 = arith.constant 0 : i32
    %c0_i32_1 = arith.constant 0 : i32
    return %c0_i32, %c0_i32_0 : i32, i32
  }
  func.func @transform_4(%arg0: i32, %arg1: i32) -> (i32, i32) {
    %c0_i32 = arith.constant 0 : i32
    %c0_i32_0 = arith.constant 0 : i32
    return %c0_i32, %arg1 : i32, i32
  }
  func.func @transform_5(%arg0: i32, %arg1: i32) -> (i32, i32) {
    %c0_i32 = arith.constant 0 : i32
    return %arg0, %arg1 : i32, i32
  }
}

module attributes {stable_mosaic.version = 11 : i64} {
  func.func @_dense_res_kernel(%arg0: i32, %arg1: i32, %arg2: memref<16x32xbf16, #tpu.memory_space<vmem>>, %arg3: memref<32x32xbf16, #tpu.memory_space<vmem>>, %arg4: memref<1x32xf32, #tpu.memory_space<vmem>>, %arg5: memref<16x32xf32, #tpu.memory_space<vmem>>, %arg6: memref<16x32xf32, #tpu.memory_space<vmem>>) attributes {dimension_semantics = [#tpu.dimension_semantics<parallel>, #tpu.dimension_semantics<parallel>], iteration_bounds = array<i64: 1, 1>, scalar_prefetch = 0 : i64, scratch_operands = 0 : i64, tpu.core_type = #tpu.core_type<tc>, window_params = [{transform_indices = @transform_0, window_bounds = array<i64: 16, 32>}, {pipeline_mode = #tpu.pipeline_mode<synchronous>, transform_indices = @transform_1, window_bounds = array<i64: 32, 32>}, {transform_indices = @transform_2, window_bounds = array<i64: 1, 32>}, {transform_indices = @transform_3, window_bounds = array<i64: 16, 32>}, {transform_indices = @transform_4, window_bounds = array<i64: 16, 32>}]} {
    %c0 = arith.constant 0 : index
    %c0_0 = arith.constant 0 : index
    %0 = vector.load %arg3[%c0, %c0_0] : memref<32x32xbf16, #tpu.memory_space<vmem>>, vector<32x32xbf16>
    %c0_1 = arith.constant 0 : index
    %c0_2 = arith.constant 0 : index
    %1 = vector.load %arg2[%c0_1, %c0_2] : memref<16x32xbf16, #tpu.memory_space<vmem>>, vector<16x32xbf16>
    %cst = arith.constant dense<0.000000e+00> : vector<16x32xf32>
    %2 = tpu.matmul %1, %0, %cst {dimension_numbers = #tpu.dot_dimension_numbers<[1], [0], [0], [1], [0, 0, 1, 1], [], []>} : vector<16x32xbf16>, vector<32x32xbf16>, vector<16x32xf32> -> vector<16x32xf32>
    %c0_3 = arith.constant 0 : index
    %c0_4 = arith.constant 0 : index
    %3 = vector.load %arg4[%c0_3, %c0_4] : memref<1x32xf32, #tpu.memory_space<vmem>>, vector<1x32xf32>
    %4 = vector.broadcast %3 : vector<1x32xf32> to vector<16x32xf32>
    %5 = arith.addf %2, %4 : vector<16x32xf32>
    %c0_5 = arith.constant 0 : index
    %c0_6 = arith.constant 0 : index
    %6 = vector.load %arg5[%c0_5, %c0_6] : memref<16x32xf32, #tpu.memory_space<vmem>>, vector<16x32xf32>
    %7 = arith.addf %5, %6 : vector<16x32xf32>
    %c0_7 = arith.constant 0 : index
    %c0_8 = arith.constant 0 : index
    %8 = vector.load %arg6[%c0_7, %c0_8] : memref<16x32xf32, #tpu.memory_space<vmem>>, vector<16x32xf32>
    tpu.vector_store %arg6[%c0_7, %c0_8], %7 {strides = array<i32>} : memref<16x32xf32, #tpu.memory_space<vmem>>, vector<16x32xf32>,
    return
  }
  func.func @transform_0(%arg0: i32, %arg1: i32) -> (i32, i32) {
    %c0_i32 = arith.constant 0 : i32
    %c0_i32_0 = arith.constant 0 : i32
    return %arg0, %c0_i32 : i32, i32
  }
  func.func @transform_1(%arg0: i32, %arg1: i32) -> (i32, i32) {
    %c0_i32 = arith.constant 0 : i32
    %c0_i32_0 = arith.constant 0 : i32
    %c0_i32_1 = arith.constant 0 : i32
    return %c0_i32, %c0_i32_0 : i32, i32
  }
  func.func @transform_2(%arg0: i32, %arg1: i32) -> (i32, i32) {
    %c0_i32 = arith.constant 0 : i32
    %c0_i32_0 = arith.constant 0 : i32
    return %c0_i32, %arg1 : i32, i32
  }
  func.func @transform_3(%arg0: i32, %arg1: i32) -> (i32, i32) {
    %c0_i32 = arith.constant 0 : i32
    return %arg0, %arg1 : i32, i32
  }
  func.func @transform_4(%arg0: i32, %arg1: i32) -> (i32, i32) {
    %c0_i32 = arith.constant 0 : i32
    return %arg0, %arg1 : i32, i32
  }
}

module attributes {stable_mosaic.version = 11 : i64} {
  func.func @_self_attn_kernel(%arg0: i32, %arg1: i32, %arg2: memref<1x8x96xbf16, #tpu.memory_space<vmem>>, %arg3: memref<1x8x96xbf16, #tpu.memory_space<vmem>>, %arg4: memref<1x1x8xf32, #tpu.memory_space<vmem>>, %arg5: memref<1x8x32xbf16, #tpu.memory_space<vmem>>) attributes {dimension_semantics = [#tpu.dimension_semantics<parallel>, #tpu.dimension_semantics<parallel>], iteration_bounds = array<i64: 2, 1>, scalar_prefetch = 0 : i64, scratch_operands = 0 : i64, tpu.core_type = #tpu.core_type<tc>, window_params = [{transform_indices = @transform_0, window_bounds = array<i64: 1, 8, 96>}, {transform_indices = @transform_1, window_bounds = array<i64: 1, 8, 96>}, {transform_indices = @transform_2, window_bounds = array<i64: 1, 1, 8>}, {transform_indices = @transform_3, window_bounds = array<i64: 1, 8, 32>}]} {
    %c8_i32 = arith.constant 8 : i32
    %0 = arith.muli %arg1, %c8_i32 : i32
    %1 = tpu.iota {dimensions = array<i32: 0>} : vector<8x8xi32>
    %2 = vector.broadcast %0 : i32 to vector<8x8xi32>
    %3 = arith.addi %2, %1 : vector<8x8xi32>
    %4 = tpu.iota {dimensions = array<i32: 1>} : vector<8x8xi32>
    %5 = arith.cmpi sle, %4, %3 : vector<8x8xi32>
    %c0 = arith.constant 0 : index
    %c0_0 = arith.constant 0 : index
    %c0_1 = arith.constant 0 : index
    %6 = vector.load %arg4[%c0, %c0_0, %c0_1] : memref<1x1x8xf32, #tpu.memory_space<vmem>>, vector<1x1x8xf32>
    %7 = vector.shape_cast %6 : vector<1x1x8xf32> to vector<1x8xf32>
    %cst = arith.constant 5.000000e-01 : f32
    %8 = vector.broadcast %cst : f32 to vector<1x8xf32>
    %9 = arith.cmpf ogt, %7, %8 : vector<1x8xf32>
    %10 = vector.broadcast %9 : vector<1x8xi1> to vector<8x8xi1>
    %11 = arith.andi %5, %10 : vector<8x8xi1>
    %cst_2 = arith.constant 0.000000e+00 : f32
    %cst_3 = arith.constant -1.000000e+09 : f32
    %12 = vector.broadcast %cst_2 : f32 to vector<8x8xf32>
    %13 = vector.broadcast %cst_3 : f32 to vector<8x8xf32>
    %14 = arith.select %11, %12, %13 : vector<8x8xi1>, vector<8x8xf32>
    %c0_4 = arith.constant 0 : index
    %c0_5 = arith.constant 0 : index
    %c32 = arith.constant 32 : index
    %15 = vector.load %arg3[%c0_4, %c0_5, %c32] : memref<1x8x96xbf16, #tpu.memory_space<vmem>>, vector<1x8x32xbf16>
    %16 = vector.shape_cast %15 : vector<1x8x32xbf16> to vector<8x32xbf16>
    %c0_6 = arith.constant 0 : index
    %c0_7 = arith.constant 0 : index
    %c64 = arith.constant 64 : index
    %17 = vector.load %arg3[%c0_6, %c0_7, %c64] : memref<1x8x96xbf16, #tpu.memory_space<vmem>>, vector<1x8x32xbf16>
    %18 = vector.shape_cast %17 : vector<1x8x32xbf16> to vector<8x32xbf16>
    %c0_8 = arith.constant 0 : index
    %c0_9 = arith.constant 0 : index
    %c0_10 = arith.constant 0 : index
    %19 = vector.load %arg2[%c0_8, %c0_9, %c0_10] : memref<1x8x96xbf16, #tpu.memory_space<vmem>>, vector<1x8x8xbf16>
    %20 = vector.shape_cast %19 : vector<1x8x8xbf16> to vector<8x8xbf16>
    %21 = vector.extract_strided_slice %16 {offsets = [0, 0], sizes = [8, 8], strides = [1, 1]} : vector<8x32xbf16> to vector<8x8xbf16>
    %22 = vector.extract_strided_slice %18 {offsets = [0, 0], sizes = [8, 8], strides = [1, 1]} : vector<8x32xbf16> to vector<8x8xbf16>
    %cst_11 = arith.constant dense<0.000000e+00> : vector<8x8xf32>
    %23 = tpu.matmul %20, %21, %cst_11 {dimension_numbers = #tpu.dot_dimension_numbers<[1], [1], [0], [0], [0, 0, 1, 0], [], []>} : vector<8x8xbf16>, vector<8x8xbf16>, vector<8x8xf32> -> vector<8x8xf32>
    %cst_12 = arith.constant 0.353553385 : f32
    %24 = vector.broadcast %cst_12 : f32 to vector<8x8xf32>
    %25 = arith.mulf %23, %24 : vector<8x8xf32>
    %26 = arith.addf %25, %14 : vector<8x8xf32>
    %cst_13 = arith.constant dense<0xFF800000> : vector<8xf32>
    %27 = vector.multi_reduction <maximumf>, %26, %cst_13 [1] : vector<8x8xf32> to vector<8xf32>
    %28 = vector.shape_cast %27 : vector<8xf32> to vector<8x1xf32>
    %29 = vector.broadcast %28 : vector<8x1xf32> to vector<8x8xf32>
    %30 = arith.subf %26, %29 : vector<8x8xf32>
    %31 = math.exp %30 : vector<8x8xf32>
    %cst_14 = arith.constant dense<0.000000e+00> : vector<8xf32>
    %32 = vector.multi_reduction <add>, %31, %cst_14 [1] : vector<8x8xf32> to vector<8xf32>
    %33 = vector.shape_cast %32 : vector<8xf32> to vector<8x1xf32>
    %34 = arith.truncf %31 : vector<8x8xf32> to vector<8x8xbf16>
    %cst_15 = arith.constant dense<0.000000e+00> : vector<8x8xf32>
    %35 = tpu.matmul %34, %22, %cst_15 {dimension_numbers = #tpu.dot_dimension_numbers<[1], [0], [0], [1], [0, 0, 1, 1], [], []>} : vector<8x8xbf16>, vector<8x8xbf16>, vector<8x8xf32> -> vector<8x8xf32>
    %36 = tpu.reciprocal %33 {approx = true} : vector<8x1xf32> -> vector<8x1xf32>
    %37 = vector.broadcast %36 : vector<8x1xf32> to vector<8x8xf32>
    %38 = arith.mulf %35, %37 : vector<8x8xf32>
    %c0_16 = arith.constant 0 : index
    %c0_17 = arith.constant 0 : index
    %c8 = arith.constant 8 : index
    %39 = vector.load %arg2[%c0_16, %c0_17, %c8] : memref<1x8x96xbf16, #tpu.memory_space<vmem>>, vector<1x8x8xbf16>
    %40 = vector.shape_cast %39 : vector<1x8x8xbf16> to vector<8x8xbf16>
    %41 = vector.extract_strided_slice %16 {offsets = [0, 8], sizes = [8, 8], strides = [1, 1]} : vector<8x32xbf16> to vector<8x8xbf16>
    %42 = vector.extract_strided_slice %18 {offsets = [0, 8], sizes = [8, 8], strides = [1, 1]} : vector<8x32xbf16> to vector<8x8xbf16>
    %cst_18 = arith.constant dense<0.000000e+00> : vector<8x8xf32>
    %43 = tpu.matmul %40, %41, %cst_18 {dimension_numbers = #tpu.dot_dimension_numbers<[1], [1], [0], [0], [0, 0, 1, 0], [], []>} : vector<8x8xbf16>, vector<8x8xbf16>, vector<8x8xf32> -> vector<8x8xf32>
    %cst_19 = arith.constant 0.353553385 : f32
    %44 = vector.broadcast %cst_19 : f32 to vector<8x8xf32>
    %45 = arith.mulf %43, %44 : vector<8x8xf32>
    %46 = arith.addf %45, %14 : vector<8x8xf32>
    %cst_20 = arith.constant dense<0xFF800000> : vector<8xf32>
    %47 = vector.multi_reduction <maximumf>, %46, %cst_20 [1] : vector<8x8xf32> to vector<8xf32>
    %48 = vector.shape_cast %47 : vector<8xf32> to vector<8x1xf32>
    %49 = vector.broadcast %48 : vector<8x1xf32> to vector<8x8xf32>
    %50 = arith.subf %46, %49 : vector<8x8xf32>
    %51 = math.exp %50 : vector<8x8xf32>
    %cst_21 = arith.constant dense<0.000000e+00> : vector<8xf32>
    %52 = vector.multi_reduction <add>, %51, %cst_21 [1] : vector<8x8xf32> to vector<8xf32>
    %53 = vector.shape_cast %52 : vector<8xf32> to vector<8x1xf32>
    %54 = arith.truncf %51 : vector<8x8xf32> to vector<8x8xbf16>
    %cst_22 = arith.constant dense<0.000000e+00> : vector<8x8xf32>
    %55 = tpu.matmul %54, %42, %cst_22 {dimension_numbers = #tpu.dot_dimension_numbers<[1], [0], [0], [1], [0, 0, 1, 1], [], []>} : vector<8x8xbf16>, vector<8x8xbf16>, vector<8x8xf32> -> vector<8x8xf32>
    %56 = tpu.reciprocal %53 {approx = true} : vector<8x1xf32> -> vector<8x1xf32>
    %57 = vector.broadcast %56 : vector<8x1xf32> to vector<8x8xf32>
    %58 = arith.mulf %55, %57 : vector<8x8xf32>
    %59 = tpu.concatenate %38, %58 in 1 : vector<8x8xf32>, vector<8x8xf32> -> vector<8x16xf32>
    %60 = arith.truncf %59 : vector<8x16xf32> to vector<8x16xbf16>
    %c0_23 = arith.constant 0 : index
    %c0_24 = arith.constant 0 : index
    %c0_25 = arith.constant 0 : index
    %61 = vector.load %arg5[%c0_23, %c0_24, %c0_25] : memref<1x8x32xbf16, #tpu.memory_space<vmem>>, vector<1x8x16xbf16>
    %62 = vector.shape_cast %61 : vector<1x8x16xbf16> to vector<8x16xbf16>
    %63 = vector.shape_cast %60 : vector<8x16xbf16> to vector<1x8x16xbf16>
    tpu.vector_store %arg5[%c0_23, %c0_24, %c0_25], %63 {strides = array<i32>} : memref<1x8x32xbf16, #tpu.memory_space<vmem>>, vector<1x8x16xbf16>,
    %c0_26 = arith.constant 0 : index
    %c0_27 = arith.constant 0 : index
    %c16 = arith.constant 16 : index
    %64 = vector.load %arg2[%c0_26, %c0_27, %c16] : memref<1x8x96xbf16, #tpu.memory_space<vmem>>, vector<1x8x8xbf16>
    %65 = vector.shape_cast %64 : vector<1x8x8xbf16> to vector<8x8xbf16>
    %66 = vector.extract_strided_slice %16 {offsets = [0, 16], sizes = [8, 8], strides = [1, 1]} : vector<8x32xbf16> to vector<8x8xbf16>
    %67 = vector.extract_strided_slice %18 {offsets = [0, 16], sizes = [8, 8], strides = [1, 1]} : vector<8x32xbf16> to vector<8x8xbf16>
    %cst_28 = arith.constant dense<0.000000e+00> : vector<8x8xf32>
    %68 = tpu.matmul %65, %66, %cst_28 {dimension_numbers = #tpu.dot_dimension_numbers<[1], [1], [0], [0], [0, 0, 1, 0], [], []>} : vector<8x8xbf16>, vector<8x8xbf16>, vector<8x8xf32> -> vector<8x8xf32>
    %cst_29 = arith.constant 0.353553385 : f32
    %69 = vector.broadcast %cst_29 : f32 to vector<8x8xf32>
    %70 = arith.mulf %68, %69 : vector<8x8xf32>
    %71 = arith.addf %70, %14 : vector<8x8xf32>
    %cst_30 = arith.constant dense<0xFF800000> : vector<8xf32>
    %72 = vector.multi_reduction <maximumf>, %71, %cst_30 [1] : vector<8x8xf32> to vector<8xf32>
    %73 = vector.shape_cast %72 : vector<8xf32> to vector<8x1xf32>
    %74 = vector.broadcast %73 : vector<8x1xf32> to vector<8x8xf32>
    %75 = arith.subf %71, %74 : vector<8x8xf32>
    %76 = math.exp %75 : vector<8x8xf32>
    %cst_31 = arith.constant dense<0.000000e+00> : vector<8xf32>
    %77 = vector.multi_reduction <add>, %76, %cst_31 [1] : vector<8x8xf32> to vector<8xf32>
    %78 = vector.shape_cast %77 : vector<8xf32> to vector<8x1xf32>
    %79 = arith.truncf %76 : vector<8x8xf32> to vector<8x8xbf16>
    %cst_32 = arith.constant dense<0.000000e+00> : vector<8x8xf32>
    %80 = tpu.matmul %79, %67, %cst_32 {dimension_numbers = #tpu.dot_dimension_numbers<[1], [0], [0], [1], [0, 0, 1, 1], [], []>} : vector<8x8xbf16>, vector<8x8xbf16>, vector<8x8xf32> -> vector<8x8xf32>
    %81 = tpu.reciprocal %78 {approx = true} : vector<8x1xf32> -> vector<8x1xf32>
    %82 = vector.broadcast %81 : vector<8x1xf32> to vector<8x8xf32>
    %83 = arith.mulf %80, %82 : vector<8x8xf32>
    %c0_33 = arith.constant 0 : index
    %c0_34 = arith.constant 0 : index
    %c24 = arith.constant 24 : index
    %84 = vector.load %arg2[%c0_33, %c0_34, %c24] : memref<1x8x96xbf16, #tpu.memory_space<vmem>>, vector<1x8x8xbf16>
    %85 = vector.shape_cast %84 : vector<1x8x8xbf16> to vector<8x8xbf16>
    %86 = vector.extract_strided_slice %16 {offsets = [0, 24], sizes = [8, 8], strides = [1, 1]} : vector<8x32xbf16> to vector<8x8xbf16>
    %87 = vector.extract_strided_slice %18 {offsets = [0, 24], sizes = [8, 8], strides = [1, 1]} : vector<8x32xbf16> to vector<8x8xbf16>
    %cst_35 = arith.constant dense<0.000000e+00> : vector<8x8xf32>
    %88 = tpu.matmul %85, %86, %cst_35 {dimension_numbers = #tpu.dot_dimension_numbers<[1], [1], [0], [0], [0, 0, 1, 0], [], []>} : vector<8x8xbf16>, vector<8x8xbf16>, vector<8x8xf32> -> vector<8x8xf32>
    %cst_36 = arith.constant 0.353553385 : f32
    %89 = vector.broadcast %cst_36 : f32 to vector<8x8xf32>
    %90 = arith.mulf %88, %89 : vector<8x8xf32>
    %91 = arith.addf %90, %14 : vector<8x8xf32>
    %cst_37 = arith.constant dense<0xFF800000> : vector<8xf32>
    %92 = vector.multi_reduction <maximumf>, %91, %cst_37 [1] : vector<8x8xf32> to vector<8xf32>
    %93 = vector.shape_cast %92 : vector<8xf32> to vector<8x1xf32>
    %94 = vector.broadcast %93 : vector<8x1xf32> to vector<8x8xf32>
    %95 = arith.subf %91, %94 : vector<8x8xf32>
    %96 = math.exp %95 : vector<8x8xf32>
    %cst_38 = arith.constant dense<0.000000e+00> : vector<8xf32>
    %97 = vector.multi_reduction <add>, %96, %cst_38 [1] : vector<8x8xf32> to vector<8xf32>
    %98 = vector.shape_cast %97 : vector<8xf32> to vector<8x1xf32>
    %99 = arith.truncf %96 : vector<8x8xf32> to vector<8x8xbf16>
    %cst_39 = arith.constant dense<0.000000e+00> : vector<8x8xf32>
    %100 = tpu.matmul %99, %87, %cst_39 {dimension_numbers = #tpu.dot_dimension_numbers<[1], [0], [0], [1], [0, 0, 1, 1], [], []>} : vector<8x8xbf16>, vector<8x8xbf16>, vector<8x8xf32> -> vector<8x8xf32>
    %101 = tpu.reciprocal %98 {approx = true} : vector<8x1xf32> -> vector<8x1xf32>
    %102 = vector.broadcast %101 : vector<8x1xf32> to vector<8x8xf32>
    %103 = arith.mulf %100, %102 : vector<8x8xf32>
    %104 = tpu.concatenate %83, %103 in 1 : vector<8x8xf32>, vector<8x8xf32> -> vector<8x16xf32>
    %105 = arith.truncf %104 : vector<8x16xf32> to vector<8x16xbf16>
    %c0_40 = arith.constant 0 : index
    %c0_41 = arith.constant 0 : index
    %c16_42 = arith.constant 16 : index
    %106 = vector.load %arg5[%c0_40, %c0_41, %c16_42] : memref<1x8x32xbf16, #tpu.memory_space<vmem>>, vector<1x8x16xbf16>
    %107 = vector.shape_cast %106 : vector<1x8x16xbf16> to vector<8x16xbf16>
    %108 = vector.shape_cast %105 : vector<8x16xbf16> to vector<1x8x16xbf16>
    tpu.vector_store %arg5[%c0_40, %c0_41, %c16_42], %108 {strides = array<i32>} : memref<1x8x32xbf16, #tpu.memory_space<vmem>>, vector<1x8x16xbf16>,
    return
  }
  func.func @transform_0(%arg0: i32, %arg1: i32) -> (i32, i32, i32) {
    %c0_i32 = arith.constant 0 : i32
    %c0_i32_0 = arith.constant 0 : i32
    return %arg0, %arg1, %c0_i32 : i32, i32, i32
  }
  func.func @transform_1(%arg0: i32, %arg1: i32) -> (i32, i32, i32) {
    %c0_i32 = arith.constant 0 : i32
    %c0_i32_0 = arith.constant 0 : i32
    %c0_i32_1 = arith.constant 0 : i32
    return %arg0, %c0_i32, %c0_i32_0 : i32, i32, i32
  }
  func.func @transform_2(%arg0: i32, %arg1: i32) -> (i32, i32, i32) {
    %c0_i32 = arith.constant 0 : i32
    %c0_i32_0 = arith.constant 0 : i32
    %c0_i32_1 = arith.constant 0 : i32
    return %arg0, %c0_i32, %c0_i32_0 : i32, i32, i32
  }
  func.func @transform_3(%arg0: i32, %arg1: i32) -> (i32, i32, i32) {
    %c0_i32 = arith.constant 0 : i32
    %c0_i32_0 = arith.constant 0 : i32
    return %arg0, %arg1, %c0_i32 : i32, i32, i32
  }
}

module attributes {stable_mosaic.version = 11 : i64} {
  func.func @_ln_dense_kernel(%arg0: i32, %arg1: i32, %arg2: memref<16x32xf32, #tpu.memory_space<vmem>>, %arg3: memref<1x32xf32, #tpu.memory_space<vmem>>, %arg4: memref<1x32xf32, #tpu.memory_space<vmem>>, %arg5: memref<32x32xbf16, #tpu.memory_space<vmem>>, %arg6: memref<1x32xf32, #tpu.memory_space<vmem>>, %arg7: memref<16x32xbf16, #tpu.memory_space<vmem>>, %arg8: memref<16x32xbf16, #tpu.memory_space<vmem>>) attributes {dimension_semantics = [#tpu.dimension_semantics<parallel>, #tpu.dimension_semantics<arbitrary>], iteration_bounds = array<i64: 1, 1>, scalar_prefetch = 0 : i64, scratch_operands = 1 : i64, tpu.core_type = #tpu.core_type<tc>, window_params = [{transform_indices = @transform_0, window_bounds = array<i64: 16, 32>}, {pipeline_mode = #tpu.pipeline_mode<synchronous>, transform_indices = @transform_1, window_bounds = array<i64: 1, 32>}, {pipeline_mode = #tpu.pipeline_mode<synchronous>, transform_indices = @transform_2, window_bounds = array<i64: 1, 32>}, {pipeline_mode = #tpu.pipeline_mode<synchronous>, transform_indices = @transform_3, window_bounds = array<i64: 32, 32>}, {transform_indices = @transform_4, window_bounds = array<i64: 1, 32>}, {transform_indices = @transform_5, window_bounds = array<i64: 16, 32>}]} {
    %c0_i32 = arith.constant 0 : i32
    %0 = arith.cmpi eq, %arg1, %c0_i32 : i32
    %1 = arith.extui %0 : i1 to i32
    %c0_i32_0 = arith.constant 0 : i32
    %2 = arith.cmpi ne, %1, %c0_i32_0 : i32
    scf.if %2 {
      %c0_8 = arith.constant 0 : index
      %c0_9 = arith.constant 0 : index
      %11 = vector.load %arg2[%c0_8, %c0_9] : memref<16x32xf32, #tpu.memory_space<vmem>>, vector<16x32xf32>
      %cst_10 = arith.constant dense<0.000000e+00> : vector<16xf32>
      %12 = vector.multi_reduction <add>, %11, %cst_10 [1] : vector<16x32xf32> to vector<16xf32>
      %13 = vector.shape_cast %12 : vector<16xf32> to vector<16x1xf32>
      %cst_11 = arith.constant 3.200000e+01 : f32
      %14 = vector.broadcast %cst_11 : f32 to vector<16x1xf32>
      %15 = arith.divf %13, %14 : vector<16x1xf32>
      %16 = vector.broadcast %15 : vector<16x1xf32> to vector<16x32xf32>
      %17 = arith.subf %11, %16 : vector<16x32xf32>
      %18 = arith.mulf %17, %17 : vector<16x32xf32>
      %cst_12 = arith.constant dense<0.000000e+00> : vector<16xf32>
      %19 = vector.multi_reduction <add>, %18, %cst_12 [1] : vector<16x32xf32> to vector<16xf32>
      %20 = vector.shape_cast %19 : vector<16xf32> to vector<16x1xf32>
      %cst_13 = arith.constant 3.200000e+01 : f32
      %21 = vector.broadcast %cst_13 : f32 to vector<16x1xf32>
      %22 = arith.divf %20, %21 : vector<16x1xf32>
      %cst_14 = arith.constant 9.99999974E-6 : f32
      %23 = vector.broadcast %cst_14 : f32 to vector<16x1xf32>
      %24 = arith.addf %22, %23 : vector<16x1xf32>
      %25 = math.rsqrt %24 : vector<16x1xf32>
      %26 = vector.broadcast %25 : vector<16x1xf32> to vector<16x32xf32>
      %27 = arith.mulf %17, %26 : vector<16x32xf32>
      %c0_15 = arith.constant 0 : index
      %c0_16 = arith.constant 0 : index
      %28 = vector.load %arg3[%c0_15, %c0_16] : memref<1x32xf32, #tpu.memory_space<vmem>>, vector<1x32xf32>
      %29 = vector.broadcast %28 : vector<1x32xf32> to vector<16x32xf32>
      %30 = arith.mulf %27, %29 : vector<16x32xf32>
      %c0_17 = arith.constant 0 : index
      %c0_18 = arith.constant 0 : index
      %31 = vector.load %arg4[%c0_17, %c0_18] : memref<1x32xf32, #tpu.memory_space<vmem>>, vector<1x32xf32>
      %32 = vector.broadcast %31 : vector<1x32xf32> to vector<16x32xf32>
      %33 = arith.addf %30, %32 : vector<16x32xf32>
      %34 = arith.truncf %33 : vector<16x32xf32> to vector<16x32xbf16>
      %c0_19 = arith.constant 0 : index
      %c0_20 = arith.constant 0 : index
      %35 = vector.load %arg8[%c0_19, %c0_20] : memref<16x32xbf16, #tpu.memory_space<vmem>>, vector<16x32xbf16>
      tpu.vector_store %arg8[%c0_19, %c0_20], %34 {strides = array<i32>} : memref<16x32xbf16, #tpu.memory_space<vmem>>, vector<16x32xbf16>,
    } else {
    }
    %c0 = arith.constant 0 : index
    %c0_1 = arith.constant 0 : index
    %3 = vector.load %arg5[%c0, %c0_1] : memref<32x32xbf16, #tpu.memory_space<vmem>>, vector<32x32xbf16>
    %c0_2 = arith.constant 0 : index
    %c0_3 = arith.constant 0 : index
    %4 = vector.load %arg8[%c0_2, %c0_3] : memref<16x32xbf16, #tpu.memory_space<vmem>>, vector<16x32xbf16>
    %cst = arith.constant dense<0.000000e+00> : vector<16x32xf32>
    %5 = tpu.matmul %4, %3, %cst {dimension_numbers = #tpu.dot_dimension_numbers<[1], [0], [0], [1], [0, 0, 1, 1], [], []>} : vector<16x32xbf16>, vector<32x32xbf16>, vector<16x32xf32> -> vector<16x32xf32>
    %c0_4 = arith.constant 0 : index
    %c0_5 = arith.constant 0 : index
    %6 = vector.load %arg6[%c0_4, %c0_5] : memref<1x32xf32, #tpu.memory_space<vmem>>, vector<1x32xf32>
    %7 = vector.broadcast %6 : vector<1x32xf32> to vector<16x32xf32>
    %8 = arith.addf %5, %7 : vector<16x32xf32>
    %9 = arith.truncf %8 : vector<16x32xf32> to vector<16x32xbf16>
    %c0_6 = arith.constant 0 : index
    %c0_7 = arith.constant 0 : index
    %10 = vector.load %arg7[%c0_6, %c0_7] : memref<16x32xbf16, #tpu.memory_space<vmem>>, vector<16x32xbf16>
    tpu.vector_store %arg7[%c0_6, %c0_7], %9 {strides = array<i32>} : memref<16x32xbf16, #tpu.memory_space<vmem>>, vector<16x32xbf16>,
    return
  }
  func.func @transform_0(%arg0: i32, %arg1: i32) -> (i32, i32) {
    %c0_i32 = arith.constant 0 : i32
    %c0_i32_0 = arith.constant 0 : i32
    return %arg0, %c0_i32 : i32, i32
  }
  func.func @transform_1(%arg0: i32, %arg1: i32) -> (i32, i32) {
    %c0_i32 = arith.constant 0 : i32
    %c0_i32_0 = arith.constant 0 : i32
    %c0_i32_1 = arith.constant 0 : i32
    return %c0_i32, %c0_i32_0 : i32, i32
  }
  func.func @transform_2(%arg0: i32, %arg1: i32) -> (i32, i32) {
    %c0_i32 = arith.constant 0 : i32
    %c0_i32_0 = arith.constant 0 : i32
    %c0_i32_1 = arith.constant 0 : i32
    return %c0_i32, %c0_i32_0 : i32, i32
  }
  func.func @transform_3(%arg0: i32, %arg1: i32) -> (i32, i32) {
    %c0_i32 = arith.constant 0 : i32
    %c0_i32_0 = arith.constant 0 : i32
    %c0_i32_1 = arith.constant 0 : i32
    return %c0_i32, %c0_i32_0 : i32, i32
  }
  func.func @transform_4(%arg0: i32, %arg1: i32) -> (i32, i32) {
    %c0_i32 = arith.constant 0 : i32
    %c0_i32_0 = arith.constant 0 : i32
    return %c0_i32, %arg1 : i32, i32
  }
  func.func @transform_5(%arg0: i32, %arg1: i32) -> (i32, i32) {
    %c0_i32 = arith.constant 0 : i32
    return %arg0, %arg1 : i32, i32
  }
}

module attributes {stable_mosaic.version = 11 : i64} {
  func.func @_dense_res_kernel(%arg0: i32, %arg1: i32, %arg2: memref<32x32xbf16, #tpu.memory_space<vmem>>, %arg3: memref<32x64xbf16, #tpu.memory_space<vmem>>, %arg4: memref<1x64xf32, #tpu.memory_space<vmem>>, %arg5: memref<32x64xbf16, #tpu.memory_space<vmem>>) attributes {dimension_semantics = [#tpu.dimension_semantics<parallel>, #tpu.dimension_semantics<parallel>], iteration_bounds = array<i64: 1, 1>, scalar_prefetch = 0 : i64, scratch_operands = 0 : i64, tpu.core_type = #tpu.core_type<tc>, window_params = [{transform_indices = @transform_0, window_bounds = array<i64: 32, 32>}, {pipeline_mode = #tpu.pipeline_mode<synchronous>, transform_indices = @transform_1, window_bounds = array<i64: 32, 64>}, {transform_indices = @transform_2, window_bounds = array<i64: 1, 64>}, {transform_indices = @transform_3, window_bounds = array<i64: 32, 64>}]} {
    %c0 = arith.constant 0 : index
    %c0_0 = arith.constant 0 : index
    %0 = vector.load %arg3[%c0, %c0_0] : memref<32x64xbf16, #tpu.memory_space<vmem>>, vector<32x64xbf16>
    %c0_1 = arith.constant 0 : index
    %c0_2 = arith.constant 0 : index
    %1 = vector.load %arg2[%c0_1, %c0_2] : memref<32x32xbf16, #tpu.memory_space<vmem>>, vector<32x32xbf16>
    %cst = arith.constant dense<0.000000e+00> : vector<32x64xf32>
    %2 = tpu.matmul %1, %0, %cst {dimension_numbers = #tpu.dot_dimension_numbers<[1], [0], [0], [1], [0, 0, 1, 1], [], []>} : vector<32x32xbf16>, vector<32x64xbf16>, vector<32x64xf32> -> vector<32x64xf32>
    %c0_3 = arith.constant 0 : index
    %c0_4 = arith.constant 0 : index
    %3 = vector.load %arg4[%c0_3, %c0_4] : memref<1x64xf32, #tpu.memory_space<vmem>>, vector<1x64xf32>
    %4 = vector.broadcast %3 : vector<1x64xf32> to vector<32x64xf32>
    %5 = arith.addf %2, %4 : vector<32x64xf32>
    %6 = arith.truncf %5 : vector<32x64xf32> to vector<32x64xbf16>
    %c0_5 = arith.constant 0 : index
    %c0_6 = arith.constant 0 : index
    %7 = vector.load %arg5[%c0_5, %c0_6] : memref<32x64xbf16, #tpu.memory_space<vmem>>, vector<32x64xbf16>
    tpu.vector_store %arg5[%c0_5, %c0_6], %6 {strides = array<i32>} : memref<32x64xbf16, #tpu.memory_space<vmem>>, vector<32x64xbf16>,
    return
  }
  func.func @transform_0(%arg0: i32, %arg1: i32) -> (i32, i32) {
    %c0_i32 = arith.constant 0 : i32
    %c0_i32_0 = arith.constant 0 : i32
    return %arg0, %c0_i32 : i32, i32
  }
  func.func @transform_1(%arg0: i32, %arg1: i32) -> (i32, i32) {
    %c0_i32 = arith.constant 0 : i32
    %c0_i32_0 = arith.constant 0 : i32
    %c0_i32_1 = arith.constant 0 : i32
    return %c0_i32, %c0_i32_0 : i32, i32
  }
  func.func @transform_2(%arg0: i32, %arg1: i32) -> (i32, i32) {
    %c0_i32 = arith.constant 0 : i32
    %c0_i32_0 = arith.constant 0 : i32
    return %c0_i32, %arg1 : i32, i32
  }
  func.func @transform_3(%arg0: i32, %arg1: i32) -> (i32, i32) {
    %c0_i32 = arith.constant 0 : i32
    return %arg0, %arg1 : i32, i32
  }
}

module attributes {stable_mosaic.version = 11 : i64} {
  func.func @_cross_attn_kernel(%arg0: i32, %arg1: i32, %arg2: memref<1x8x32xbf16, #tpu.memory_space<vmem>>, %arg3: memref<1x16x64xbf16, #tpu.memory_space<vmem>>, %arg4: memref<1x8x32xbf16, #tpu.memory_space<vmem>>) attributes {dimension_semantics = [#tpu.dimension_semantics<parallel>, #tpu.dimension_semantics<parallel>], iteration_bounds = array<i64: 2, 1>, scalar_prefetch = 0 : i64, scratch_operands = 0 : i64, tpu.core_type = #tpu.core_type<tc>, window_params = [{transform_indices = @transform_0, window_bounds = array<i64: 1, 8, 32>}, {transform_indices = @transform_1, window_bounds = array<i64: 1, 16, 64>}, {transform_indices = @transform_2, window_bounds = array<i64: 1, 8, 32>}]} {
    %c0 = arith.constant 0 : index
    %c0_0 = arith.constant 0 : index
    %c0_1 = arith.constant 0 : index
    %0 = vector.load %arg3[%c0, %c0_0, %c0_1] : memref<1x16x64xbf16, #tpu.memory_space<vmem>>, vector<1x16x32xbf16>
    %1 = vector.shape_cast %0 : vector<1x16x32xbf16> to vector<16x32xbf16>
    %c0_2 = arith.constant 0 : index
    %c0_3 = arith.constant 0 : index
    %c32 = arith.constant 32 : index
    %2 = vector.load %arg3[%c0_2, %c0_3, %c32] : memref<1x16x64xbf16, #tpu.memory_space<vmem>>, vector<1x16x32xbf16>
    %3 = vector.shape_cast %2 : vector<1x16x32xbf16> to vector<16x32xbf16>
    %c0_4 = arith.constant 0 : index
    %c0_5 = arith.constant 0 : index
    %c0_6 = arith.constant 0 : index
    %4 = vector.load %arg2[%c0_4, %c0_5, %c0_6] : memref<1x8x32xbf16, #tpu.memory_space<vmem>>, vector<1x8x8xbf16>
    %5 = vector.shape_cast %4 : vector<1x8x8xbf16> to vector<8x8xbf16>
    %6 = vector.extract_strided_slice %1 {offsets = [0, 0], sizes = [16, 8], strides = [1, 1]} : vector<16x32xbf16> to vector<16x8xbf16>
    %7 = vector.extract_strided_slice %3 {offsets = [0, 0], sizes = [16, 8], strides = [1, 1]} : vector<16x32xbf16> to vector<16x8xbf16>
    %cst = arith.constant dense<0.000000e+00> : vector<8x16xf32>
    %8 = tpu.matmul %5, %6, %cst {dimension_numbers = #tpu.dot_dimension_numbers<[1], [1], [0], [0], [0, 0, 1, 0], [], []>} : vector<8x8xbf16>, vector<16x8xbf16>, vector<8x16xf32> -> vector<8x16xf32>
    %cst_7 = arith.constant 0.353553385 : f32
    %9 = vector.broadcast %cst_7 : f32 to vector<8x16xf32>
    %10 = arith.mulf %8, %9 : vector<8x16xf32>
    %cst_8 = arith.constant dense<0xFF800000> : vector<8xf32>
    %11 = vector.multi_reduction <maximumf>, %10, %cst_8 [1] : vector<8x16xf32> to vector<8xf32>
    %12 = vector.shape_cast %11 : vector<8xf32> to vector<8x1xf32>
    %13 = vector.broadcast %12 : vector<8x1xf32> to vector<8x16xf32>
    %14 = arith.subf %10, %13 : vector<8x16xf32>
    %15 = math.exp %14 : vector<8x16xf32>
    %cst_9 = arith.constant dense<0.000000e+00> : vector<8xf32>
    %16 = vector.multi_reduction <add>, %15, %cst_9 [1] : vector<8x16xf32> to vector<8xf32>
    %17 = vector.shape_cast %16 : vector<8xf32> to vector<8x1xf32>
    %18 = arith.truncf %15 : vector<8x16xf32> to vector<8x16xbf16>
    %cst_10 = arith.constant dense<0.000000e+00> : vector<8x8xf32>
    %19 = tpu.matmul %18, %7, %cst_10 {dimension_numbers = #tpu.dot_dimension_numbers<[1], [0], [0], [1], [0, 0, 1, 1], [], []>} : vector<8x16xbf16>, vector<16x8xbf16>, vector<8x8xf32> -> vector<8x8xf32>
    %20 = tpu.reciprocal %17 {approx = true} : vector<8x1xf32> -> vector<8x1xf32>
    %21 = vector.broadcast %20 : vector<8x1xf32> to vector<8x8xf32>
    %22 = arith.mulf %19, %21 : vector<8x8xf32>
    %c0_11 = arith.constant 0 : index
    %c0_12 = arith.constant 0 : index
    %c8 = arith.constant 8 : index
    %23 = vector.load %arg2[%c0_11, %c0_12, %c8] : memref<1x8x32xbf16, #tpu.memory_space<vmem>>, vector<1x8x8xbf16>
    %24 = vector.shape_cast %23 : vector<1x8x8xbf16> to vector<8x8xbf16>
    %25 = vector.extract_strided_slice %1 {offsets = [0, 8], sizes = [16, 8], strides = [1, 1]} : vector<16x32xbf16> to vector<16x8xbf16>
    %26 = vector.extract_strided_slice %3 {offsets = [0, 8], sizes = [16, 8], strides = [1, 1]} : vector<16x32xbf16> to vector<16x8xbf16>
    %cst_13 = arith.constant dense<0.000000e+00> : vector<8x16xf32>
    %27 = tpu.matmul %24, %25, %cst_13 {dimension_numbers = #tpu.dot_dimension_numbers<[1], [1], [0], [0], [0, 0, 1, 0], [], []>} : vector<8x8xbf16>, vector<16x8xbf16>, vector<8x16xf32> -> vector<8x16xf32>
    %cst_14 = arith.constant 0.353553385 : f32
    %28 = vector.broadcast %cst_14 : f32 to vector<8x16xf32>
    %29 = arith.mulf %27, %28 : vector<8x16xf32>
    %cst_15 = arith.constant dense<0xFF800000> : vector<8xf32>
    %30 = vector.multi_reduction <maximumf>, %29, %cst_15 [1] : vector<8x16xf32> to vector<8xf32>
    %31 = vector.shape_cast %30 : vector<8xf32> to vector<8x1xf32>
    %32 = vector.broadcast %31 : vector<8x1xf32> to vector<8x16xf32>
    %33 = arith.subf %29, %32 : vector<8x16xf32>
    %34 = math.exp %33 : vector<8x16xf32>
    %cst_16 = arith.constant dense<0.000000e+00> : vector<8xf32>
    %35 = vector.multi_reduction <add>, %34, %cst_16 [1] : vector<8x16xf32> to vector<8xf32>
    %36 = vector.shape_cast %35 : vector<8xf32> to vector<8x1xf32>
    %37 = arith.truncf %34 : vector<8x16xf32> to vector<8x16xbf16>
    %cst_17 = arith.constant dense<0.000000e+00> : vector<8x8xf32>
    %38 = tpu.matmul %37, %26, %cst_17 {dimension_numbers = #tpu.dot_dimension_numbers<[1], [0], [0], [1], [0, 0, 1, 1], [], []>} : vector<8x16xbf16>, vector<16x8xbf16>, vector<8x8xf32> -> vector<8x8xf32>
    %39 = tpu.reciprocal %36 {approx = true} : vector<8x1xf32> -> vector<8x1xf32>
    %40 = vector.broadcast %39 : vector<8x1xf32> to vector<8x8xf32>
    %41 = arith.mulf %38, %40 : vector<8x8xf32>
    %42 = tpu.concatenate %22, %41 in 1 : vector<8x8xf32>, vector<8x8xf32> -> vector<8x16xf32>
    %43 = arith.truncf %42 : vector<8x16xf32> to vector<8x16xbf16>
    %c0_18 = arith.constant 0 : index
    %c0_19 = arith.constant 0 : index
    %c0_20 = arith.constant 0 : index
    %44 = vector.load %arg4[%c0_18, %c0_19, %c0_20] : memref<1x8x32xbf16, #tpu.memory_space<vmem>>, vector<1x8x16xbf16>
    %45 = vector.shape_cast %44 : vector<1x8x16xbf16> to vector<8x16xbf16>
    %46 = vector.shape_cast %43 : vector<8x16xbf16> to vector<1x8x16xbf16>
    tpu.vector_store %arg4[%c0_18, %c0_19, %c0_20], %46 {strides = array<i32>} : memref<1x8x32xbf16, #tpu.memory_space<vmem>>, vector<1x8x16xbf16>,
    %c0_21 = arith.constant 0 : index
    %c0_22 = arith.constant 0 : index
    %c16 = arith.constant 16 : index
    %47 = vector.load %arg2[%c0_21, %c0_22, %c16] : memref<1x8x32xbf16, #tpu.memory_space<vmem>>, vector<1x8x8xbf16>
    %48 = vector.shape_cast %47 : vector<1x8x8xbf16> to vector<8x8xbf16>
    %49 = vector.extract_strided_slice %1 {offsets = [0, 16], sizes = [16, 8], strides = [1, 1]} : vector<16x32xbf16> to vector<16x8xbf16>
    %50 = vector.extract_strided_slice %3 {offsets = [0, 16], sizes = [16, 8], strides = [1, 1]} : vector<16x32xbf16> to vector<16x8xbf16>
    %cst_23 = arith.constant dense<0.000000e+00> : vector<8x16xf32>
    %51 = tpu.matmul %48, %49, %cst_23 {dimension_numbers = #tpu.dot_dimension_numbers<[1], [1], [0], [0], [0, 0, 1, 0], [], []>} : vector<8x8xbf16>, vector<16x8xbf16>, vector<8x16xf32> -> vector<8x16xf32>
    %cst_24 = arith.constant 0.353553385 : f32
    %52 = vector.broadcast %cst_24 : f32 to vector<8x16xf32>
    %53 = arith.mulf %51, %52 : vector<8x16xf32>
    %cst_25 = arith.constant dense<0xFF800000> : vector<8xf32>
    %54 = vector.multi_reduction <maximumf>, %53, %cst_25 [1] : vector<8x16xf32> to vector<8xf32>
    %55 = vector.shape_cast %54 : vector<8xf32> to vector<8x1xf32>
    %56 = vector.broadcast %55 : vector<8x1xf32> to vector<8x16xf32>
    %57 = arith.subf %53, %56 : vector<8x16xf32>
    %58 = math.exp %57 : vector<8x16xf32>
    %cst_26 = arith.constant dense<0.000000e+00> : vector<8xf32>
    %59 = vector.multi_reduction <add>, %58, %cst_26 [1] : vector<8x16xf32> to vector<8xf32>
    %60 = vector.shape_cast %59 : vector<8xf32> to vector<8x1xf32>
    %61 = arith.truncf %58 : vector<8x16xf32> to vector<8x16xbf16>
    %cst_27 = arith.constant dense<0.000000e+00> : vector<8x8xf32>
    %62 = tpu.matmul %61, %50, %cst_27 {dimension_numbers = #tpu.dot_dimension_numbers<[1], [0], [0], [1], [0, 0, 1, 1], [], []>} : vector<8x16xbf16>, vector<16x8xbf16>, vector<8x8xf32> -> vector<8x8xf32>
    %63 = tpu.reciprocal %60 {approx = true} : vector<8x1xf32> -> vector<8x1xf32>
    %64 = vector.broadcast %63 : vector<8x1xf32> to vector<8x8xf32>
    %65 = arith.mulf %62, %64 : vector<8x8xf32>
    %c0_28 = arith.constant 0 : index
    %c0_29 = arith.constant 0 : index
    %c24 = arith.constant 24 : index
    %66 = vector.load %arg2[%c0_28, %c0_29, %c24] : memref<1x8x32xbf16, #tpu.memory_space<vmem>>, vector<1x8x8xbf16>
    %67 = vector.shape_cast %66 : vector<1x8x8xbf16> to vector<8x8xbf16>
    %68 = vector.extract_strided_slice %1 {offsets = [0, 24], sizes = [16, 8], strides = [1, 1]} : vector<16x32xbf16> to vector<16x8xbf16>
    %69 = vector.extract_strided_slice %3 {offsets = [0, 24], sizes = [16, 8], strides = [1, 1]} : vector<16x32xbf16> to vector<16x8xbf16>
    %cst_30 = arith.constant dense<0.000000e+00> : vector<8x16xf32>
    %70 = tpu.matmul %67, %68, %cst_30 {dimension_numbers = #tpu.dot_dimension_numbers<[1], [1], [0], [0], [0, 0, 1, 0], [], []>} : vector<8x8xbf16>, vector<16x8xbf16>, vector<8x16xf32> -> vector<8x16xf32>
    %cst_31 = arith.constant 0.353553385 : f32
    %71 = vector.broadcast %cst_31 : f32 to vector<8x16xf32>
    %72 = arith.mulf %70, %71 : vector<8x16xf32>
    %cst_32 = arith.constant dense<0xFF800000> : vector<8xf32>
    %73 = vector.multi_reduction <maximumf>, %72, %cst_32 [1] : vector<8x16xf32> to vector<8xf32>
    %74 = vector.shape_cast %73 : vector<8xf32> to vector<8x1xf32>
    %75 = vector.broadcast %74 : vector<8x1xf32> to vector<8x16xf32>
    %76 = arith.subf %72, %75 : vector<8x16xf32>
    %77 = math.exp %76 : vector<8x16xf32>
    %cst_33 = arith.constant dense<0.000000e+00> : vector<8xf32>
    %78 = vector.multi_reduction <add>, %77, %cst_33 [1] : vector<8x16xf32> to vector<8xf32>
    %79 = vector.shape_cast %78 : vector<8xf32> to vector<8x1xf32>
    %80 = arith.truncf %77 : vector<8x16xf32> to vector<8x16xbf16>
    %cst_34 = arith.constant dense<0.000000e+00> : vector<8x8xf32>
    %81 = tpu.matmul %80, %69, %cst_34 {dimension_numbers = #tpu.dot_dimension_numbers<[1], [0], [0], [1], [0, 0, 1, 1], [], []>} : vector<8x16xbf16>, vector<16x8xbf16>, vector<8x8xf32> -> vector<8x8xf32>
    %82 = tpu.reciprocal %79 {approx = true} : vector<8x1xf32> -> vector<8x1xf32>
    %83 = vector.broadcast %82 : vector<8x1xf32> to vector<8x8xf32>
    %84 = arith.mulf %81, %83 : vector<8x8xf32>
    %85 = tpu.concatenate %65, %84 in 1 : vector<8x8xf32>, vector<8x8xf32> -> vector<8x16xf32>
    %86 = arith.truncf %85 : vector<8x16xf32> to vector<8x16xbf16>
    %c0_35 = arith.constant 0 : index
    %c0_36 = arith.constant 0 : index
    %c16_37 = arith.constant 16 : index
    %87 = vector.load %arg4[%c0_35, %c0_36, %c16_37] : memref<1x8x32xbf16, #tpu.memory_space<vmem>>, vector<1x8x16xbf16>
    %88 = vector.shape_cast %87 : vector<1x8x16xbf16> to vector<8x16xbf16>
    %89 = vector.shape_cast %86 : vector<8x16xbf16> to vector<1x8x16xbf16>
    tpu.vector_store %arg4[%c0_35, %c0_36, %c16_37], %89 {strides = array<i32>} : memref<1x8x32xbf16, #tpu.memory_space<vmem>>, vector<1x8x16xbf16>,
    return
  }
  func.func @transform_0(%arg0: i32, %arg1: i32) -> (i32, i32, i32) {
    %c0_i32 = arith.constant 0 : i32
    %c0_i32_0 = arith.constant 0 : i32
    return %arg0, %arg1, %c0_i32 : i32, i32, i32
  }
  func.func @transform_1(%arg0: i32, %arg1: i32) -> (i32, i32, i32) {
    %c0_i32 = arith.constant 0 : i32
    %c0_i32_0 = arith.constant 0 : i32
    %c0_i32_1 = arith.constant 0 : i32
    return %arg0, %c0_i32, %c0_i32_0 : i32, i32, i32
  }
  func.func @transform_2(%arg0: i32, %arg1: i32) -> (i32, i32, i32) {
    %c0_i32 = arith.constant 0 : i32
    %c0_i32_0 = arith.constant 0 : i32
    return %arg0, %arg1, %c0_i32 : i32, i32, i32
  }
}

module attributes {stable_mosaic.version = 11 : i64} {
  func.func @_ln_dense_kernel(%arg0: i32, %arg1: i32, %arg2: memref<16x32xf32, #tpu.memory_space<vmem>>, %arg3: memref<1x32xf32, #tpu.memory_space<vmem>>, %arg4: memref<1x32xf32, #tpu.memory_space<vmem>>, %arg5: memref<32x64xbf16, #tpu.memory_space<vmem>>, %arg6: memref<1x64xf32, #tpu.memory_space<vmem>>, %arg7: memref<16x64xbf16, #tpu.memory_space<vmem>>, %arg8: memref<16x32xbf16, #tpu.memory_space<vmem>>) attributes {dimension_semantics = [#tpu.dimension_semantics<parallel>, #tpu.dimension_semantics<arbitrary>], iteration_bounds = array<i64: 1, 1>, scalar_prefetch = 0 : i64, scratch_operands = 1 : i64, tpu.core_type = #tpu.core_type<tc>, window_params = [{transform_indices = @transform_0, window_bounds = array<i64: 16, 32>}, {pipeline_mode = #tpu.pipeline_mode<synchronous>, transform_indices = @transform_1, window_bounds = array<i64: 1, 32>}, {pipeline_mode = #tpu.pipeline_mode<synchronous>, transform_indices = @transform_2, window_bounds = array<i64: 1, 32>}, {pipeline_mode = #tpu.pipeline_mode<synchronous>, transform_indices = @transform_3, window_bounds = array<i64: 32, 64>}, {transform_indices = @transform_4, window_bounds = array<i64: 1, 64>}, {transform_indices = @transform_5, window_bounds = array<i64: 16, 64>}]} {
    %c0_i32 = arith.constant 0 : i32
    %0 = arith.cmpi eq, %arg1, %c0_i32 : i32
    %1 = arith.extui %0 : i1 to i32
    %c0_i32_0 = arith.constant 0 : i32
    %2 = arith.cmpi ne, %1, %c0_i32_0 : i32
    scf.if %2 {
      %c0_24 = arith.constant 0 : index
      %c0_25 = arith.constant 0 : index
      %52 = vector.load %arg2[%c0_24, %c0_25] : memref<16x32xf32, #tpu.memory_space<vmem>>, vector<16x32xf32>
      %cst_26 = arith.constant dense<0.000000e+00> : vector<16xf32>
      %53 = vector.multi_reduction <add>, %52, %cst_26 [1] : vector<16x32xf32> to vector<16xf32>
      %54 = vector.shape_cast %53 : vector<16xf32> to vector<16x1xf32>
      %cst_27 = arith.constant 3.200000e+01 : f32
      %55 = vector.broadcast %cst_27 : f32 to vector<16x1xf32>
      %56 = arith.divf %54, %55 : vector<16x1xf32>
      %57 = vector.broadcast %56 : vector<16x1xf32> to vector<16x32xf32>
      %58 = arith.subf %52, %57 : vector<16x32xf32>
      %59 = arith.mulf %58, %58 : vector<16x32xf32>
      %cst_28 = arith.constant dense<0.000000e+00> : vector<16xf32>
      %60 = vector.multi_reduction <add>, %59, %cst_28 [1] : vector<16x32xf32> to vector<16xf32>
      %61 = vector.shape_cast %60 : vector<16xf32> to vector<16x1xf32>
      %cst_29 = arith.constant 3.200000e+01 : f32
      %62 = vector.broadcast %cst_29 : f32 to vector<16x1xf32>
      %63 = arith.divf %61, %62 : vector<16x1xf32>
      %cst_30 = arith.constant 9.99999974E-6 : f32
      %64 = vector.broadcast %cst_30 : f32 to vector<16x1xf32>
      %65 = arith.addf %63, %64 : vector<16x1xf32>
      %66 = math.rsqrt %65 : vector<16x1xf32>
      %67 = vector.broadcast %66 : vector<16x1xf32> to vector<16x32xf32>
      %68 = arith.mulf %58, %67 : vector<16x32xf32>
      %c0_31 = arith.constant 0 : index
      %c0_32 = arith.constant 0 : index
      %69 = vector.load %arg3[%c0_31, %c0_32] : memref<1x32xf32, #tpu.memory_space<vmem>>, vector<1x32xf32>
      %70 = vector.broadcast %69 : vector<1x32xf32> to vector<16x32xf32>
      %71 = arith.mulf %68, %70 : vector<16x32xf32>
      %c0_33 = arith.constant 0 : index
      %c0_34 = arith.constant 0 : index
      %72 = vector.load %arg4[%c0_33, %c0_34] : memref<1x32xf32, #tpu.memory_space<vmem>>, vector<1x32xf32>
      %73 = vector.broadcast %72 : vector<1x32xf32> to vector<16x32xf32>
      %74 = arith.addf %71, %73 : vector<16x32xf32>
      %75 = arith.truncf %74 : vector<16x32xf32> to vector<16x32xbf16>
      %c0_35 = arith.constant 0 : index
      %c0_36 = arith.constant 0 : index
      %76 = vector.load %arg8[%c0_35, %c0_36] : memref<16x32xbf16, #tpu.memory_space<vmem>>, vector<16x32xbf16>
      tpu.vector_store %arg8[%c0_35, %c0_36], %75 {strides = array<i32>} : memref<16x32xbf16, #tpu.memory_space<vmem>>, vector<16x32xbf16>,
    } else {
    }
    %c0 = arith.constant 0 : index
    %c0_1 = arith.constant 0 : index
    %3 = vector.load %arg5[%c0, %c0_1] : memref<32x64xbf16, #tpu.memory_space<vmem>>, vector<32x64xbf16>
    %c0_2 = arith.constant 0 : index
    %c0_3 = arith.constant 0 : index
    %4 = vector.load %arg8[%c0_2, %c0_3] : memref<16x32xbf16, #tpu.memory_space<vmem>>, vector<16x32xbf16>
    %cst = arith.constant dense<0.000000e+00> : vector<16x64xf32>
    %5 = tpu.matmul %4, %3, %cst {dimension_numbers = #tpu.dot_dimension_numbers<[1], [0], [0], [1], [0, 0, 1, 1], [], []>} : vector<16x32xbf16>, vector<32x64xbf16>, vector<16x64xf32> -> vector<16x64xf32>
    %c0_4 = arith.constant 0 : index
    %c0_5 = arith.constant 0 : index
    %6 = vector.load %arg6[%c0_4, %c0_5] : memref<1x64xf32, #tpu.memory_space<vmem>>, vector<1x64xf32>
    %7 = vector.broadcast %6 : vector<1x64xf32> to vector<16x64xf32>
    %8 = arith.addf %5, %7 : vector<16x64xf32>
    %cst_6 = arith.constant 5.000000e-01 : f32
    %9 = vector.broadcast %cst_6 : f32 to vector<16x64xf32>
    %10 = arith.mulf %9, %8 : vector<16x64xf32>
    %cst_7 = arith.constant 0.707106769 : f32
    %11 = vector.broadcast %cst_7 : f32 to vector<16x64xf32>
    %12 = arith.mulf %8, %11 : vector<16x64xf32>
    %cst_8 = arith.constant 0.000000e+00 : f32
    %13 = vector.broadcast %cst_8 : f32 to vector<16x64xf32>
    %14 = arith.cmpf oge, %12, %13 : vector<16x64xf32>
    %cst_9 = arith.constant 1.000000e+00 : f32
    %cst_10 = arith.constant -1.000000e+00 : f32
    %15 = vector.broadcast %cst_9 : f32 to vector<16x64xf32>
    %16 = vector.broadcast %cst_10 : f32 to vector<16x64xf32>
    %17 = arith.select %14, %15, %16 : vector<16x64xi1>, vector<16x64xf32>
    %18 = math.absf %12 : vector<16x64xf32>
    %cst_11 = arith.constant 0.327591091 : f32
    %19 = vector.broadcast %cst_11 : f32 to vector<16x64xf32>
    %20 = arith.mulf %19, %18 : vector<16x64xf32>
    %cst_12 = arith.constant 1.000000e+00 : f32
    %21 = vector.broadcast %cst_12 : f32 to vector<16x64xf32>
    %22 = arith.addf %21, %20 : vector<16x64xf32>
    %cst_13 = arith.constant 1.000000e+00 : f32
    %23 = vector.broadcast %cst_13 : f32 to vector<16x64xf32>
    %24 = arith.divf %23, %22 : vector<16x64xf32>
    %cst_14 = arith.constant 1.06140542 : f32
    %25 = vector.broadcast %cst_14 : f32 to vector<16x64xf32>
    %26 = arith.mulf %25, %24 : vector<16x64xf32>
    %cst_15 = arith.constant -1.45315206 : f32
    %27 = vector.broadcast %cst_15 : f32 to vector<16x64xf32>
    %28 = arith.addf %26, %27 : vector<16x64xf32>
    %29 = arith.mulf %28, %24 : vector<16x64xf32>
    %cst_16 = arith.constant 1.42141378 : f32
    %30 = vector.broadcast %cst_16 : f32 to vector<16x64xf32>
    %31 = arith.addf %29, %30 : vector<16x64xf32>
    %32 = arith.mulf %31, %24 : vector<16x64xf32>
    %cst_17 = arith.constant -0.284496725 : f32
    %33 = vector.broadcast %cst_17 : f32 to vector<16x64xf32>
    %34 = arith.addf %32, %33 : vector<16x64xf32>
    %35 = arith.mulf %34, %24 : vector<16x64xf32>
    %cst_18 = arith.constant 0.254829586 : f32
    %36 = vector.broadcast %cst_18 : f32 to vector<16x64xf32>
    %37 = arith.addf %35, %36 : vector<16x64xf32>
    %38 = arith.mulf %37, %24 : vector<16x64xf32>
    %cst_19 = arith.constant 0.000000e+00 : f32
    %39 = vector.broadcast %cst_19 : f32 to vector<16x64xf32>
    %40 = arith.subf %39, %18 : vector<16x64xf32>
    %41 = arith.mulf %40, %18 : vector<16x64xf32>
    %42 = math.exp %41 : vector<16x64xf32>
    %43 = arith.mulf %38, %42 : vector<16x64xf32>
    %cst_20 = arith.constant 1.000000e+00 : f32
    %44 = vector.broadcast %cst_20 : f32 to vector<16x64xf32>
    %45 = arith.subf %44, %43 : vector<16x64xf32>
    %46 = arith.mulf %17, %45 : vector<16x64xf32>
    %cst_21 = arith.constant 1.000000e+00 : f32
    %47 = vector.broadcast %cst_21 : f32 to vector<16x64xf32>
    %48 = arith.addf %47, %46 : vector<16x64xf32>
    %49 = arith.mulf %10, %48 : vector<16x64xf32>
    %50 = arith.truncf %49 : vector<16x64xf32> to vector<16x64xbf16>
    %c0_22 = arith.constant 0 : index
    %c0_23 = arith.constant 0 : index
    %51 = vector.load %arg7[%c0_22, %c0_23] : memref<16x64xbf16, #tpu.memory_space<vmem>>, vector<16x64xbf16>
    tpu.vector_store %arg7[%c0_22, %c0_23], %50 {strides = array<i32>} : memref<16x64xbf16, #tpu.memory_space<vmem>>, vector<16x64xbf16>,
    return
  }
  func.func @transform_0(%arg0: i32, %arg1: i32) -> (i32, i32) {
    %c0_i32 = arith.constant 0 : i32
    %c0_i32_0 = arith.constant 0 : i32
    return %arg0, %c0_i32 : i32, i32
  }
  func.func @transform_1(%arg0: i32, %arg1: i32) -> (i32, i32) {
    %c0_i32 = arith.constant 0 : i32
    %c0_i32_0 = arith.constant 0 : i32
    %c0_i32_1 = arith.constant 0 : i32
    return %c0_i32, %c0_i32_0 : i32, i32
  }
  func.func @transform_2(%arg0: i32, %arg1: i32) -> (i32, i32) {
    %c0_i32 = arith.constant 0 : i32
    %c0_i32_0 = arith.constant 0 : i32
    %c0_i32_1 = arith.constant 0 : i32
    return %c0_i32, %c0_i32_0 : i32, i32
  }
  func.func @transform_3(%arg0: i32, %arg1: i32) -> (i32, i32) {
    %c0_i32 = arith.constant 0 : i32
    %c0_i32_0 = arith.constant 0 : i32
    %c0_i32_1 = arith.constant 0 : i32
    return %c0_i32, %c0_i32_0 : i32, i32
  }
  func.func @transform_4(%arg0: i32, %arg1: i32) -> (i32, i32) {
    %c0_i32 = arith.constant 0 : i32
    %c0_i32_0 = arith.constant 0 : i32
    return %c0_i32, %arg1 : i32, i32
  }
  func.func @transform_5(%arg0: i32, %arg1: i32) -> (i32, i32) {
    %c0_i32 = arith.constant 0 : i32
    return %arg0, %arg1 : i32, i32
  }
}

module attributes {stable_mosaic.version = 11 : i64} {
  func.func @_dense_res_kernel(%arg0: i32, %arg1: i32, %arg2: memref<16x64xbf16, #tpu.memory_space<vmem>>, %arg3: memref<64x32xbf16, #tpu.memory_space<vmem>>, %arg4: memref<1x32xf32, #tpu.memory_space<vmem>>, %arg5: memref<16x32xf32, #tpu.memory_space<vmem>>, %arg6: memref<16x32xf32, #tpu.memory_space<vmem>>) attributes {dimension_semantics = [#tpu.dimension_semantics<parallel>, #tpu.dimension_semantics<parallel>], iteration_bounds = array<i64: 1, 1>, scalar_prefetch = 0 : i64, scratch_operands = 0 : i64, tpu.core_type = #tpu.core_type<tc>, window_params = [{transform_indices = @transform_0, window_bounds = array<i64: 16, 64>}, {pipeline_mode = #tpu.pipeline_mode<synchronous>, transform_indices = @transform_1, window_bounds = array<i64: 64, 32>}, {transform_indices = @transform_2, window_bounds = array<i64: 1, 32>}, {transform_indices = @transform_3, window_bounds = array<i64: 16, 32>}, {transform_indices = @transform_4, window_bounds = array<i64: 16, 32>}]} {
    %c0 = arith.constant 0 : index
    %c0_0 = arith.constant 0 : index
    %0 = vector.load %arg3[%c0, %c0_0] : memref<64x32xbf16, #tpu.memory_space<vmem>>, vector<64x32xbf16>
    %c0_1 = arith.constant 0 : index
    %c0_2 = arith.constant 0 : index
    %1 = vector.load %arg2[%c0_1, %c0_2] : memref<16x64xbf16, #tpu.memory_space<vmem>>, vector<16x64xbf16>
    %cst = arith.constant dense<0.000000e+00> : vector<16x32xf32>
    %2 = tpu.matmul %1, %0, %cst {dimension_numbers = #tpu.dot_dimension_numbers<[1], [0], [0], [1], [0, 0, 1, 1], [], []>} : vector<16x64xbf16>, vector<64x32xbf16>, vector<16x32xf32> -> vector<16x32xf32>
    %c0_3 = arith.constant 0 : index
    %c0_4 = arith.constant 0 : index
    %3 = vector.load %arg4[%c0_3, %c0_4] : memref<1x32xf32, #tpu.memory_space<vmem>>, vector<1x32xf32>
    %4 = vector.broadcast %3 : vector<1x32xf32> to vector<16x32xf32>
    %5 = arith.addf %2, %4 : vector<16x32xf32>
    %c0_5 = arith.constant 0 : index
    %c0_6 = arith.constant 0 : index
    %6 = vector.load %arg5[%c0_5, %c0_6] : memref<16x32xf32, #tpu.memory_space<vmem>>, vector<16x32xf32>
    %7 = arith.addf %5, %6 : vector<16x32xf32>
    %c0_7 = arith.constant 0 : index
    %c0_8 = arith.constant 0 : index
    %8 = vector.load %arg6[%c0_7, %c0_8] : memref<16x32xf32, #tpu.memory_space<vmem>>, vector<16x32xf32>
    tpu.vector_store %arg6[%c0_7, %c0_8], %7 {strides = array<i32>} : memref<16x32xf32, #tpu.memory_space<vmem>>, vector<16x32xf32>,
    return
  }
  func.func @transform_0(%arg0: i32, %arg1: i32) -> (i32, i32) {
    %c0_i32 = arith.constant 0 : i32
    %c0_i32_0 = arith.constant 0 : i32
    return %arg0, %c0_i32 : i32, i32
  }
  func.func @transform_1(%arg0: i32, %arg1: i32) -> (i32, i32) {
    %c0_i32 = arith.constant 0 : i32
    %c0_i32_0 = arith.constant 0 : i32
    %c0_i32_1 = arith.constant 0 : i32
    return %c0_i32, %c0_i32_0 : i32, i32
  }
  func.func @transform_2(%arg0: i32, %arg1: i32) -> (i32, i32) {
    %c0_i32 = arith.constant 0 : i32
    %c0_i32_0 = arith.constant 0 : i32
    return %c0_i32, %arg1 : i32, i32
  }
  func.func @transform_3(%arg0: i32, %arg1: i32) -> (i32, i32) {
    %c0_i32 = arith.constant 0 : i32
    return %arg0, %arg1 : i32, i32
  }
  func.func @transform_4(%arg0: i32, %arg1: i32) -> (i32, i32) {
    %c0_i32 = arith.constant 0 : i32
    return %arg0, %arg1 : i32, i32
  }
}

module attributes {stable_mosaic.version = 11 : i64} {
  func.func @_layernorm_kernel(%arg0: i32, %arg1: memref<16x32xf32, #tpu.memory_space<vmem>>, %arg2: memref<1x32xf32, #tpu.memory_space<vmem>>, %arg3: memref<1x32xf32, #tpu.memory_space<vmem>>, %arg4: memref<16x32xbf16, #tpu.memory_space<vmem>>) attributes {dimension_semantics = [#tpu.dimension_semantics<parallel>], iteration_bounds = array<i64: 1>, scalar_prefetch = 0 : i64, scratch_operands = 0 : i64, tpu.core_type = #tpu.core_type<tc>, window_params = [{transform_indices = @transform_0, window_bounds = array<i64: 16, 32>}, {pipeline_mode = #tpu.pipeline_mode<synchronous>, transform_indices = @transform_1, window_bounds = array<i64: 1, 32>}, {pipeline_mode = #tpu.pipeline_mode<synchronous>, transform_indices = @transform_2, window_bounds = array<i64: 1, 32>}, {transform_indices = @transform_3, window_bounds = array<i64: 16, 32>}]} {
    %c0 = arith.constant 0 : index
    %c0_0 = arith.constant 0 : index
    %0 = vector.load %arg1[%c0, %c0_0] : memref<16x32xf32, #tpu.memory_space<vmem>>, vector<16x32xf32>
    %cst = arith.constant dense<0.000000e+00> : vector<16xf32>
    %1 = vector.multi_reduction <add>, %0, %cst [1] : vector<16x32xf32> to vector<16xf32>
    %2 = vector.shape_cast %1 : vector<16xf32> to vector<16x1xf32>
    %cst_1 = arith.constant 3.200000e+01 : f32
    %3 = vector.broadcast %cst_1 : f32 to vector<16x1xf32>
    %4 = arith.divf %2, %3 : vector<16x1xf32>
    %5 = vector.broadcast %4 : vector<16x1xf32> to vector<16x32xf32>
    %6 = arith.subf %0, %5 : vector<16x32xf32>
    %7 = arith.mulf %6, %6 : vector<16x32xf32>
    %cst_2 = arith.constant dense<0.000000e+00> : vector<16xf32>
    %8 = vector.multi_reduction <add>, %7, %cst_2 [1] : vector<16x32xf32> to vector<16xf32>
    %9 = vector.shape_cast %8 : vector<16xf32> to vector<16x1xf32>
    %cst_3 = arith.constant 3.200000e+01 : f32
    %10 = vector.broadcast %cst_3 : f32 to vector<16x1xf32>
    %11 = arith.divf %9, %10 : vector<16x1xf32>
    %cst_4 = arith.constant 9.99999974E-6 : f32
    %12 = vector.broadcast %cst_4 : f32 to vector<16x1xf32>
    %13 = arith.addf %11, %12 : vector<16x1xf32>
    %14 = math.rsqrt %13 : vector<16x1xf32>
    %15 = vector.broadcast %14 : vector<16x1xf32> to vector<16x32xf32>
    %16 = arith.mulf %6, %15 : vector<16x32xf32>
    %c0_5 = arith.constant 0 : index
    %c0_6 = arith.constant 0 : index
    %17 = vector.load %arg2[%c0_5, %c0_6] : memref<1x32xf32, #tpu.memory_space<vmem>>, vector<1x32xf32>
    %18 = vector.broadcast %17 : vector<1x32xf32> to vector<16x32xf32>
    %19 = arith.mulf %16, %18 : vector<16x32xf32>
    %c0_7 = arith.constant 0 : index
    %c0_8 = arith.constant 0 : index
    %20 = vector.load %arg3[%c0_7, %c0_8] : memref<1x32xf32, #tpu.memory_space<vmem>>, vector<1x32xf32>
    %21 = vector.broadcast %20 : vector<1x32xf32> to vector<16x32xf32>
    %22 = arith.addf %19, %21 : vector<16x32xf32>
    %23 = arith.truncf %22 : vector<16x32xf32> to vector<16x32xbf16>
    %c0_9 = arith.constant 0 : index
    %c0_10 = arith.constant 0 : index
    %24 = vector.load %arg4[%c0_9, %c0_10] : memref<16x32xbf16, #tpu.memory_space<vmem>>, vector<16x32xbf16>
    tpu.vector_store %arg4[%c0_9, %c0_10], %23 {strides = array<i32>} : memref<16x32xbf16, #tpu.memory_space<vmem>>, vector<16x32xbf16>,
    return
  }
  func.func @transform_0(%arg0: i32) -> (i32, i32) {
    %c0_i32 = arith.constant 0 : i32
    %c0_i32_0 = arith.constant 0 : i32
    return %arg0, %c0_i32 : i32, i32
  }
  func.func @transform_1(%arg0: i32) -> (i32, i32) {
    %c0_i32 = arith.constant 0 : i32
    %c0_i32_0 = arith.constant 0 : i32
    %c0_i32_1 = arith.constant 0 : i32
    return %c0_i32, %c0_i32_0 : i32, i32
  }
  func.func @transform_2(%arg0: i32) -> (i32, i32) {
    %c0_i32 = arith.constant 0 : i32
    %c0_i32_0 = arith.constant 0 : i32
    %c0_i32_1 = arith.constant 0 : i32
    return %c0_i32, %c0_i32_0 : i32, i32
  }
  func.func @transform_3(%arg0: i32) -> (i32, i32) {
    %c0_i32 = arith.constant 0 : i32
    %c0_i32_0 = arith.constant 0 : i32
    return %arg0, %c0_i32 : i32, i32
  }
}

module attributes {stable_mosaic.version = 11 : i64} {
  func.func @_dense_stream_kernel(%arg0: i32, %arg1: i32, %arg2: i32, %arg3: memref<16x32xbf16, #tpu.memory_space<vmem>>, %arg4: memref<64x32xbf16, #tpu.memory_space<vmem>>, %arg5: memref<16x64xf32, #tpu.memory_space<vmem>>, %arg6: memref<16x64xf32, #tpu.memory_space<vmem>>) attributes {dimension_semantics = [#tpu.dimension_semantics<parallel>, #tpu.dimension_semantics<parallel>, #tpu.dimension_semantics<arbitrary>], iteration_bounds = array<i64: 1, 1, 1>, scalar_prefetch = 0 : i64, scratch_operands = 1 : i64, tpu.core_type = #tpu.core_type<tc>, window_params = [{transform_indices = @transform_0, window_bounds = array<i64: 16, 32>}, {transform_indices = @transform_1, window_bounds = array<i64: 64, 32>}, {transform_indices = @transform_2, window_bounds = array<i64: 16, 64>}]} {
    %c0_i32 = arith.constant 0 : i32
    %0 = arith.cmpi eq, %arg2, %c0_i32 : i32
    %1 = arith.extui %0 : i1 to i32
    %c0_i32_0 = arith.constant 0 : i32
    %2 = arith.cmpi ne, %1, %c0_i32_0 : i32
    scf.if %2 {
      %cst_10 = arith.constant 0.000000e+00 : f32
      %12 = vector.broadcast %cst_10 : f32 to vector<16x64xf32>
      %c0_11 = arith.constant 0 : index
      %c0_12 = arith.constant 0 : index
      %13 = vector.load %arg6[%c0_11, %c0_12] : memref<16x64xf32, #tpu.memory_space<vmem>>, vector<16x64xf32>
      tpu.vector_store %arg6[%c0_11, %c0_12], %12 {strides = array<i32>} : memref<16x64xf32, #tpu.memory_space<vmem>>, vector<16x64xf32>,
    } else {
    }
    %c0 = arith.constant 0 : index
    %c0_1 = arith.constant 0 : index
    %3 = vector.load %arg3[%c0, %c0_1] : memref<16x32xbf16, #tpu.memory_space<vmem>>, vector<16x32xbf16>
    %c0_2 = arith.constant 0 : index
    %c0_3 = arith.constant 0 : index
    %4 = vector.load %arg4[%c0_2, %c0_3] : memref<64x32xbf16, #tpu.memory_space<vmem>>, vector<64x32xbf16>
    %c0_4 = arith.constant 0 : index
    %c0_5 = arith.constant 0 : index
    %5 = vector.load %arg6[%c0_4, %c0_5] : memref<16x64xf32, #tpu.memory_space<vmem>>, vector<16x64xf32>
    %cst = arith.constant dense<0.000000e+00> : vector<16x64xf32>
    %6 = tpu.matmul %3, %4, %cst {dimension_numbers = #tpu.dot_dimension_numbers<[1], [1], [0], [0], [0, 0, 1, 0], [], []>} : vector<16x32xbf16>, vector<64x32xbf16>, vector<16x64xf32> -> vector<16x64xf32>
    %7 = arith.addf %5, %6 : vector<16x64xf32>
    %c0_6 = arith.constant 0 : index
    %c0_7 = arith.constant 0 : index
    %8 = vector.load %arg6[%c0_6, %c0_7] : memref<16x64xf32, #tpu.memory_space<vmem>>, vector<16x64xf32>
    tpu.vector_store %arg6[%c0_6, %c0_7], %7 {strides = array<i32>} : memref<16x64xf32, #tpu.memory_space<vmem>>, vector<16x64xf32>,
    %c0_i32_8 = arith.constant 0 : i32
    %9 = arith.cmpi eq, %arg2, %c0_i32_8 : i32
    %10 = arith.extui %9 : i1 to i32
    %c0_i32_9 = arith.constant 0 : i32
    %11 = arith.cmpi ne, %10, %c0_i32_9 : i32
    scf.if %11 {
      %c0_10 = arith.constant 0 : index
      %c0_11 = arith.constant 0 : index
      %12 = vector.load %arg6[%c0_10, %c0_11] : memref<16x64xf32, #tpu.memory_space<vmem>>, vector<16x64xf32>
      %c0_12 = arith.constant 0 : index
      %c0_13 = arith.constant 0 : index
      %13 = vector.load %arg5[%c0_12, %c0_13] : memref<16x64xf32, #tpu.memory_space<vmem>>, vector<16x64xf32>
      tpu.vector_store %arg5[%c0_12, %c0_13], %12 {strides = array<i32>} : memref<16x64xf32, #tpu.memory_space<vmem>>, vector<16x64xf32>,
    } else {
    }
    return
  }
  func.func @transform_0(%arg0: i32, %arg1: i32, %arg2: i32) -> (i32, i32) {
    %c0_i32 = arith.constant 0 : i32
    return %arg0, %arg2 : i32, i32
  }
  func.func @transform_1(%arg0: i32, %arg1: i32, %arg2: i32) -> (i32, i32) {
    %c0_i32 = arith.constant 0 : i32
    return %arg1, %arg2 : i32, i32
  }
  func.func @transform_2(%arg0: i32, %arg1: i32, %arg2: i32) -> (i32, i32) {
    %c0_i32 = arith.constant 0 : i32
    return %arg0, %arg1 : i32, i32
  }
}

</mosaic_0001>

<llo_original>
// kernel: mbart_decoder_forward.21
$region0: #{mbart_decoder_forward.21}
  #allocation0 [shape = 'u32[]', space=smem, size = 0x4, offset = 0x4, fixed_abs, tag = 'smem constant byte address 0x4 - core index']
  #allocation1 [shape = 'u32[144,128]{1,0:T(1,128)}', space=vmem, size = 0x12000, scoped, tag = 'internal scratch']
  %s0 = inlined_call_operand.vmem [shape: f32[16,32], index: 0, kind: input, shape index: {}]
  %s1 = inlined_call_operand.vmem [shape: f32[1,32], index: 1, kind: input, shape index: {}]
  %s2 = inlined_call_operand.vmem [shape: f32[1,32], index: 2, kind: input, shape index: {}]
  %s3 = inlined_call_operand.vmem [shape: f32[16,32], index: 3, kind: output, shape index: {}]
  %s4 = sld [smem:[#allocation0]]
  $region22: #{mbart_decoder_forward.21} parent=0
    _
  %s6 = ssub.s32 1, %s4
  %s7 = scalar_select 0, %s6, %s4
  // Predicated region
  $region2: #{mbart_decoder_forward.21} parent=0 // pred_check
    _
  $region3: #{mbart_decoder_forward.21} parent=0 // pred_check_branch
    %9 = sbr.rel (0) target = $region5
  $region4: #{mbart_decoder_forward.21} parent=0 // pred_region
    _
  $region5: #{mbart_decoder_forward.21} parent=0 // pred_fallthru
    _
  // Predicated region
  $region6: #{mbart_decoder_forward.21} parent=0 // pred_check
    _
  $region7: #{mbart_decoder_forward.21} parent=0 // pred_check_branch
    %11 = sbr.rel (0) target = $region9
  $region8: #{mbart_decoder_forward.21} parent=0 // pred_region
    _
  $region9: #{mbart_decoder_forward.21} parent=0 // pred_fallthru
    _
  // Predicated region
  $region10: #{mbart_decoder_forward.21} parent=0 // pred_check
    _
  $region11: #{mbart_decoder_forward.21} parent=0 // pred_check_branch
    %13 = sbr.rel (0) target = $region13
  $region12: #{mbart_decoder_forward.21} parent=0 // pred_region
    _
  $region13: #{mbart_decoder_forward.21} parent=0 // pred_fallthru
    _
  %v14 = vld [vmem:[%s0] sm:$0xff]
  %v15 = vld [vmem:[%s0 + $0x8] sm:$0xff]
  %vm16 = vcmask 261120
  %v17 = vsel %vm16, %v14, 0.0
  %18 = vadd.xlane.f32.xlu0 %v17
  %v19 = vpop.xlane.xlu0 %18
  %v20 = vsel %vm16, %v15, 0.0
  %21 = vadd.xlane.f32.xlu0 %v20
  %v22 = vpop.xlane.xlu0 %21
  %v23 = vrcp.pop 32.0
  %v24 = vmul.f32 %v19, %v23
  %v25 = vmul.f32 %v22, %v23
  %v26 = vsub.f32 %v14, %v24
  %v27 = vsub.f32 %v15, %v25
  %v28 = vmul.f32 %v26, %v26
  %v29 = vmul.f32 %v27, %v27
  %v30 = vsel %vm16, %v28, 0.0
  %31 = vadd.xlane.f32.xlu0 %v30
  %v32 = vpop.xlane.xlu0 %31
  %v33 = vsel %vm16, %v29, 0.0
  %34 = vadd.xlane.f32.xlu0 %v33
  %v35 = vpop.xlane.xlu0 %34
  %v36 = vmul.f32 %v32, %v23
  %v37 = vmul.f32 %v35, %v23
  %v38 = vadd.f32 %v36, 1e-05
  %v39 = vadd.f32 %v37, 1e-05
  %v40 = vrsqrt.pop %v38
  %v41 = vrsqrt.pop %v39
  %v42 = vmul.f32 %v26, %v40
  %v43 = vmul.f32 %v27, %v41
  %v44 = vld [vmem:[%s1] sm:$0x1]
  %v46 = vlaneseq
  %v47 = vshrl.u32 %v46, 7
  %v48 = vsub.s32 0, %v47
  %v49 = vrot.slane %v44, %v48
  %v51 = vmul.f32 %v42, %v49
  %v52 = vmul.f32 %v43, %v49
  %v53 = vld [vmem:[%s2] sm:$0x1]
  %v55 = vlaneseq
  %v56 = vshrl.u32 %v55, 7
  %v57 = vsub.s32 0, %v56
  %v58 = vrot.slane %v53, %v57
  %v60 = vadd.f32 %v51, %v58
  %v61 = vadd.f32 %v52, %v58
  %62 = vst.msk [vmem:[%s3] sm:$0xff] %vm16, %v60
  %63 = vst.msk [vmem:[%s3 + $0x8] sm:$0xff] %vm16, %v61
  // Predicated region
  $region14: #{mbart_decoder_forward.21} parent=0 // pred_check
    _
  $region15: #{mbart_decoder_forward.21} parent=0 // pred_check_branch
    %65 = sbr.rel (0) target = $region17
  $region16: #{mbart_decoder_forward.21} parent=0 // pred_region
    _
  $region17: #{mbart_decoder_forward.21} parent=0 // pred_fallthru
    _
  // Predicated region
  $region18: #{mbart_decoder_forward.21} parent=0 // pred_check
    _
  $region19: #{mbart_decoder_forward.21} parent=0 // pred_check_branch
    %67 = sbr.rel (0) target = $region21
  $region20: #{mbart_decoder_forward.21} parent=0 // pred_region
    _
  $region21: #{mbart_decoder_forward.21} parent=0 // pred_fallthru
    _

// kernel: mbart_decoder_forward.24
$region0: #{mbart_decoder_forward.24}
  #allocation0 [shape = 'u32[]', space=smem, size = 0x4, offset = 0x4, fixed_abs, tag = 'smem constant byte address 0x4 - core index']
  #allocation1 [shape = 'u32[144,128]{1,0:T(1,128)}', space=vmem, size = 0x12000, scoped, tag = 'internal scratch']
  %s0 = inlined_call_operand.vmem [shape: bf16[16,32], index: 0, kind: input, shape index: {}]
  %s1 = inlined_call_operand.vmem [shape: bf16[32,32], index: 1, kind: input, shape index: {}]
  %s2 = inlined_call_operand.vmem [shape: f32[1,32], index: 2, kind: input, shape index: {}]
  %s3 = inlined_call_operand.vmem [shape: f32[16,32], index: 3, kind: input, shape index: {}]
  %s4 = inlined_call_operand.vmem [shape: f32[16,32], index: 4, kind: output, shape index: {}]
  %s5 = sld [smem:[#allocation0]]
  $region26: #{mbart_decoder_forward.24} parent=0
    _
  %s7 = ssub.s32 1, %s5
  %s8 = scalar_select 0, %s7, %s5
  // Predicated region
  $region2: #{mbart_decoder_forward.24} parent=0 // pred_check
    _
  $region3: #{mbart_decoder_forward.24} parent=0 // pred_check_branch
    %10 = sbr.rel (0) target = $region5
  $region4: #{mbart_decoder_forward.24} parent=0 // pred_region
    _
  $region5: #{mbart_decoder_forward.24} parent=0 // pred_fallthru
    _
  // Predicated region
  $region6: #{mbart_decoder_forward.24} parent=0 // pred_check
    _
  $region7: #{mbart_decoder_forward.24} parent=0 // pred_check_branch
    %12 = sbr.rel (0) target = $region9
  $region8: #{mbart_decoder_forward.24} parent=0 // pred_region
    _
  $region9: #{mbart_decoder_forward.24} parent=0 // pred_fallthru
    _
  // Predicated region
  $region10: #{mbart_decoder_forward.24} parent=0 // pred_check
    _
  $region11: #{mbart_decoder_forward.24} parent=0 // pred_check_branch
    %14 = sbr.rel (0) target = $region13
  $region12: #{mbart_decoder_forward.24} parent=0 // pred_region
    _
  $region13: #{mbart_decoder_forward.24} parent=0 // pred_fallthru
    _
  // Predicated region
  $region14: #{mbart_decoder_forward.24} parent=0 // pred_check
    _
  $region15: #{mbart_decoder_forward.24} parent=0 // pred_check_branch
    %16 = sbr.rel (0) target = $region17
  $region16: #{mbart_decoder_forward.24} parent=0 // pred_region
    _
  $region17: #{mbart_decoder_forward.24} parent=0 // pred_fallthru
    _
  %v18 = vld [vmem:[%s1] sm:$0xf]
  %v19 = vld [vmem:[%s1 + $0x4] sm:$0xf]
  %v20 = vld [vmem:[%s1 + $0x8] sm:$0xf]
  %v21 = vld [vmem:[%s1 + $0xc] sm:$0xf]
  %v22 = vld [vmem:[%s0] sm:$0xf]
  %v23 = vld [vmem:[%s0 + $0x4] sm:$0xf]
  %v24 = vld [vmem:[%s2] sm:$0x1]
  %v26 = vlaneseq
  %v27 = vshrl.u32 %v26, 7
  %v28 = vsub.s32 0, %v27
  %v29 = vrot.slane %v24, %v28
  %v33 = vunpack.c.l.b16 %v22
  %v34 = vunpack.c.l.b16 %v23
  %v35 = vpack.c.b16 %v34, %v33
  %v40 = vunpack.c.l.b16 %v18
  %v41 = vunpack.c.l.b16 %v19
  %v42 = vunpack.c.l.b16 %v20
  %v43 = vunpack.c.l.b16 %v21
  %v44 = vpack.c.b16 %v41, %v40
  %v45 = vpack.c.b16 %v43, %v42
  %vm48 = vcmask 261120
  %v50 = vsel %vm48, %v35, 0
  %52 = vmatprep.subr.bf16.mxu0 0
  %53 = vmatpush1.bf16.msra.mxu0 %v44
  %54 = vmatprep.subr.bf16.mxu0 0
  %55 = vmatpush1.bf16.msra.mxu0 %v45
  %56 = vmatprep.subr.bf16.mxu0 0
  %57 = vmatpush1.bf16.msra.mxu0 0
  %58 = vmatprep.subr.bf16.mxu0 0
  %59 = vmatpush1.bf16.msra.mxu0 0
  %60 = vmatprep.subr.bf16.mxu0 0
  %61 = vmatpush1.bf16.msra.mxu0 0
  %62 = vmatprep.subr.bf16.mxu0 0
  %63 = vmatpush1.bf16.msra.mxu0 0
  %64 = vmatprep.subr.bf16.mxu0 0
  %65 = vmatpush1.bf16.msra.mxu0 0
  %66 = vmatprep.subr.bf16.mxu0 0
  %67 = vmatpush1.bf16.msra.mxu0 0
  %68 = vmatprep.subr.bf16.mxu0 0
  %69 = vmatpush1.bf16.msra.mxu0 0
  %70 = vmatprep.subr.bf16.mxu0 0
  %71 = vmatpush1.bf16.msra.mxu0 0
  %72 = vmatprep.subr.bf16.mxu0 0
  %73 = vmatpush1.bf16.msra.mxu0 0
  %74 = vmatprep.subr.bf16.mxu0 0
  %75 = vmatpush1.bf16.msra.mxu0 0
  %76 = vmatprep.subr.bf16.mxu0 0
  %77 = vmatpush1.bf16.msra.mxu0 0
  %78 = vmatprep.subr.bf16.mxu0 0
  %79 = vmatpush1.bf16.msra.mxu0 0
  %80 = vmatprep.subr.bf16.mxu0 0
  %81 = vmatpush1.bf16.msra.mxu0 0
  %82 = vmatprep.subr.bf16.mxu0 0
  %83 = vmatpush1.bf16.msra.mxu0 0
  %84 = vmatprep.mubr.bf16.mxu0 0
  %85 = vmatmul.mubr.bf16.gmra.mrb[0].mxu0 %v50
  %v86 = vpop.f32.mrb[0].mxu0
  %v87 = vadd.f32 %v29, %v86
  %v88 = vpop.f32.mrb[0].mxu0
  %v89 = vpop.f32.mrb[0].mxu0
  %v90 = vadd.f32 %v29, %v89
  %v91 = vpop.f32.mrb[0].mxu0
  %92 = vdwg.mxu0
  %v93 = vld [vmem:[%s3] sm:$0xff]
  %v94 = vld [vmem:[%s3 + $0x8] sm:$0xff]
  %v95 = vadd.f32 %v87, %v93
  %v96 = vadd.f32 %v90, %v94
  %97 = vst.msk [vmem:[%s4] sm:$0xff] %vm48, %v95
  %98 = vst.msk [vmem:[%s4 + $0x8] sm:$0xff] %vm48, %v96
  // Predicated region
  $region18: #{mbart_decoder_forward.24} parent=0 // pred_check
    _
  $region19: #{mbart_decoder_forward.24} parent=0 // pred_check_branch
    %100 = sbr.rel (0) target = $region21
  $region20: #{mbart_decoder_forward.24} parent=0 // pred_region
    _
  $region21: #{mbart_decoder_forward.24} parent=0 // pred_fallthru
    _
  // Predicated region
  $region22: #{mbart_decoder_forward.24} parent=0 // pred_check
    _
  $region23: #{mbart_decoder_forward.24} parent=0 // pred_check_branch
    %102 = sbr.rel (0) target = $region25
  $region24: #{mbart_decoder_forward.24} parent=0 // pred_region
    _
  $region25: #{mbart_decoder_forward.24} parent=0 // pred_fallthru
    _

// kernel: mbart_decoder_forward.22
$region0: #{mbart_decoder_forward.22}
  #allocation0 [shape = 'u32[]', space=smem, size = 0x4, offset = 0x4, fixed_abs, tag = 'smem constant byte address 0x4 - core index']
  #allocation1 [shape = 'u32[144,128]{1,0:T(1,128)}', space=vmem, size = 0x12000, scoped, tag = 'internal scratch']
  #allocation2 [shape = 'bf16[16,32]{1,0:T(16,128)(2,1)}', space=vmem, size = 0x1000, scoped, tag = 'scratch operand']
  %s0 = inlined_call_operand.vmem [shape: f32[16,32], index: 0, kind: input, shape index: {}]
  %s1 = inlined_call_operand.vmem [shape: f32[1,32], index: 1, kind: input, shape index: {}]
  %s2 = inlined_call_operand.vmem [shape: f32[1,32], index: 2, kind: input, shape index: {}]
  %s3 = inlined_call_operand.vmem [shape: bf16[32,96], index: 3, kind: input, shape index: {}]
  %s4 = inlined_call_operand.vmem [shape: f32[1,96], index: 4, kind: input, shape index: {}]
  %s5 = inlined_call_operand.vmem [shape: bf16[16,96], index: 5, kind: output, shape index: {}]
  %s6 = sld [smem:[#allocation0]]
  $region34: #{mbart_decoder_forward.22} parent=0
    _
  %s8 = ssub.s32 1, %s6
  %s9 = scalar_select 0, %s8, %s6
  // Predicated region
  $region2: #{mbart_decoder_forward.22} parent=0 // pred_check
    _
  $region3: #{mbart_decoder_forward.22} parent=0 // pred_check_branch
    %11 = sbr.rel (0) target = $region5
  $region4: #{mbart_decoder_forward.22} parent=0 // pred_region
    _
  $region5: #{mbart_decoder_forward.22} parent=0 // pred_fallthru
    _
  // Predicated region
  $region6: #{mbart_decoder_forward.22} parent=0 // pred_check
    _
  $region7: #{mbart_decoder_forward.22} parent=0 // pred_check_branch
    %13 = sbr.rel (0) target = $region9
  $region8: #{mbart_decoder_forward.22} parent=0 // pred_region
    _
  $region9: #{mbart_decoder_forward.22} parent=0 // pred_fallthru
    _
  // Predicated region
  $region10: #{mbart_decoder_forward.22} parent=0 // pred_check
    _
  $region11: #{mbart_decoder_forward.22} parent=0 // pred_check_branch
    %15 = sbr.rel (0) target = $region13
  $region12: #{mbart_decoder_forward.22} parent=0 // pred_region
    _
  $region13: #{mbart_decoder_forward.22} parent=0 // pred_fallthru
    _
  // Predicated region
  $region14: #{mbart_decoder_forward.22} parent=0 // pred_check
    _
  $region15: #{mbart_decoder_forward.22} parent=0 // pred_check_branch
    %17 = sbr.rel (0) target = $region17
  $region16: #{mbart_decoder_forward.22} parent=0 // pred_region
    _
  $region17: #{mbart_decoder_forward.22} parent=0 // pred_fallthru
    _
  // Predicated region
  $region18: #{mbart_decoder_forward.22} parent=0 // pred_check
    _
  $region19: #{mbart_decoder_forward.22} parent=0 // pred_check_branch
    %19 = sbr.rel (0) target = $region21
  $region20: #{mbart_decoder_forward.22} parent=0 // pred_region
    _
  $region21: #{mbart_decoder_forward.22} parent=0 // pred_fallthru
    _
  %p21 = scmp.eq.s32.totalorder 0, 0
  // Predicated region
  $region22: #{mbart_decoder_forward.22} parent=0 // pred_check
    %p22 = pneg %p21
  $region23: #{mbart_decoder_forward.22} parent=0 // pred_check_branch
    %24 = sbr.rel (%p22) target = $region25
  $region24: #{mbart_decoder_forward.22} parent=0 // pred_region
    %v25 = vld [vmem:[%s0] sm:$0xff]
    %v26 = vld [vmem:[%s0 + $0x8] sm:$0xff]
    %vm27 = vcmask 261120
    %v28 = vsel %vm27, %v25, 0.0
    %29 = vadd.xlane.f32.xlu0 %v28
    %v30 = vpop.xlane.xlu0 %29
    %v31 = vsel %vm27, %v26, 0.0
    %32 = vadd.xlane.f32.xlu0 %v31
    %v33 = vpop.xlane.xlu0 %32
    %v34 = vrcp.pop 32.0
    %v35 = vmul.f32 %v30, %v34
    %v36 = vmul.f32 %v33, %v34
    %v37 = vsub.f32 %v25, %v35
    %v38 = vsub.f32 %v26, %v36
    %v39 = vmul.f32 %v37, %v37
    %v40 = vmul.f32 %v38, %v38
    %v41 = vsel %vm27, %v39, 0.0
    %42 = vadd.xlane.f32.xlu0 %v41
    %v43 = vpop.xlane.xlu0 %42
    %v44 = vsel %vm27, %v40, 0.0
    %45 = vadd.xlane.f32.xlu0 %v44
    %v46 = vpop.xlane.xlu0 %45
    %v47 = vmul.f32 %v43, %v34
    %v48 = vmul.f32 %v46, %v34
    %v49 = vadd.f32 %v47, 1e-05
    %v50 = vadd.f32 %v48, 1e-05
    %v51 = vrsqrt.pop %v49
    %v52 = vrsqrt.pop %v50
    %v53 = vmul.f32 %v37, %v51
    %v54 = vmul.f32 %v38, %v52
    %v55 = vld [vmem:[%s1] sm:$0x1]
    %v57 = vlaneseq
    %v58 = vshrl.u32 %v57, 7
    %v59 = vsub.s32 0, %v58
    %v60 = vrot.slane %v55, %v59
    %v62 = vmul.f32 %v53, %v60
    %v63 = vmul.f32 %v54, %v60
    %v64 = vld [vmem:[%s2] sm:$0x1]
    %v66 = vlaneseq
    %v67 = vshrl.u32 %v66, 7
    %v68 = vsub.s32 0, %v67
    %v69 = vrot.slane %v64, %v68
    %v71 = vadd.f32 %v62, %v69
    %v72 = vadd.f32 %v63, %v69
    %v73 = vpack.c.bf16 %v72, %v71
    %74 = vst.msk [vmem:[#allocation2] sm:$0xff] %vm27, %v73
  $region25: #{mbart_decoder_forward.22} parent=0 // pred_fallthru
    _
  %v75 = vld [vmem:[%s3] sm:$0xf]
  %v76 = vld [vmem:[%s3 + $0x4] sm:$0xf]
  %v77 = vld [vmem:[%s3 + $0x8] sm:$0xf]
  %v78 = vld [vmem:[%s3 + $0xc] sm:$0xf]
  %v79 = vld [vmem:[#allocation2] sm:$0xff]
  %v80 = vld [vmem:[%s4] sm:$0x1]
  %v82 = vlaneseq
  %v83 = vshrl.u32 %v82, 7
  %v84 = vsub.s32 0, %v83
  %v85 = vrot.slane %v80, %v84
  %v91 = vunpack.c.l.b16 %v75
  %v92 = vunpack.c.l.b16 %v76
  %v93 = vunpack.c.l.b16 %v77
  %v94 = vunpack.c.l.b16 %v78
  %v95 = vpack.c.b16 %v92, %v91
  %v96 = vpack.c.b16 %v94, %v93
  %vm99 = vcmask 261120
  %v101 = vsel %vm99, %v79, 0
  %103 = vmatprep.subr.bf16.mxu0 0
  %104 = vmatpush1.bf16.msra.mxu0 %v95
  %105 = vmatprep.subr.bf16.mxu0 0
  %106 = vmatpush1.bf16.msra.mxu0 %v96
  %107 = vmatprep.subr.bf16.mxu0 0
  %108 = vmatpush1.bf16.msra.mxu0 0
  %109 = vmatprep.subr.bf16.mxu0 0
  %110 = vmatpush1.bf16.msra.mxu0 0
  %111 = vmatprep.subr.bf16.mxu0 0
  %112 = vmatpush1.bf16.msra.mxu0 0
  %113 = vmatprep.subr.bf16.mxu0 0
  %114 = vmatpush1.bf16.msra.mxu0 0
  %115 = vmatprep.subr.bf16.mxu0 0
  %116 = vmatpush1.bf16.msra.mxu0 0
  %117 = vmatprep.subr.bf16.mxu0 0
  %118 = vmatpush1.bf16.msra.mxu0 0
  %119 = vmatprep.subr.bf16.mxu0 0
  %120 = vmatpush1.bf16.msra.mxu0 0
  %121 = vmatprep.subr.bf16.mxu0 0
  %122 = vmatpush1.bf16.msra.mxu0 0
  %123 = vmatprep.subr.bf16.mxu0 0
  %124 = vmatpush1.bf16.msra.mxu0 0
  %125 = vmatprep.subr.bf16.mxu0 0
  %126 = vmatpush1.bf16.msra.mxu0 0
  %127 = vmatprep.subr.bf16.mxu0 0
  %128 = vmatpush1.bf16.msra.mxu0 0
  %129 = vmatprep.subr.bf16.mxu0 0
  %130 = vmatpush1.bf16.msra.mxu0 0
  %131 = vmatprep.subr.bf16.mxu0 0
  %132 = vmatpush1.bf16.msra.mxu0 0
  %133 = vmatprep.subr.bf16.mxu0 0
  %134 = vmatpush1.bf16.msra.mxu0 0
  %135 = vmatprep.mubr.bf16.mxu0 0
  %136 = vmatmul.mubr.bf16.gmra.mrb[0].mxu0 %v101
  %v137 = vpop.f32.mrb[0].mxu0
  %v138 = vadd.f32 %v85, %v137
  %v139 = vpop.f32.mrb[0].mxu0
  %v140 = vpop.f32.mrb[0].mxu0
  %v141 = vadd.f32 %v85, %v140
  %v142 = vpop.f32.mrb[0].mxu0
  %143 = vdwg.mxu0
  %v144 = vpack.c.bf16 %v141, %v138
  %v146 = vunpack.c.l.b16 %v144
  %v147 = vunpack.c.h.b16 %v144
  %v148 = vpack.c.b16 %v146, %v146
  %v149 = vpack.c.b16 %v147, %v147
  %vm152 = vcmask 781312
  %153 = vst.msk [vmem:[%s5] sm:$0xf] %vm152, %v148
  %154 = vst.msk [vmem:[%s5 + $0x4] sm:$0xf] %vm152, %v149
  // Predicated region
  $region26: #{mbart_decoder_forward.22} parent=0 // pred_check
    _
  $region27: #{mbart_decoder_forward.22} parent=0 // pred_check_branch
    %156 = sbr.rel (0) target = $region29
  $region28: #{mbart_decoder_forward.22} parent=0 // pred_region
    _
  $region29: #{mbart_decoder_forward.22} parent=0 // pred_fallthru
    _
  // Predicated region
  $region30: #{mbart_decoder_forward.22} parent=0 // pred_check
    _
  $region31: #{mbart_decoder_forward.22} parent=0 // pred_check_branch
    %158 = sbr.rel (0) target = $region33
  $region32: #{mbart_decoder_forward.22} parent=0 // pred_region
    _
  $region33: #{mbart_decoder_forward.22} parent=0 // pred_fallthru
    _

// kernel: mbart_decoder_forward.23
$region0: #{mbart_decoder_forward.23}
  #allocation0 [shape = 'u32[]', space=smem, size = 0x4, offset = 0x4, fixed_abs, tag = 'smem constant byte address 0x4 - core index']
  #allocation1 [shape = 'u32[144,128]{1,0:T(1,128)}', space=vmem, size = 0x12000, scoped, tag = 'internal scratch']
  %s0 = inlined_call_operand.vmem [shape: bf16[2,8,96], index: 0, kind: input, shape index: {}, may-alias: {0,1}]
  %s1 = inlined_call_operand.vmem [shape: bf16[2,8,96], index: 1, kind: input, shape index: {}, may-alias: {0,1}]
  %s2 = inlined_call_operand.vmem [shape: f32[2,1,8], index: 2, kind: input, shape index: {}]
  %s3 = inlined_call_operand.vmem [shape: bf16[2,8,32], index: 3, kind: output, shape index: {}]
  %s4 = sld [smem:[#allocation0]]
  $region45: #{mbart_decoder_forward.23} parent=0
    _
  %s6 = ssub.s32 1, %s4
  %s7 = scalar_select 0, %s6, %s4
  loop: start=0, step=1, limit=4
  $region2: #{mbart_decoder_forward.23} parent=0 // loop_pre_header
    _
  $region3: #{mbart_decoder_forward.23} parent=0 // loop_header
    %s9 = sphi 0, %s13
    %p10 = scmp.ge.s32.totalorder %s9, 4
    %s16 = sphi 0, %s28
    %s17 = sphi 0, %s24
    %s18 = sphi 0, %s16
    %s19 = sphi 0, %s17
    %s20 = sphi 0, %s18
    %s21 = sphi 0, %s19
    %s33 = sphi 0, %s35
    %s36 = sphi 0, %s33
    %s37 = sphi 0, %s36
    %s53 = sphi 0, %s37
    %s59 = sphi 0, %s61
    %s62 = sphi 0, %s59
    %s63 = sphi 0, %s62
    %s79 = sphi 0, %s63
    %s85 = sphi 0, %s87
    %s88 = sphi 0, %s85
    %s89 = sphi 0, %s88
    %s105 = sphi 0, %s89
    %s113 = sphi 0, %s115
    %s116 = sphi 0, %s113
    %s117 = sphi 0, %s116
    %s133 = sphi 0, %s117
  $region4: #{mbart_decoder_forward.23} parent=0 // loop_header_branch
    %12 = sbr.rel (%p10) target = $region8
  $region5: #{mbart_decoder_forward.23} parent=0 // loop_body
    %s14 = ssub.s32 %s9, 1
    %s15 = ssub.s32 %s9, 2
    %s22 = sadd.s32 1, %s17
    %p23 = scmp.ge.s32.totalorder %s22, 1
    %s24 = scalar_select %p23, 0, %s22
    %s25 = sadd.s32 1, %s16
    %s26 = scalar_select %p23, %s25, %s16
    %p27 = scmp.ge.s32.totalorder %s26, 2
    %s28 = scalar_select %p27, 0, %s26
    %s29 = ssub.s32 %s16, %s28
    %s30 = ssub.s32 %s17, %s24
    %s31 = sor.u32 %s29, %s30
    %p32 = scmp.eq.s32.totalorder %s31, 0
    %s34 = sadd.s32 %s33, 1
    %s35 = scalar_select %p32, %s33, %s34
    %p38 = pneg %p32
    %p39 = scmp.eq.s32.totalorder %s9, 1
    %p40 = por %p38, %p39
    %p41 = scmp.ne.s32.totalorder %s33, %s36
    %p42 = scmp.eq.s32.totalorder %s9, 0
    %p43 = por %p41, %p42
    %p44 = scmp.ne.s32.totalorder %s33, %s36
    %p45 = scmp.eq.s32.totalorder %s14, 1
    %p46 = por %p44, %p45
    %p47 = scmp.ne.s32.totalorder %s36, %s37
    %p48 = scmp.eq.s32.totalorder %s14, 0
    %p49 = por %p47, %p48
    %p50 = scmp.ne.s32.totalorder %s36, %s37
    %p51 = scmp.eq.s32.totalorder %s15, 1
    %p52 = por %p50, %p51
    %p54 = scmp.ne.s32.totalorder %s37, %s53
    %p55 = scmp.eq.s32.totalorder %s15, 0
    %p56 = por %p54, %p55
    %s57 = ssub.s32 %s16, %s28
    %p58 = scmp.eq.s32.totalorder %s57, 0
    %s60 = sadd.s32 %s59, 1
    %s61 = scalar_select %p58, %s59, %s60
    %p64 = pneg %p58
    %p65 = scmp.eq.s32.totalorder %s9, 1
    %p66 = por %p64, %p65
    %p67 = scmp.ne.s32.totalorder %s59, %s62
    %p68 = scmp.eq.s32.totalorder %s9, 0
    %p69 = por %p67, %p68
    %p70 = scmp.ne.s32.totalorder %s59, %s62
    %p71 = scmp.eq.s32.totalorder %s14, 1
    %p72 = por %p70, %p71
    %p73 = scmp.ne.s32.totalorder %s62, %s63
    %p74 = scmp.eq.s32.totalorder %s14, 0
    %p75 = por %p73, %p74
    %p76 = scmp.ne.s32.totalorder %s62, %s63
    %p77 = scmp.eq.s32.totalorder %s15, 1
    %p78 = por %p76, %p77
    %p80 = scmp.ne.s32.totalorder %s63, %s79
    %p81 = scmp.eq.s32.totalorder %s15, 0
    %p82 = por %p80, %p81
    %s83 = ssub.s32 %s16, %s28
    %p84 = scmp.eq.s32.totalorder %s83, 0
    %s86 = sadd.s32 %s85, 1
    %s87 = scalar_select %p84, %s85, %s86
    %p90 = pneg %p84
    %p91 = scmp.eq.s32.totalorder %s9, 1
    %p92 = por %p90, %p91
    %p93 = scmp.ne.s32.totalorder %s85, %s88
    %p94 = scmp.eq.s32.totalorder %s9, 0
    %p95 = por %p93, %p94
    %p96 = scmp.ne.s32.totalorder %s85, %s88
    %p97 = scmp.eq.s32.totalorder %s14, 1
    %p98 = por %p96, %p97
    %p99 = scmp.ne.s32.totalorder %s88, %s89
    %p100 = scmp.eq.s32.totalorder %s14, 0
    %p101 = por %p99, %p100
    %p102 = scmp.ne.s32.totalorder %s88, %s89
    %p103 = scmp.eq.s32.totalorder %s15, 1
    %p104 = por %p102, %p103
    %p106 = scmp.ne.s32.totalorder %s89, %s105
    %p107 = scmp.eq.s32.totalorder %s15, 0
    %p108 = por %p106, %p107
    %s109 = ssub.s32 %s16, %s28
    %s110 = ssub.s32 %s17, %s24
    %s111 = sor.u32 %s109, %s110
    %p112 = scmp.eq.s32.totalorder %s111, 0
    %s114 = sadd.s32 %s113, 1
    %s115 = scalar_select %p112, %s113, %s114
    %p118 = pneg %p112
    %p119 = scmp.eq.s32.totalorder %s9, 1
    %p120 = por %p118, %p119
    %p121 = scmp.ne.s32.totalorder %s113, %s116
    %p122 = scmp.eq.s32.totalorder %s9, 0
    %p123 = por %p121, %p122
    %p124 = scmp.ne.s32.totalorder %s113, %s116
    %p125 = scmp.eq.s32.totalorder %s14, 1
    %p126 = por %p124, %p125
    %p127 = scmp.ne.s32.totalorder %s116, %s117
    %p128 = scmp.eq.s32.totalorder %s14, 0
    %p129 = por %p127, %p128
    %p130 = scmp.ne.s32.totalorder %s116, %s117
    %p131 = scmp.eq.s32.totalorder %s15, 1
    %p132 = por %p130, %p131
    %p134 = scmp.ne.s32.totalorder %s117, %s133
    %p135 = scmp.eq.s32.totalorder %s15, 0
    %p136 = por %p134, %p135
    %p137 = scmp.le.s32.totalorder 1, %s9
    %p138 = scmp.lt.s32.totalorder %s9, 3
    %p139 = pnand %p137, %p138
    %p140 = pneg %p139
    // Predicated region
    $region9: #{mbart_decoder_forward.23} parent=5 // pred_check
      _
    $region10: #{mbart_decoder_forward.23} parent=5 // pred_check_branch
      %142 = sbr.rel (%p139) target = $region12
    $region11: #{mbart_decoder_forward.23} parent=5 // pred_region
      %s143 = ssub.s32 %s9, 1
    $region12: #{mbart_decoder_forward.23} parent=5 // pred_fallthru
      _
    %p144 = scmp.lt.s32.totalorder %s9, 2
    // Predicated region
    $region13: #{mbart_decoder_forward.23} parent=5 // pred_check
      %p145 = pneg %p144
    $region14: #{mbart_decoder_forward.23} parent=5 // pred_check_branch
      %147 = sbr.rel (%p145) target = $region16
    $region15: #{mbart_decoder_forward.23} parent=5 // pred_region
      // Predicated region
      $region17: #{mbart_decoder_forward.23} parent=15 // pred_check
        %p148 = pneg %p43
      $region18: #{mbart_decoder_forward.23} parent=15 // pred_check_branch
        %150 = sbr.rel (%p148) target = $region20
      $region19: #{mbart_decoder_forward.23} parent=15 // pred_region
        %p151 = scmp.lt.s32.totalorder %s16, 1
        %s152 = scalar_select %p151, %s16, 1
        %p153 = scmp.lt.s32.totalorder %s17, 0
        %s154 = scalar_select %p153, %s17, 0
        %s155 = sadd.s32 %s154, %s152
        %s156 = smul.addr %s155, 4
        %s157 = scalar_lea.vmem %s0, %s156
      $region20: #{mbart_decoder_forward.23} parent=15 // pred_fallthru
        _
      // Predicated region
      $region21: #{mbart_decoder_forward.23} parent=15 // pred_check
        %p158 = pneg %p69
      $region22: #{mbart_decoder_forward.23} parent=15 // pred_check_branch
        %160 = sbr.rel (%p158) target = $region24
      $region23: #{mbart_decoder_forward.23} parent=15 // pred_region
        %p161 = scmp.lt.s32.totalorder %s16, 1
        %s162 = scalar_select %p161, %s16, 1
        %s163 = smul.addr %s162, 4
        %s164 = scalar_lea.vmem %s1, %s163
      $region24: #{mbart_decoder_forward.23} parent=15 // pred_fallthru
        _
      // Predicated region
      $region25: #{mbart_decoder_forward.23} parent=15 // pred_check
        %p165 = pneg %p95
      $region26: #{mbart_decoder_forward.23} parent=15 // pred_check_branch
        %167 = sbr.rel (%p165) target = $region28
      $region27: #{mbart_decoder_forward.23} parent=15 // pred_region
        %p168 = scmp.lt.s32.totalorder %s16, 1
        %s169 = scalar_select %p168, %s16, 1
        %s170 = scalar_lea.vmem %s2, %s169
      $region28: #{mbart_decoder_forward.23} parent=15 // pred_fallthru
        _
    $region16: #{mbart_decoder_forward.23} parent=5 // pred_fallthru
      _
    %p171 = scmp.le.s32.totalorder 1, %s9
    %p172 = scmp.lt.s32.totalorder %s9, 3
    %p173 = pnand %p171, %p172
    %p174 = pneg %p173
    // Predicated region
    $region29: #{mbart_decoder_forward.23} parent=5 // pred_check
      _
    $region30: #{mbart_decoder_forward.23} parent=5 // pred_check_branch
      %176 = sbr.rel (%p173) target = $region32
    $region31: #{mbart_decoder_forward.23} parent=5 // pred_region
      %s177 = ssub.s32 %s9, 1
      %p178 = scmp.lt.s32.totalorder %s18, 1
      %s179 = scalar_select %p178, %s18, 1
      %p180 = scmp.lt.s32.totalorder %s19, 0
      %s181 = scalar_select %p180, %s19, 0
      %s182 = sadd.s32 %s181, %s179
      %s183 = smul.addr %s182, 4
      %s184 = scalar_lea.vmem %s0, %s183
      %p185 = pneg %p49
      %p186 = pneg %p46
      %p187 = scmp.lt.s32.totalorder %s18, 1
      %s188 = scalar_select %p187, %s18, 1
      %s189 = smul.addr %s188, 4
      %s190 = scalar_lea.vmem %s1, %s189
      %p191 = pneg %p75
      %p192 = pneg %p72
      %p193 = scmp.lt.s32.totalorder %s18, 1
      %s194 = scalar_select %p193, %s18, 1
      %s195 = scalar_lea.vmem %s2, %s194
      %p196 = pneg %p101
      %p197 = pneg %p98
      %p198 = pneg %p129
      %p199 = pneg %p126
      %p200 = scmp.lt.s32.totalorder %s18, 1
      %s201 = scalar_select %p200, %s18, 1
      %p202 = scmp.lt.s32.totalorder %s19, 0
      %s203 = scalar_select %p202, %s19, 0
      %s204 = sadd.s32 %s203, %s201
      %s205 = smul.addr %s204, 4
      %s206 = scalar_lea.vmem %s3, %s205
      %p207 = scmp.lt.s32.totalorder %s18, 1
      %s208 = scalar_select %p207, %s18, 1
      %p209 = scmp.lt.s32.totalorder %s19, 0
      %s210 = scalar_select %p209, %s19, 0
      %s211 = sadd.s32 %s210, %s208
      %s212 = smul.addr %s211, 4
      %s213 = scalar_lea.vmem %s0, %s212
      %p214 = scmp.lt.s32.totalorder %s18, 1
      %s215 = scalar_select %p214, %s18, 1
      %s216 = smul.addr %s215, 4
      %s217 = scalar_lea.vmem %s1, %s216
      %p218 = scmp.lt.s32.totalorder %s18, 1
      %s219 = scalar_select %p218, %s18, 1
      %s220 = scalar_lea.vmem %s2, %s219
      %p221 = scmp.lt.s32.totalorder %s18, 1
      %s222 = scalar_select %p221, %s18, 1
      %p223 = scmp.lt.s32.totalorder %s19, 0
      %s224 = scalar_select %p223, %s19, 0
      %s225 = sadd.s32 %s224, %s222
      %s226 = smul.addr %s225, 4
      %s227 = scalar_lea.vmem %s3, %s226
      %s229 = smul.u32 %s19, 8
      %v230 = vlaneseq
      %v231 = vshrl.u32 %v230, 7
      %v232 = vstv %s229
      %v233 = vadd.s32 %v232, %v231
      %v234 = vlaneseq
      %v235 = vand.u32 %v234, 127
      %vm236 = vcmp.le.s32.totalorder %v235, %v233
      %v237 = vld [vmem:[%s220] sm:$0x1]
      %vm238 = vcmp.gt.f32.partialorder %v237, 0.5
      %v239 = vsel %vm238, 1, 0
      %v240 = vlaneseq
      %v241 = vshrl.u32 %v240, 7
      %v242 = vsub.s32 0, %v241
      %v243 = vrot.slane %v239, %v242
      %vm244 = vcmp.eq.s32.totalorder %v243, 1
      %vm245 = vmand %vm236, %vm244
      %v246 = vsel %vm245, 0.0, -1e+09
      %v247 = vld [vmem:[%s217] sm:$0xf]
      %v248 = vld [vmem:[%s213] sm:$0xf]
      %v250 = vunpack.c.l.b16 %v247
      %v251 = vpack.c.b16 %v250, %v250
      %252 = vrot.lane.b32.xlu0 %v251, 96
      %v253 = vpop.permute.xlu0 %252
      %vm254 = vcmask 64512
      %v256 = vsel %vm254, %v248, 0
      %v259 = vsel %vm254, %v253, 0
      %261 = vmatprep.subr.bf16.mxu0 0
      %262 = vmatpush1.bf16.xpose.msra.mxu0 %v259
      %263 = vmatprep.subr.bf16.mxu0 0
      %264 = vmatpush1.bf16.xpose.msra.mxu0 0
      %265 = vmatprep.subr.bf16.mxu0 0
      %266 = vmatpush1.bf16.xpose.msra.mxu0 0
      %267 = vmatprep.subr.bf16.mxu0 0
      %268 = vmatpush1.bf16.xpose.msra.mxu0 0
      %269 = vmatprep.subr.bf16.mxu0 0
      %270 = vmatpush1.bf16.xpose.msra.mxu0 0
      %271 = vmatprep.subr.bf16.mxu0 0
      %272 = vmatpush1.bf16.xpose.msra.mxu0 0
      %273 = vmatprep.subr.bf16.mxu0 0
      %274 = vmatpush1.bf16.xpose.msra.mxu0 0
      %275 = vmatprep.subr.bf16.mxu0 0
      %276 = vmatpush1.bf16.xpose.msra.mxu0 0
      %277 = vmatprep.subr.bf16.mxu0 0
      %278 = vmatpush1.bf16.xpose.msra.mxu0 0
      %279 = vmatprep.subr.bf16.mxu0 0
      %280 = vmatpush1.bf16.xpose.msra.mxu0 0
      %281 = vmatprep.subr.bf16.mxu0 0
      %282 = vmatpush1.bf16.xpose.msra.mxu0 0
      %283 = vmatprep.subr.bf16.mxu0 0
      %284 = vmatpush1.bf16.xpose.msra.mxu0 0
      %285 = vmatprep.subr.bf16.mxu0 0
      %286 = vmatpush1.bf16.xpose.msra.mxu0 0
      %287 = vmatprep.subr.bf16.mxu0 0
      %288 = vmatpush1.bf16.xpose.msra.mxu0 0
      %289 = vmatprep.subr.bf16.mxu0 0
      %290 = vmatpush1.bf16.xpose.msra.mxu0 0
      %291 = vmatprep.subr.bf16.mxu0 0
      %292 = vmatpush1.bf16.xpose.msra.mxu0 0
      %293 = vmatprep.mubr.bf16.mxu0 0
      %294 = vmatmul.mubr.bf16.gmra.mrb[0].mxu0 %v256
      %v295 = vpop.f32.mrb[0].mxu0
      %v296 = vadd.f32 0.0, %v295
      %v297 = vpop.f32.mrb[0].mxu0
      %v298 = vpop.f32.mrb[0].mxu0
      %v299 = vpop.f32.mrb[0].mxu0
      %300 = vdwg.mxu0
      %v301 = vmul.f32 %v296, 0.35355338
      %v302 = vadd.f32 %v301, %v246
      %v303 = vsel %vm254, %v302, -inf
      %304 = vmax.xlane.f32.xlu0 %v303
      %v305 = vpop.xlane.xlu0 %304
      %v306 = vsub.f32 %v302, %v305
      %v307 = vmul.f32 %v306, 1.442695
      %v308 = vpow.pop %v307
      %v309 = vsel %vm254, %v308, 0.0
      %310 = vadd.xlane.f32.xlu0 %v309
      %v311 = vpop.xlane.xlu0 %310
      %v312 = vpack.c.bf16 %v308, %v308
      %313 = vrot.lane.b32.xlu0 %v251, 64
      %v314 = vpop.permute.xlu0 %313
      %v316 = vsel %vm254, %v312, 0
      %vm318 = vcmask 1043456
      %v320 = vsel %vm318, %v314, 0
      %322 = vmatprep.subr.bf16.mxu0 0
      %323 = vmatpush1.bf16.msra.mxu0 %v320
      %324 = vmatprep.subr.bf16.mxu0 0
      %325 = vmatpush1.bf16.msra.mxu0 0
      %326 = vmatprep.subr.bf16.mxu0 0
      %327 = vmatpush1.bf16.msra.mxu0 0
      %328 = vmatprep.subr.bf16.mxu0 0
      %329 = vmatpush1.bf16.msra.mxu0 0
      %330 = vmatprep.subr.bf16.mxu0 0
      %331 = vmatpush1.bf16.msra.mxu0 0
      %332 = vmatprep.subr.bf16.mxu0 0
      %333 = vmatpush1.bf16.msra.mxu0 0
      %334 = vmatprep.subr.bf16.mxu0 0
      %335 = vmatpush1.bf16.msra.mxu0 0
      %336 = vmatprep.subr.bf16.mxu0 0
      %337 = vmatpush1.bf16.msra.mxu0 0
      %338 = vmatprep.subr.bf16.mxu0 0
      %339 = vmatpush1.bf16.msra.mxu0 0
      %340 = vmatprep.subr.bf16.mxu0 0
      %341 = vmatpush1.bf16.msra.mxu0 0
      %342 = vmatprep.subr.bf16.mxu0 0
      %343 = vmatpush1.bf16.msra.mxu0 0
      %344 = vmatprep.subr.bf16.mxu0 0
      %345 = vmatpush1.bf16.msra.mxu0 0
      %346 = vmatprep.subr.bf16.mxu0 0
      %347 = vmatpush1.bf16.msra.mxu0 0
      %348 = vmatprep.subr.bf16.mxu0 0
      %349 = vmatpush1.bf16.msra.mxu0 0
      %350 = vmatprep.subr.bf16.mxu0 0
      %351 = vmatpush1.bf16.msra.mxu0 0
      %352 = vmatprep.subr.bf16.mxu0 0
      %353 = vmatpush1.bf16.msra.mxu0 0
      %354 = vmatprep.mubr.bf16.mxu0 0
      %355 = vmatmul.mubr.bf16.gmra.mrb[0].mxu0 %v316
      %v356 = vpop.f32.mrb[0].mxu0
      %v357 = vadd.f32 0.0, %v356
      %v358 = vpop.f32.mrb[0].mxu0
      %v359 = vpop.f32.mrb[0].mxu0
      %v360 = vpop.f32.mrb[0].mxu0
      %361 = vdwg.mxu0
      %v362 = vrcp.pop %v311
      %v363 = vmul.f32 %v357, %v362
      %v365 = vunpack.c.l.b16 %v248
      %v366 = vpack.c.b16 %v365, %v365
      %367 = vrot.lane.b32.xlu0 %v366, 120
      %v368 = vpop.permute.xlu0 %367
      %369 = vrot.lane.b32.xlu0 %v251, 88
      %v370 = vpop.permute.xlu0 %369
      %v372 = vsel %vm254, %v368, 0
      %v375 = vsel %vm254, %v370, 0
      %377 = vmatprep.subr.bf16.mxu0 0
      %378 = vmatpush1.bf16.xpose.msra.mxu0 %v375
      %379 = vmatprep.subr.bf16.mxu0 0
      %380 = vmatpush1.bf16.xpose.msra.mxu0 0
      %381 = vmatprep.subr.bf16.mxu0 0
      %382 = vmatpush1.bf16.xpose.msra.mxu0 0
      %383 = vmatprep.subr.bf16.mxu0 0
      %384 = vmatpush1.bf16.xpose.msra.mxu0 0
      %385 = vmatprep.subr.bf16.mxu0 0
      %386 = vmatpush1.bf16.xpose.msra.mxu0 0
      %387 = vmatprep.subr.bf16.mxu0 0
      %388 = vmatpush1.bf16.xpose.msra.mxu0 0
      %389 = vmatprep.subr.bf16.mxu0 0
      %390 = vmatpush1.bf16.xpose.msra.mxu0 0
      %391 = vmatprep.subr.bf16.mxu0 0
      %392 = vmatpush1.bf16.xpose.msra.mxu0 0
      %393 = vmatprep.subr.bf16.mxu0 0
      %394 = vmatpush1.bf16.xpose.msra.mxu0 0
      %395 = vmatprep.subr.bf16.mxu0 0
      %396 = vmatpush1.bf16.xpose.msra.mxu0 0
      %397 = vmatprep.subr.bf16.mxu0 0
      %398 = vmatpush1.bf16.xpose.msra.mxu0 0
      %399 = vmatprep.subr.bf16.mxu0 0
      %400 = vmatpush1.bf16.xpose.msra.mxu0 0
      %401 = vmatprep.subr.bf16.mxu0 0
      %402 = vmatpush1.bf16.xpose.msra.mxu0 0
      %403 = vmatprep.subr.bf16.mxu0 0
      %404 = vmatpush1.bf16.xpose.msra.mxu0 0
      %405 = vmatprep.subr.bf16.mxu0 0
      %406 = vmatpush1.bf16.xpose.msra.mxu0 0
      %407 = vmatprep.subr.bf16.mxu0 0
      %408 = vmatpush1.bf16.xpose.msra.mxu0 0
      %409 = vmatprep.mubr.bf16.mxu0 0
      %410 = vmatmul.mubr.bf16.gmra.mrb[0].mxu0 %v372
      %v411 = vpop.f32.mrb[0].mxu0
      %v412 = vadd.f32 0.0, %v411
      %v413 = vpop.f32.mrb[0].mxu0
      %v414 = vpop.f32.mrb[0].mxu0
      %v415 = vpop.f32.mrb[0].mxu0
      %416 = vdwg.mxu0
      %v417 = vmul.f32 %v412, 0.35355338
      %v418 = vadd.f32 %v417, %v246
      %v419 = vsel %vm254, %v418, -inf
      %420 = vmax.xlane.f32.xlu0 %v419
      %v421 = vpop.xlane.xlu0 %420
      %v422 = vsub.f32 %v418, %v421
      %v423 = vmul.f32 %v422, 1.442695
      %v424 = vpow.pop %v423
      %v425 = vsel %vm254, %v424, 0.0
      %426 = vadd.xlane.f32.xlu0 %v425
      %v427 = vpop.xlane.xlu0 %426
      %v428 = vpack.c.bf16 %v424, %v424
      %429 = vrot.lane.b32.xlu0 %v251, 56
      %v430 = vpop.permute.xlu0 %429
      %v432 = vsel %vm254, %v428, 0
      %v435 = vsel %vm318, %v430, 0
      %437 = vmatprep.subr.bf16.mxu0 0
      %438 = vmatpush1.bf16.msra.mxu0 %v435
      %439 = vmatprep.subr.bf16.mxu0 0
      %440 = vmatpush1.bf16.msra.mxu0 0
      %441 = vmatprep.subr.bf16.mxu0 0
      %442 = vmatpush1.bf16.msra.mxu0 0
      %443 = vmatprep.subr.bf16.mxu0 0
      %444 = vmatpush1.bf16.msra.mxu0 0
      %445 = vmatprep.subr.bf16.mxu0 0
      %446 = vmatpush1.bf16.msra.mxu0 0
      %447 = vmatprep.subr.bf16.mxu0 0
      %448 = vmatpush1.bf16.msra.mxu0 0
      %449 = vmatprep.subr.bf16.mxu0 0
      %450 = vmatpush1.bf16.msra.mxu0 0
      %451 = vmatprep.subr.bf16.mxu0 0
      %452 = vmatpush1.bf16.msra.mxu0 0
      %453 = vmatprep.subr.bf16.mxu0 0
      %454 = vmatpush1.bf16.msra.mxu0 0
      %455 = vmatprep.subr.bf16.mxu0 0
      %456 = vmatpush1.bf16.msra.mxu0 0
      %457 = vmatprep.subr.bf16.mxu0 0
      %458 = vmatpush1.bf16.msra.mxu0 0
      %459 = vmatprep.subr.bf16.mxu0 0
      %460 = vmatpush1.bf16.msra.mxu0 0
      %461 = vmatprep.subr.bf16.mxu0 0
      %462 = vmatpush1.bf16.msra.mxu0 0
      %463 = vmatprep.subr.bf16.mxu0 0
      %464 = vmatpush1.bf16.msra.mxu0 0
      %465 = vmatprep.subr.bf16.mxu0 0
      %466 = vmatpush1.bf16.msra.mxu0 0
      %467 = vmatprep.subr.bf16.mxu0 0
      %468 = vmatpush1.bf16.msra.mxu0 0
      %469 = vmatprep.mubr.bf16.mxu0 0
      %470 = vmatmul.mubr.bf16.gmra.mrb[0].mxu0 %v432
      %v471 = vpop.f32.mrb[0].mxu0
      %v472 = vadd.f32 0.0, %v471
      %v473 = vpop.f32.mrb[0].mxu0
      %v474 = vpop.f32.mrb[0].mxu0
      %v475 = vpop.f32.mrb[0].mxu0
      %476 = vdwg.mxu0
      %v477 = vrcp.pop %v427
      %v478 = vmul.f32 %v472, %v477
      %480 = vrot.lane.b32.xlu0 %v478, 8
      %v481 = vpop.permute.xlu0 %480
      %v483 = vsel %vm254, %v363, %v481
      %v484 = vpack.c.bf16 %v483, %v483
      %vm485 = vcmask 125952
      %486 = vst.msk [vmem:[%s227] sm:$0xf] %vm485, %v484
      %v487 = vld [vmem:[%s213] sm:$0xf]
      %v489 = vunpack.c.l.b16 %v487
      %v490 = vpack.c.b16 %v489, %v489
      %491 = vrot.lane.b32.xlu0 %v490, 112
      %v492 = vpop.permute.xlu0 %491
      %493 = vrot.lane.b32.xlu0 %v251, 80
      %v494 = vpop.permute.xlu0 %493
      %v496 = vsel %vm254, %v492, 0
      %v499 = vsel %vm254, %v494, 0
      %501 = vmatprep.subr.bf16.mxu0 0
      %502 = vmatpush1.bf16.xpose.msra.mxu0 %v499
      %503 = vmatprep.subr.bf16.mxu0 0
      %504 = vmatpush1.bf16.xpose.msra.mxu0 0
      %505 = vmatprep.subr.bf16.mxu0 0
      %506 = vmatpush1.bf16.xpose.msra.mxu0 0
      %507 = vmatprep.subr.bf16.mxu0 0
      %508 = vmatpush1.bf16.xpose.msra.mxu0 0
      %509 = vmatprep.subr.bf16.mxu0 0
      %510 = vmatpush1.bf16.xpose.msra.mxu0 0
      %511 = vmatprep.subr.bf16.mxu0 0
      %512 = vmatpush1.bf16.xpose.msra.mxu0 0
      %513 = vmatprep.subr.bf16.mxu0 0
      %514 = vmatpush1.bf16.xpose.msra.mxu0 0
      %515 = vmatprep.subr.bf16.mxu0 0
      %516 = vmatpush1.bf16.xpose.msra.mxu0 0
      %517 = vmatprep.subr.bf16.mxu0 0
      %518 = vmatpush1.bf16.xpose.msra.mxu0 0
      %519 = vmatprep.subr.bf16.mxu0 0
      %520 = vmatpush1.bf16.xpose.msra.mxu0 0
      %521 = vmatprep.subr.bf16.mxu0 0
      %522 = vmatpush1.bf16.xpose.msra.mxu0 0
      %523 = vmatprep.subr.bf16.mxu0 0
      %524 = vmatpush1.bf16.xpose.msra.mxu0 0
      %525 = vmatprep.subr.bf16.mxu0 0
      %526 = vmatpush1.bf16.xpose.msra.mxu0 0
      %527 = vmatprep.subr.bf16.mxu0 0
      %528 = vmatpush1.bf16.xpose.msra.mxu0 0
      %529 = vmatprep.subr.bf16.mxu0 0
      %530 = vmatpush1.bf16.xpose.msra.mxu0 0
      %531 = vmatprep.subr.bf16.mxu0 0
      %532 = vmatpush1.bf16.xpose.msra.mxu0 0
      %533 = vmatprep.mubr.bf16.mxu0 0
      %534 = vmatmul.mubr.bf16.gmra.mrb[0].mxu0 %v496
      %v535 = vpop.f32.mrb[0].mxu0
      %v536 = vadd.f32 0.0, %v535
      %v537 = vpop.f32.mrb[0].mxu0
      %v538 = vpop.f32.mrb[0].mxu0
      %v539 = vpop.f32.mrb[0].mxu0
      %540 = vdwg.mxu0
      %v541 = vmul.f32 %v536, 0.35355338
      %v542 = vadd.f32 %v541, %v246
      %v543 = vsel %vm254, %v542, -inf
      %544 = vmax.xlane.f32.xlu0 %v543
      %v545 = vpop.xlane.xlu0 %544
      %v546 = vsub.f32 %v542, %v545
      %v547 = vmul.f32 %v546, 1.442695
      %v548 = vpow.pop %v547
      %v549 = vsel %vm254, %v548, 0.0
      %550 = vadd.xlane.f32.xlu0 %v549
      %v551 = vpop.xlane.xlu0 %550
      %v552 = vpack.c.bf16 %v548, %v548
      %553 = vrot.lane.b32.xlu0 %v251, 48
      %v554 = vpop.permute.xlu0 %553
      %v556 = vsel %vm254, %v552, 0
      %v559 = vsel %vm318, %v554, 0
      %561 = vmatprep.subr.bf16.mxu0 0
      %562 = vmatpush1.bf16.msra.mxu0 %v559
      %563 = vmatprep.subr.bf16.mxu0 0
      %564 = vmatpush1.bf16.msra.mxu0 0
      %565 = vmatprep.subr.bf16.mxu0 0
      %566 = vmatpush1.bf16.msra.mxu0 0
      %567 = vmatprep.subr.bf16.mxu0 0
      %568 = vmatpush1.bf16.msra.mxu0 0
      %569 = vmatprep.subr.bf16.mxu0 0
      %570 = vmatpush1.bf16.msra.mxu0 0
      %571 = vmatprep.subr.bf16.mxu0 0
      %572 = vmatpush1.bf16.msra.mxu0 0
      %573 = vmatprep.subr.bf16.mxu0 0
      %574 = vmatpush1.bf16.msra.mxu0 0
      %575 = vmatprep.subr.bf16.mxu0 0
      %576 = vmatpush1.bf16.msra.mxu0 0
      %577 = vmatprep.subr.bf16.mxu0 0
      %578 = vmatpush1.bf16.msra.mxu0 0
      %579 = vmatprep.subr.bf16.mxu0 0
      %580 = vmatpush1.bf16.msra.mxu0 0
      %581 = vmatprep.subr.bf16.mxu0 0
      %582 = vmatpush1.bf16.msra.mxu0 0
      %583 = vmatprep.subr.bf16.mxu0 0
      %584 = vmatpush1.bf16.msra.mxu0 0
      %585 = vmatprep.subr.bf16.mxu0 0
      %586 = vmatpush1.bf16.msra.mxu0 0
      %587 = vmatprep.subr.bf16.mxu0 0
      %588 = vmatpush1.bf16.msra.mxu0 0
      %589 = vmatprep.subr.bf16.mxu0 0
      %590 = vmatpush1.bf16.msra.mxu0 0
      %591 = vmatprep.subr.bf16.mxu0 0
      %592 = vmatpush1.bf16.msra.mxu0 0
      %593 = vmatprep.mubr.bf16.mxu0 0
      %594 = vmatmul.mubr.bf16.gmra.mrb[0].mxu0 %v556
      %v595 = vpop.f32.mrb[0].mxu0
      %v596 = vadd.f32 0.0, %v595
      %v597 = vpop.f32.mrb[0].mxu0
      %v598 = vpop.f32.mrb[0].mxu0
      %v599 = vpop.f32.mrb[0].mxu0
      %600 = vdwg.mxu0
      %v601 = vrcp.pop %v551
      %v602 = vmul.f32 %v596, %v601
      %603 = vrot.lane.b32.xlu0 %v490, 104
      %v604 = vpop.permute.xlu0 %603
      %605 = vrot.lane.b32.xlu0 %v251, 72
      %v606 = vpop.permute.xlu0 %605
      %v608 = vsel %vm254, %v604, 0
      %v611 = vsel %vm254, %v606, 0
      %613 = vmatprep.subr.bf16.mxu0 0
      %614 = vmatpush1.bf16.xpose.msra.mxu0 %v611
      %615 = vmatprep.subr.bf16.mxu0 0
      %616 = vmatpush1.bf16.xpose.msra.mxu0 0
      %617 = vmatprep.subr.bf16.mxu0 0
      %618 = vmatpush1.bf16.xpose.msra.mxu0 0
      %619 = vmatprep.subr.bf16.mxu0 0
      %620 = vmatpush1.bf16.xpose.msra.mxu0 0
      %621 = vmatprep.subr.bf16.mxu0 0
      %622 = vmatpush1.bf16.xpose.msra.mxu0 0
      %623 = vmatprep.subr.bf16.mxu0 0
      %624 = vmatpush1.bf16.xpose.msra.mxu0 0
      %625 = vmatprep.subr.bf16.mxu0 0
      %626 = vmatpush1.bf16.xpose.msra.mxu0 0
      %627 = vmatprep.subr.bf16.mxu0 0
      %628 = vmatpush1.bf16.xpose.msra.mxu0 0
      %629 = vmatprep.subr.bf16.mxu0 0
      %630 = vmatpush1.bf16.xpose.msra.mxu0 0
      %631 = vmatprep.subr.bf16.mxu0 0
      %632 = vmatpush1.bf16.xpose.msra.mxu0 0
      %633 = vmatprep.subr.bf16.mxu0 0
      %634 = vmatpush1.bf16.xpose.msra.mxu0 0
      %635 = vmatprep.subr.bf16.mxu0 0
      %636 = vmatpush1.bf16.xpose.msra.mxu0 0
      %637 = vmatprep.subr.bf16.mxu0 0
      %638 = vmatpush1.bf16.xpose.msra.mxu0 0
      %639 = vmatprep.subr.bf16.mxu0 0
      %640 = vmatpush1.bf16.xpose.msra.mxu0 0
      %641 = vmatprep.subr.bf16.mxu0 0
      %642 = vmatpush1.bf16.xpose.msra.mxu0 0
      %643 = vmatprep.subr.bf16.mxu0 0
      %644 = vmatpush1.bf16.xpose.msra.mxu0 0
      %645 = vmatprep.mubr.bf16.mxu0 0
      %646 = vmatmul.mubr.bf16.gmra.mrb[0].mxu0 %v608
      %v647 = vpop.f32.mrb[0].mxu0
      %v648 = vadd.f32 0.0, %v647
      %v649 = vpop.f32.mrb[0].mxu0
      %v650 = vpop.f32.mrb[0].mxu0
      %v651 = vpop.f32.mrb[0].mxu0
      %652 = vdwg.mxu0
      %v653 = vmul.f32 %v648, 0.35355338
      %v654 = vadd.f32 %v653, %v246
      %v655 = vsel %vm254, %v654, -inf
      %656 = vmax.xlane.f32.xlu0 %v655
      %v657 = vpop.xlane.xlu0 %656
      %v658 = vsub.f32 %v654, %v657
      %v659 = vmul.f32 %v658, 1.442695
      %v660 = vpow.pop %v659
      %v661 = vsel %vm254, %v660, 0.0
      %662 = vadd.xlane.f32.xlu0 %v661
      %v663 = vpop.xlane.xlu0 %662
      %v664 = vpack.c.bf16 %v660, %v660
      %665 = vrot.lane.b32.xlu0 %v251, 40
      %v666 = vpop.permute.xlu0 %665
      %v668 = vsel %vm254, %v664, 0
      %v671 = vsel %vm318, %v666, 0
      %673 = vmatprep.subr.bf16.mxu0 0
      %674 = vmatpush1.bf16.msra.mxu0 %v671
      %675 = vmatprep.subr.bf16.mxu0 0
      %676 = vmatpush1.bf16.msra.mxu0 0
      %677 = vmatprep.subr.bf16.mxu0 0
      %678 = vmatpush1.bf16.msra.mxu0 0
      %679 = vmatprep.subr.bf16.mxu0 0
      %680 = vmatpush1.bf16.msra.mxu0 0
      %681 = vmatprep.subr.bf16.mxu0 0
      %682 = vmatpush1.bf16.msra.mxu0 0
      %683 = vmatprep.subr.bf16.mxu0 0
      %684 = vmatpush1.bf16.msra.mxu0 0
      %685 = vmatprep.subr.bf16.mxu0 0
      %686 = vmatpush1.bf16.msra.mxu0 0
      %687 = vmatprep.subr.bf16.mxu0 0
      %688 = vmatpush1.bf16.msra.mxu0 0
      %689 = vmatprep.subr.bf16.mxu0 0
      %690 = vmatpush1.bf16.msra.mxu0 0
      %691 = vmatprep.subr.bf16.mxu0 0
      %692 = vmatpush1.bf16.msra.mxu0 0
      %693 = vmatprep.subr.bf16.mxu0 0
      %694 = vmatpush1.bf16.msra.mxu0 0
      %695 = vmatprep.subr.bf16.mxu0 0
      %696 = vmatpush1.bf16.msra.mxu0 0
      %697 = vmatprep.subr.bf16.mxu0 0
      %698 = vmatpush1.bf16.msra.mxu0 0
      %699 = vmatprep.subr.bf16.mxu0 0
      %700 = vmatpush1.bf16.msra.mxu0 0
      %701 = vmatprep.subr.bf16.mxu0 0
      %702 = vmatpush1.bf16.msra.mxu0 0
      %703 = vmatprep.subr.bf16.mxu0 0
      %704 = vmatpush1.bf16.msra.mxu0 0
      %705 = vmatprep.mubr.bf16.mxu0 0
      %706 = vmatmul.mubr.bf16.gmra.mrb[0].mxu0 %v668
      %v707 = vpop.f32.mrb[0].mxu0
      %v708 = vadd.f32 0.0, %v707
      %v709 = vpop.f32.mrb[0].mxu0
      %v710 = vpop.f32.mrb[0].mxu0
      %v711 = vpop.f32.mrb[0].mxu0
      %712 = vdwg.mxu0
      %v713 = vrcp.pop %v663
      %v714 = vmul.f32 %v708, %v713
      %716 = vrot.lane.b32.xlu0 %v714, 8
      %v717 = vpop.permute.xlu0 %716
      %v719 = vsel %vm254, %v602, %v717
      %v720 = vpack.c.bf16 %v719, %v719
      %v722 = vunpack.c.l.b16 %v720
      %v723 = vpack.c.b16 %v722, %v722
      %724 = vrot.lane.b32.xlu0 %v723, 16
      %v725 = vpop.permute.xlu0 %724
      %vm727 = vcmask 257152
      %728 = vst.msk [vmem:[%s227] sm:$0xf] %vm727, %v725
      %p729 = scmp.lt.s32.totalorder %s18, 1
      %s730 = scalar_select %p729, %s18, 1
      %p731 = scmp.lt.s32.totalorder %s19, 0
      %s732 = scalar_select %p731, %s19, 0
      %s733 = sadd.s32 %s732, %s730
      %s734 = smul.addr %s733, 4
      %s735 = scalar_lea.vmem %s3, %s734
      // Predicated region
      $region33: #{mbart_decoder_forward.23} parent=31 // pred_check
        %p736 = pneg %p126
      $region34: #{mbart_decoder_forward.23} parent=31 // pred_check_branch
        %738 = sbr.rel (%p736) target = $region36
      $region35: #{mbart_decoder_forward.23} parent=31 // pred_region
        _
      $region36: #{mbart_decoder_forward.23} parent=31 // pred_fallthru
        _
    $region32: #{mbart_decoder_forward.23} parent=5 // pred_fallthru
      _
    %p739 = scmp.le.s32.totalorder 2, %s9
    // Predicated region
    $region37: #{mbart_decoder_forward.23} parent=5 // pred_check
      %p740 = pneg %p739
    $region38: #{mbart_decoder_forward.23} parent=5 // pred_check_branch
      %742 = sbr.rel (%p740) target = $region40
    $region39: #{mbart_decoder_forward.23} parent=5 // pred_region
      %s743 = ssub.s32 %s9, 2
      // Predicated region
      $region41: #{mbart_decoder_forward.23} parent=39 // pred_check
        %p744 = pneg %p132
      $region42: #{mbart_decoder_forward.23} parent=39 // pred_check_branch
        %746 = sbr.rel (%p744) target = $region44
      $region43: #{mbart_decoder_forward.23} parent=39 // pred_region
        %p747 = scmp.lt.s32.totalorder %s20, 1
        %s748 = scalar_select %p747, %s20, 1
        %p749 = scmp.lt.s32.totalorder %s21, 0
        %s750 = scalar_select %p749, %s21, 0
        %s751 = sadd.s32 %s750, %s748
        %s752 = smul.addr %s751, 4
        %s753 = scalar_lea.vmem %s3, %s752
      $region44: #{mbart_decoder_forward.23} parent=39 // pred_fallthru
        _
    $region40: #{mbart_decoder_forward.23} parent=5 // pred_fallthru
      _
  $region6: #{mbart_decoder_forward.23} parent=0 // loop_footer
    %s13 = sadd.s32 1, %s9
  $region7: #{mbart_decoder_forward.23} parent=0 // loop_footer_branch
    %8 = sbr.rel target = $region3
  $region8: #{mbart_decoder_forward.23} parent=0 // loop_exit
    _

// kernel: mbart_decoder_forward.26
$region0: #{mbart_decoder_forward.26}
  #allocation0 [shape = 'u32[]', space=smem, size = 0x4, offset = 0x4, fixed_abs, tag = 'smem constant byte address 0x4 - core index']
  #allocation1 [shape = 'u32[144,128]{1,0:T(1,128)}', space=vmem, size = 0x12000, scoped, tag = 'internal scratch']
  %s0 = inlined_call_operand.vmem [shape: bf16[32,32], index: 0, kind: input, shape index: {}]
  %s1 = inlined_call_operand.vmem [shape: bf16[32,64], index: 1, kind: input, shape index: {}]
  %s2 = inlined_call_operand.vmem [shape: f32[1,64], index: 2, kind: input, shape index: {}]
  %s3 = inlined_call_operand.vmem [shape: bf16[32,64], index: 3, kind: output, shape index: {}]
  %s4 = sld [smem:[#allocation0]]
  $region22: #{mbart_decoder_forward.26} parent=0
    _
  %s6 = ssub.s32 1, %s4
  %s7 = scalar_select 0, %s6, %s4
  // Predicated region
  $region2: #{mbart_decoder_forward.26} parent=0 // pred_check
    _
  $region3: #{mbart_decoder_forward.26} parent=0 // pred_check_branch
    %9 = sbr.rel (0) target = $region5
  $region4: #{mbart_decoder_forward.26} parent=0 // pred_region
    _
  $region5: #{mbart_decoder_forward.26} parent=0 // pred_fallthru
    _
  // Predicated region
  $region6: #{mbart_decoder_forward.26} parent=0 // pred_check
    _
  $region7: #{mbart_decoder_forward.26} parent=0 // pred_check_branch
    %11 = sbr.rel (0) target = $region9
  $region8: #{mbart_decoder_forward.26} parent=0 // pred_region
    _
  $region9: #{mbart_decoder_forward.26} parent=0 // pred_fallthru
    _
  // Predicated region
  $region10: #{mbart_decoder_forward.26} parent=0 // pred_check
    _
  $region11: #{mbart_decoder_forward.26} parent=0 // pred_check_branch
    %13 = sbr.rel (0) target = $region13
  $region12: #{mbart_decoder_forward.26} parent=0 // pred_region
    _
  $region13: #{mbart_decoder_forward.26} parent=0 // pred_fallthru
    _
  %v15 = vld [vmem:[%s1] sm:$0xf]
  %v16 = vld [vmem:[%s1 + $0x4] sm:$0xf]
  %v17 = vld [vmem:[%s1 + $0x8] sm:$0xf]
  %v18 = vld [vmem:[%s1 + $0xc] sm:$0xf]
  %v19 = vld [vmem:[%s0] sm:$0xf]
  %v20 = vld [vmem:[%s0 + $0x4] sm:$0xf]
  %v21 = vld [vmem:[%s0 + $0x8] sm:$0xf]
  %v22 = vld [vmem:[%s0 + $0xc] sm:$0xf]
  %v23 = vld [vmem:[%s2] sm:$0x1]
  %v25 = vlaneseq
  %v26 = vshrl.u32 %v25, 7
  %v27 = vsub.s32 0, %v26
  %v28 = vrot.slane %v23, %v27
  %v34 = vunpack.c.l.b16 %v19
  %v35 = vunpack.c.l.b16 %v20
  %v36 = vunpack.c.l.b16 %v21
  %v37 = vunpack.c.l.b16 %v22
  %v38 = vpack.c.b16 %v35, %v34
  %v39 = vpack.c.b16 %v37, %v36
  %v44 = vunpack.c.l.b16 %v15
  %v45 = vunpack.c.l.b16 %v16
  %v46 = vunpack.c.l.b16 %v17
  %v47 = vunpack.c.l.b16 %v18
  %v48 = vpack.c.b16 %v45, %v44
  %v49 = vpack.c.b16 %v47, %v46
  %vm52 = vcmask 261120
  %v54 = vsel %vm52, %v38, 0
  %v57 = vsel %vm52, %v39, 0
  %59 = vmatprep.subr.bf16.mxu0 0
  %60 = vmatpush1.bf16.msra.mxu0 %v48
  %61 = vmatprep.subr.bf16.mxu0 0
  %62 = vmatpush1.bf16.msra.mxu0 %v49
  %63 = vmatprep.subr.bf16.mxu0 0
  %64 = vmatpush1.bf16.msra.mxu0 0
  %65 = vmatprep.subr.bf16.mxu0 0
  %66 = vmatpush1.bf16.msra.mxu0 0
  %67 = vmatprep.subr.bf16.mxu0 0
  %68 = vmatpush1.bf16.msra.mxu0 0
  %69 = vmatprep.subr.bf16.mxu0 0
  %70 = vmatpush1.bf16.msra.mxu0 0
  %71 = vmatprep.subr.bf16.mxu0 0
  %72 = vmatpush1.bf16.msra.mxu0 0
  %73 = vmatprep.subr.bf16.mxu0 0
  %74 = vmatpush1.bf16.msra.mxu0 0
  %75 = vmatprep.subr.bf16.mxu0 0
  %76 = vmatpush1.bf16.msra.mxu0 0
  %77 = vmatprep.subr.bf16.mxu0 0
  %78 = vmatpush1.bf16.msra.mxu0 0
  %79 = vmatprep.subr.bf16.mxu0 0
  %80 = vmatpush1.bf16.msra.mxu0 0
  %81 = vmatprep.subr.bf16.mxu0 0
  %82 = vmatpush1.bf16.msra.mxu0 0
  %83 = vmatprep.subr.bf16.mxu0 0
  %84 = vmatpush1.bf16.msra.mxu0 0
  %85 = vmatprep.subr.bf16.mxu0 0
  %86 = vmatpush1.bf16.msra.mxu0 0
  %87 = vmatprep.subr.bf16.mxu0 0
  %88 = vmatpush1.bf16.msra.mxu0 0
  %89 = vmatprep.subr.bf16.mxu0 0
  %90 = vmatpush1.bf16.msra.mxu0 0
  %91 = vmatprep.mubr.bf16.mxu0 0
  %92 = vmatmul.mubr.bf16.gmra.mrb[0].mxu0 %v54
  %v93 = vpop.f32.mrb[0].mxu0
  %v94 = vadd.f32 %v28, %v93
  %v95 = vpop.f32.mrb[0].mxu0
  %v96 = vpop.f32.mrb[0].mxu0
  %v97 = vadd.f32 %v28, %v96
  %v98 = vpop.f32.mrb[0].mxu0
  %99 = vmatprep.mubr.bf16.mxu0 0
  %100 = vmatmul.mubr.bf16.gmra.mrb[0].mxu0 %v57
  %v101 = vpop.f32.mrb[0].mxu0
  %v102 = vadd.f32 %v28, %v101
  %v103 = vpop.f32.mrb[0].mxu0
  %v104 = vpop.f32.mrb[0].mxu0
  %v105 = vadd.f32 %v28, %v104
  %v106 = vpop.f32.mrb[0].mxu0
  %107 = vdwg.mxu0
  %v108 = vpack.c.bf16 %v97, %v94
  %v109 = vpack.c.bf16 %v105, %v102
  %v112 = vunpack.c.l.b16 %v108
  %v113 = vunpack.c.h.b16 %v108
  %v114 = vunpack.c.l.b16 %v109
  %v115 = vunpack.c.h.b16 %v109
  %v116 = vpack.c.b16 %v112, %v112
  %v117 = vpack.c.b16 %v113, %v113
  %v118 = vpack.c.b16 %v114, %v114
  %v119 = vpack.c.b16 %v115, %v115
  %vm124 = vcmask 519168
  %125 = vst.msk [vmem:[%s3] sm:$0xf] %vm124, %v116
  %126 = vst.msk [vmem:[%s3 + $0x4] sm:$0xf] %vm124, %v117
  %127 = vst.msk [vmem:[%s3 + $0x8] sm:$0xf] %vm124, %v118
  %128 = vst.msk [vmem:[%s3 + $0xc] sm:$0xf] %vm124, %v119
  // Predicated region
  $region14: #{mbart_decoder_forward.26} parent=0 // pred_check
    _
  $region15: #{mbart_decoder_forward.26} parent=0 // pred_check_branch
    %130 = sbr.rel (0) target = $region17
  $region16: #{mbart_decoder_forward.26} parent=0 // pred_region
    _
  $region17: #{mbart_decoder_forward.26} parent=0 // pred_fallthru
    _
  // Predicated region
  $region18: #{mbart_decoder_forward.26} parent=0 // pred_check
    _
  $region19: #{mbart_decoder_forward.26} parent=0 // pred_check_branch
    %132 = sbr.rel (0) target = $region21
  $region20: #{mbart_decoder_forward.26} parent=0 // pred_region
    _
  $region21: #{mbart_decoder_forward.26} parent=0 // pred_fallthru
    _

// kernel: mbart_decoder_forward.25
$region0: #{mbart_decoder_forward.25}
  #allocation0 [shape = 'u32[]', space=smem, size = 0x4, offset = 0x4, fixed_abs, tag = 'smem constant byte address 0x4 - core index']
  #allocation1 [shape = 'u32[144,128]{1,0:T(1,128)}', space=vmem, size = 0x12000, scoped, tag = 'internal scratch']
  #allocation2 [shape = 'bf16[16,32]{1,0:T(16,128)(2,1)}', space=vmem, size = 0x1000, scoped, tag = 'scratch operand']
  %s0 = inlined_call_operand.vmem [shape: f32[16,32], index: 0, kind: input, shape index: {}]
  %s1 = inlined_call_operand.vmem [shape: f32[1,32], index: 1, kind: input, shape index: {}]
  %s2 = inlined_call_operand.vmem [shape: f32[1,32], index: 2, kind: input, shape index: {}]
  %s3 = inlined_call_operand.vmem [shape: bf16[32,32], index: 3, kind: input, shape index: {}]
  %s4 = inlined_call_operand.vmem [shape: f32[1,32], index: 4, kind: input, shape index: {}]
  %s5 = inlined_call_operand.vmem [shape: bf16[16,32], index: 5, kind: output, shape index: {}]
  %s6 = sld [smem:[#allocation0]]
  $region34: #{mbart_decoder_forward.25} parent=0
    _
  %s8 = ssub.s32 1, %s6
  %s9 = scalar_select 0, %s8, %s6
  // Predicated region
  $region2: #{mbart_decoder_forward.25} parent=0 // pred_check
    _
  $region3: #{mbart_decoder_forward.25} parent=0 // pred_check_branch
    %11 = sbr.rel (0) target = $region5
  $region4: #{mbart_decoder_forward.25} parent=0 // pred_region
    _
  $region5: #{mbart_decoder_forward.25} parent=0 // pred_fallthru
    _
  // Predicated region
  $region6: #{mbart_decoder_forward.25} parent=0 // pred_check
    _
  $region7: #{mbart_decoder_forward.25} parent=0 // pred_check_branch
    %13 = sbr.rel (0) target = $region9
  $region8: #{mbart_decoder_forward.25} parent=0 // pred_region
    _
  $region9: #{mbart_decoder_forward.25} parent=0 // pred_fallthru
    _
  // Predicated region
  $region10: #{mbart_decoder_forward.25} parent=0 // pred_check
    _
  $region11: #{mbart_decoder_forward.25} parent=0 // pred_check_branch
    %15 = sbr.rel (0) target = $region13
  $region12: #{mbart_decoder_forward.25} parent=0 // pred_region
    _
  $region13: #{mbart_decoder_forward.25} parent=0 // pred_fallthru
    _
  // Predicated region
  $region14: #{mbart_decoder_forward.25} parent=0 // pred_check
    _
  $region15: #{mbart_decoder_forward.25} parent=0 // pred_check_branch
    %17 = sbr.rel (0) target = $region17
  $region16: #{mbart_decoder_forward.25} parent=0 // pred_region
    _
  $region17: #{mbart_decoder_forward.25} parent=0 // pred_fallthru
    _
  // Predicated region
  $region18: #{mbart_decoder_forward.25} parent=0 // pred_check
    _
  $region19: #{mbart_decoder_forward.25} parent=0 // pred_check_branch
    %19 = sbr.rel (0) target = $region21
  $region20: #{mbart_decoder_forward.25} parent=0 // pred_region
    _
  $region21: #{mbart_decoder_forward.25} parent=0 // pred_fallthru
    _
  %p21 = scmp.eq.s32.totalorder 0, 0
  // Predicated region
  $region22: #{mbart_decoder_forward.25} parent=0 // pred_check
    %p22 = pneg %p21
  $region23: #{mbart_decoder_forward.25} parent=0 // pred_check_branch
    %24 = sbr.rel (%p22) target = $region25
  $region24: #{mbart_decoder_forward.25} parent=0 // pred_region
    %v25 = vld [vmem:[%s0] sm:$0xff]
    %v26 = vld [vmem:[%s0 + $0x8] sm:$0xff]
    %vm27 = vcmask 261120
    %v28 = vsel %vm27, %v25, 0.0
    %29 = vadd.xlane.f32.xlu0 %v28
    %v30 = vpop.xlane.xlu0 %29
    %v31 = vsel %vm27, %v26, 0.0
    %32 = vadd.xlane.f32.xlu0 %v31
    %v33 = vpop.xlane.xlu0 %32
    %v34 = vrcp.pop 32.0
    %v35 = vmul.f32 %v30, %v34
    %v36 = vmul.f32 %v33, %v34
    %v37 = vsub.f32 %v25, %v35
    %v38 = vsub.f32 %v26, %v36
    %v39 = vmul.f32 %v37, %v37
    %v40 = vmul.f32 %v38, %v38
    %v41 = vsel %vm27, %v39, 0.0
    %42 = vadd.xlane.f32.xlu0 %v41
    %v43 = vpop.xlane.xlu0 %42
    %v44 = vsel %vm27, %v40, 0.0
    %45 = vadd.xlane.f32.xlu0 %v44
    %v46 = vpop.xlane.xlu0 %45
    %v47 = vmul.f32 %v43, %v34
    %v48 = vmul.f32 %v46, %v34
    %v49 = vadd.f32 %v47, 1e-05
    %v50 = vadd.f32 %v48, 1e-05
    %v51 = vrsqrt.pop %v49
    %v52 = vrsqrt.pop %v50
    %v53 = vmul.f32 %v37, %v51
    %v54 = vmul.f32 %v38, %v52
    %v55 = vld [vmem:[%s1] sm:$0x1]
    %v57 = vlaneseq
    %v58 = vshrl.u32 %v57, 7
    %v59 = vsub.s32 0, %v58
    %v60 = vrot.slane %v55, %v59
    %v62 = vmul.f32 %v53, %v60
    %v63 = vmul.f32 %v54, %v60
    %v64 = vld [vmem:[%s2] sm:$0x1]
    %v66 = vlaneseq
    %v67 = vshrl.u32 %v66, 7
    %v68 = vsub.s32 0, %v67
    %v69 = vrot.slane %v64, %v68
    %v71 = vadd.f32 %v62, %v69
    %v72 = vadd.f32 %v63, %v69
    %v73 = vpack.c.bf16 %v72, %v71
    %74 = vst.msk [vmem:[#allocation2] sm:$0xff] %vm27, %v73
  $region25: #{mbart_decoder_forward.25} parent=0 // pred_fallthru
    _
  %v75 = vld [vmem:[%s3] sm:$0xf]
  %v76 = vld [vmem:[%s3 + $0x4] sm:$0xf]
  %v77 = vld [vmem:[%s3 + $0x8] sm:$0xf]
  %v78 = vld [vmem:[%s3 + $0xc] sm:$0xf]
  %v79 = vld [vmem:[#allocation2] sm:$0xff]
  %v80 = vld [vmem:[%s4] sm:$0x1]
  %v82 = vlaneseq
  %v83 = vshrl.u32 %v82, 7
  %v84 = vsub.s32 0, %v83
  %v85 = vrot.slane %v80, %v84
  %v91 = vunpack.c.l.b16 %v75
  %v92 = vunpack.c.l.b16 %v76
  %v93 = vunpack.c.l.b16 %v77
  %v94 = vunpack.c.l.b16 %v78
  %v95 = vpack.c.b16 %v92, %v91
  %v96 = vpack.c.b16 %v94, %v93
  %vm99 = vcmask 261120
  %v101 = vsel %vm99, %v79, 0
  %103 = vmatprep.subr.bf16.mxu0 0
  %104 = vmatpush1.bf16.msra.mxu0 %v95
  %105 = vmatprep.subr.bf16.mxu0 0
  %106 = vmatpush1.bf16.msra.mxu0 %v96
  %107 = vmatprep.subr.bf16.mxu0 0
  %108 = vmatpush1.bf16.msra.mxu0 0
  %109 = vmatprep.subr.bf16.mxu0 0
  %110 = vmatpush1.bf16.msra.mxu0 0
  %111 = vmatprep.subr.bf16.mxu0 0
  %112 = vmatpush1.bf16.msra.mxu0 0
  %113 = vmatprep.subr.bf16.mxu0 0
  %114 = vmatpush1.bf16.msra.mxu0 0
  %115 = vmatprep.subr.bf16.mxu0 0
  %116 = vmatpush1.bf16.msra.mxu0 0
  %117 = vmatprep.subr.bf16.mxu0 0
  %118 = vmatpush1.bf16.msra.mxu0 0
  %119 = vmatprep.subr.bf16.mxu0 0
  %120 = vmatpush1.bf16.msra.mxu0 0
  %121 = vmatprep.subr.bf16.mxu0 0
  %122 = vmatpush1.bf16.msra.mxu0 0
  %123 = vmatprep.subr.bf16.mxu0 0
  %124 = vmatpush1.bf16.msra.mxu0 0
  %125 = vmatprep.subr.bf16.mxu0 0
  %126 = vmatpush1.bf16.msra.mxu0 0
  %127 = vmatprep.subr.bf16.mxu0 0
  %128 = vmatpush1.bf16.msra.mxu0 0
  %129 = vmatprep.subr.bf16.mxu0 0
  %130 = vmatpush1.bf16.msra.mxu0 0
  %131 = vmatprep.subr.bf16.mxu0 0
  %132 = vmatpush1.bf16.msra.mxu0 0
  %133 = vmatprep.subr.bf16.mxu0 0
  %134 = vmatpush1.bf16.msra.mxu0 0
  %135 = vmatprep.mubr.bf16.mxu0 0
  %136 = vmatmul.mubr.bf16.gmra.mrb[0].mxu0 %v101
  %v137 = vpop.f32.mrb[0].mxu0
  %v138 = vadd.f32 %v85, %v137
  %v139 = vpop.f32.mrb[0].mxu0
  %v140 = vpop.f32.mrb[0].mxu0
  %v141 = vadd.f32 %v85, %v140
  %v142 = vpop.f32.mrb[0].mxu0
  %143 = vdwg.mxu0
  %v144 = vpack.c.bf16 %v141, %v138
  %v146 = vunpack.c.l.b16 %v144
  %v147 = vunpack.c.h.b16 %v144
  %v148 = vpack.c.b16 %v146, %v146
  %v149 = vpack.c.b16 %v147, %v147
  %vm152 = vcmask 257024
  %153 = vst.msk [vmem:[%s5] sm:$0xf] %vm152, %v148
  %154 = vst.msk [vmem:[%s5 + $0x4] sm:$0xf] %vm152, %v149
  // Predicated region
  $region26: #{mbart_decoder_forward.25} parent=0 // pred_check
    _
  $region27: #{mbart_decoder_forward.25} parent=0 // pred_check_branch
    %156 = sbr.rel (0) target = $region29
  $region28: #{mbart_decoder_forward.25} parent=0 // pred_region
    _
  $region29: #{mbart_decoder_forward.25} parent=0 // pred_fallthru
    _
  // Predicated region
  $region30: #{mbart_decoder_forward.25} parent=0 // pred_check
    _
  $region31: #{mbart_decoder_forward.25} parent=0 // pred_check_branch
    %158 = sbr.rel (0) target = $region33
  $region32: #{mbart_decoder_forward.25} parent=0 // pred_region
    _
  $region33: #{mbart_decoder_forward.25} parent=0 // pred_fallthru
    _

// kernel: mbart_decoder_forward.27
$region0: #{mbart_decoder_forward.27}
  #allocation0 [shape = 'u32[]', space=smem, size = 0x4, offset = 0x4, fixed_abs, tag = 'smem constant byte address 0x4 - core index']
  #allocation1 [shape = 'u32[144,128]{1,0:T(1,128)}', space=vmem, size = 0x12000, scoped, tag = 'internal scratch']
  %s0 = inlined_call_operand.vmem [shape: bf16[2,8,32], index: 0, kind: input, shape index: {}]
  %s1 = inlined_call_operand.vmem [shape: bf16[2,16,64], index: 1, kind: input, shape index: {}]
  %s2 = inlined_call_operand.vmem [shape: bf16[2,8,32], index: 2, kind: output, shape index: {}]
  %s3 = sld [smem:[#allocation0]]
  $region41: #{mbart_decoder_forward.27} parent=0
    _
  %s5 = ssub.s32 1, %s3
  %s6 = scalar_select 0, %s5, %s3
  loop: start=0, step=1, limit=4
  $region2: #{mbart_decoder_forward.27} parent=0 // loop_pre_header
    _
  $region3: #{mbart_decoder_forward.27} parent=0 // loop_header
    %s8 = sphi 0, %s12
    %p9 = scmp.ge.s32.totalorder %s8, 4
    %s15 = sphi 0, %s27
    %s16 = sphi 0, %s23
    %s17 = sphi 0, %s15
    %s18 = sphi 0, %s16
    %s19 = sphi 0, %s17
    %s20 = sphi 0, %s18
    %s32 = sphi 0, %s34
    %s35 = sphi 0, %s32
    %s36 = sphi 0, %s35
    %s52 = sphi 0, %s36
    %s58 = sphi 0, %s60
    %s61 = sphi 0, %s58
    %s62 = sphi 0, %s61
    %s78 = sphi 0, %s62
    %s86 = sphi 0, %s88
    %s89 = sphi 0, %s86
    %s90 = sphi 0, %s89
    %s106 = sphi 0, %s90
  $region4: #{mbart_decoder_forward.27} parent=0 // loop_header_branch
    %11 = sbr.rel (%p9) target = $region8
  $region5: #{mbart_decoder_forward.27} parent=0 // loop_body
    %s13 = ssub.s32 %s8, 1
    %s14 = ssub.s32 %s8, 2
    %s21 = sadd.s32 1, %s16
    %p22 = scmp.ge.s32.totalorder %s21, 1
    %s23 = scalar_select %p22, 0, %s21
    %s24 = sadd.s32 1, %s15
    %s25 = scalar_select %p22, %s24, %s15
    %p26 = scmp.ge.s32.totalorder %s25, 2
    %s27 = scalar_select %p26, 0, %s25
    %s28 = ssub.s32 %s15, %s27
    %s29 = ssub.s32 %s16, %s23
    %s30 = sor.u32 %s28, %s29
    %p31 = scmp.eq.s32.totalorder %s30, 0
    %s33 = sadd.s32 %s32, 1
    %s34 = scalar_select %p31, %s32, %s33
    %p37 = pneg %p31
    %p38 = scmp.eq.s32.totalorder %s8, 1
    %p39 = por %p37, %p38
    %p40 = scmp.ne.s32.totalorder %s32, %s35
    %p41 = scmp.eq.s32.totalorder %s8, 0
    %p42 = por %p40, %p41
    %p43 = scmp.ne.s32.totalorder %s32, %s35
    %p44 = scmp.eq.s32.totalorder %s13, 1
    %p45 = por %p43, %p44
    %p46 = scmp.ne.s32.totalorder %s35, %s36
    %p47 = scmp.eq.s32.totalorder %s13, 0
    %p48 = por %p46, %p47
    %p49 = scmp.ne.s32.totalorder %s35, %s36
    %p50 = scmp.eq.s32.totalorder %s14, 1
    %p51 = por %p49, %p50
    %p53 = scmp.ne.s32.totalorder %s36, %s52
    %p54 = scmp.eq.s32.totalorder %s14, 0
    %p55 = por %p53, %p54
    %s56 = ssub.s32 %s15, %s27
    %p57 = scmp.eq.s32.totalorder %s56, 0
    %s59 = sadd.s32 %s58, 1
    %s60 = scalar_select %p57, %s58, %s59
    %p63 = pneg %p57
    %p64 = scmp.eq.s32.totalorder %s8, 1
    %p65 = por %p63, %p64
    %p66 = scmp.ne.s32.totalorder %s58, %s61
    %p67 = scmp.eq.s32.totalorder %s8, 0
    %p68 = por %p66, %p67
    %p69 = scmp.ne.s32.totalorder %s58, %s61
    %p70 = scmp.eq.s32.totalorder %s13, 1
    %p71 = por %p69, %p70
    %p72 = scmp.ne.s32.totalorder %s61, %s62
    %p73 = scmp.eq.s32.totalorder %s13, 0
    %p74 = por %p72, %p73
    %p75 = scmp.ne.s32.totalorder %s61, %s62
    %p76 = scmp.eq.s32.totalorder %s14, 1
    %p77 = por %p75, %p76
    %p79 = scmp.ne.s32.totalorder %s62, %s78
    %p80 = scmp.eq.s32.totalorder %s14, 0
    %p81 = por %p79, %p80
    %s82 = ssub.s32 %s15, %s27
    %s83 = ssub.s32 %s16, %s23
    %s84 = sor.u32 %s82, %s83
    %p85 = scmp.eq.s32.totalorder %s84, 0
    %s87 = sadd.s32 %s86, 1
    %s88 = scalar_select %p85, %s86, %s87
    %p91 = pneg %p85
    %p92 = scmp.eq.s32.totalorder %s8, 1
    %p93 = por %p91, %p92
    %p94 = scmp.ne.s32.totalorder %s86, %s89
    %p95 = scmp.eq.s32.totalorder %s8, 0
    %p96 = por %p94, %p95
    %p97 = scmp.ne.s32.totalorder %s86, %s89
    %p98 = scmp.eq.s32.totalorder %s13, 1
    %p99 = por %p97, %p98
    %p100 = scmp.ne.s32.totalorder %s89, %s90
    %p101 = scmp.eq.s32.totalorder %s13, 0
    %p102 = por %p100, %p101
    %p103 = scmp.ne.s32.totalorder %s89, %s90
    %p104 = scmp.eq.s32.totalorder %s14, 1
    %p105 = por %p103, %p104
    %p107 = scmp.ne.s32.totalorder %s90, %s106
    %p108 = scmp.eq.s32.totalorder %s14, 0
    %p109 = por %p107, %p108
    %p110 = scmp.le.s32.totalorder 1, %s8
    %p111 = scmp.lt.s32.totalorder %s8, 3
    %p112 = pnand %p110, %p111
    %p113 = pneg %p112
    // Predicated region
    $region9: #{mbart_decoder_forward.27} parent=5 // pred_check
      _
    $region10: #{mbart_decoder_forward.27} parent=5 // pred_check_branch
      %115 = sbr.rel (%p112) target = $region12
    $region11: #{mbart_decoder_forward.27} parent=5 // pred_region
      %s116 = ssub.s32 %s8, 1
    $region12: #{mbart_decoder_forward.27} parent=5 // pred_fallthru
      _
    %p117 = scmp.lt.s32.totalorder %s8, 2
    // Predicated region
    $region13: #{mbart_decoder_forward.27} parent=5 // pred_check
      %p118 = pneg %p117
    $region14: #{mbart_decoder_forward.27} parent=5 // pred_check_branch
      %120 = sbr.rel (%p118) target = $region16
    $region15: #{mbart_decoder_forward.27} parent=5 // pred_region
      // Predicated region
      $region17: #{mbart_decoder_forward.27} parent=15 // pred_check
        %p121 = pneg %p42
      $region18: #{mbart_decoder_forward.27} parent=15 // pred_check_branch
        %123 = sbr.rel (%p121) target = $region20
      $region19: #{mbart_decoder_forward.27} parent=15 // pred_region
        %p124 = scmp.lt.s32.totalorder %s15, 1
        %s125 = scalar_select %p124, %s15, 1
        %p126 = scmp.lt.s32.totalorder %s16, 0
        %s127 = scalar_select %p126, %s16, 0
        %s128 = sadd.s32 %s127, %s125
        %s129 = smul.addr %s128, 4
        %s130 = scalar_lea.vmem %s0, %s129
      $region20: #{mbart_decoder_forward.27} parent=15 // pred_fallthru
        _
      // Predicated region
      $region21: #{mbart_decoder_forward.27} parent=15 // pred_check
        %p131 = pneg %p68
      $region22: #{mbart_decoder_forward.27} parent=15 // pred_check_branch
        %133 = sbr.rel (%p131) target = $region24
      $region23: #{mbart_decoder_forward.27} parent=15 // pred_region
        %p134 = scmp.lt.s32.totalorder %s15, 1
        %s135 = scalar_select %p134, %s15, 1
        %s136 = smul.addr %s135, 2
        %s137 = smul.addr %s136, 4
        %s138 = scalar_lea.vmem %s1, %s137
      $region24: #{mbart_decoder_forward.27} parent=15 // pred_fallthru
        _
    $region16: #{mbart_decoder_forward.27} parent=5 // pred_fallthru
      _
    %p139 = scmp.le.s32.totalorder 1, %s8
    %p140 = scmp.lt.s32.totalorder %s8, 3
    %p141 = pnand %p139, %p140
    %p142 = pneg %p141
    // Predicated region
    $region25: #{mbart_decoder_forward.27} parent=5 // pred_check
      _
    $region26: #{mbart_decoder_forward.27} parent=5 // pred_check_branch
      %144 = sbr.rel (%p141) target = $region28
    $region27: #{mbart_decoder_forward.27} parent=5 // pred_region
      %s145 = ssub.s32 %s8, 1
      %p146 = scmp.lt.s32.totalorder %s17, 1
      %s147 = scalar_select %p146, %s17, 1
      %p148 = scmp.lt.s32.totalorder %s18, 0
      %s149 = scalar_select %p148, %s18, 0
      %s150 = sadd.s32 %s149, %s147
      %s151 = smul.addr %s150, 4
      %s152 = scalar_lea.vmem %s0, %s151
      %p153 = pneg %p48
      %p154 = pneg %p45
      %p155 = scmp.lt.s32.totalorder %s17, 1
      %s156 = scalar_select %p155, %s17, 1
      %s157 = smul.addr %s156, 2
      %s158 = smul.addr %s157, 4
      %s159 = scalar_lea.vmem %s1, %s158
      %p160 = pneg %p74
      %p161 = pneg %p71
      %p162 = pneg %p102
      %p163 = pneg %p99
      %p164 = scmp.lt.s32.totalorder %s17, 1
      %s165 = scalar_select %p164, %s17, 1
      %p166 = scmp.lt.s32.totalorder %s18, 0
      %s167 = scalar_select %p166, %s18, 0
      %s168 = sadd.s32 %s167, %s165
      %s169 = smul.addr %s168, 4
      %s170 = scalar_lea.vmem %s2, %s169
      %p171 = scmp.lt.s32.totalorder %s17, 1
      %s172 = scalar_select %p171, %s17, 1
      %p173 = scmp.lt.s32.totalorder %s18, 0
      %s174 = scalar_select %p173, %s18, 0
      %s175 = sadd.s32 %s174, %s172
      %s176 = smul.addr %s175, 4
      %s177 = scalar_lea.vmem %s0, %s176
      %p178 = scmp.lt.s32.totalorder %s17, 1
      %s179 = scalar_select %p178, %s17, 1
      %s180 = smul.addr %s179, 2
      %s181 = smul.addr %s180, 4
      %s182 = scalar_lea.vmem %s1, %s181
      %p183 = scmp.lt.s32.totalorder %s17, 1
      %s184 = scalar_select %p183, %s17, 1
      %p185 = scmp.lt.s32.totalorder %s18, 0
      %s186 = scalar_select %p185, %s18, 0
      %s187 = sadd.s32 %s186, %s184
      %s188 = smul.addr %s187, 4
      %s189 = scalar_lea.vmem %s2, %s188
      %v191 = vld [vmem:[%s182] sm:$0xf]
      %v192 = vld [vmem:[%s182 + $0x4] sm:$0xf]
      %v193 = vld [vmem:[%s177] sm:$0xf]
      %v196 = vunpack.c.l.b16 %v191
      %v197 = vunpack.c.l.b16 %v192
      %v198 = vpack.c.b16 %v197, %v196
      %vm199 = vcmask 64512
      %v201 = vsel %vm199, %v193, 0
      %v204 = vsel %vm199, %v198, 0
      %206 = vmatprep.subr.bf16.mxu0 0
      %207 = vmatpush1.bf16.xpose.msra.mxu0 %v204
      %208 = vmatprep.subr.bf16.mxu0 0
      %209 = vmatpush1.bf16.xpose.msra.mxu0 0
      %210 = vmatprep.subr.bf16.mxu0 0
      %211 = vmatpush1.bf16.xpose.msra.mxu0 0
      %212 = vmatprep.subr.bf16.mxu0 0
      %213 = vmatpush1.bf16.xpose.msra.mxu0 0
      %214 = vmatprep.subr.bf16.mxu0 0
      %215 = vmatpush1.bf16.xpose.msra.mxu0 0
      %216 = vmatprep.subr.bf16.mxu0 0
      %217 = vmatpush1.bf16.xpose.msra.mxu0 0
      %218 = vmatprep.subr.bf16.mxu0 0
      %219 = vmatpush1.bf16.xpose.msra.mxu0 0
      %220 = vmatprep.subr.bf16.mxu0 0
      %221 = vmatpush1.bf16.xpose.msra.mxu0 0
      %222 = vmatprep.subr.bf16.mxu0 0
      %223 = vmatpush1.bf16.xpose.msra.mxu0 0
      %224 = vmatprep.subr.bf16.mxu0 0
      %225 = vmatpush1.bf16.xpose.msra.mxu0 0
      %226 = vmatprep.subr.bf16.mxu0 0
      %227 = vmatpush1.bf16.xpose.msra.mxu0 0
      %228 = vmatprep.subr.bf16.mxu0 0
      %229 = vmatpush1.bf16.xpose.msra.mxu0 0
      %230 = vmatprep.subr.bf16.mxu0 0
      %231 = vmatpush1.bf16.xpose.msra.mxu0 0
      %232 = vmatprep.subr.bf16.mxu0 0
      %233 = vmatpush1.bf16.xpose.msra.mxu0 0
      %234 = vmatprep.subr.bf16.mxu0 0
      %235 = vmatpush1.bf16.xpose.msra.mxu0 0
      %236 = vmatprep.subr.bf16.mxu0 0
      %237 = vmatpush1.bf16.xpose.msra.mxu0 0
      %238 = vmatprep.mubr.bf16.mxu0 0
      %239 = vmatmul.mubr.bf16.gmra.mrb[0].mxu0 %v201
      %v240 = vpop.f32.mrb[0].mxu0
      %v241 = vadd.f32 0.0, %v240
      %v242 = vpop.f32.mrb[0].mxu0
      %v243 = vpop.f32.mrb[0].mxu0
      %v244 = vpop.f32.mrb[0].mxu0
      %245 = vdwg.mxu0
      %v246 = vmul.f32 %v241, 0.35355338
      %vm247 = vcmask 130048
      %v248 = vsel %vm247, %v246, -inf
      %249 = vmax.xlane.f32.xlu0 %v248
      %v250 = vpop.xlane.xlu0 %249
      %v251 = vsub.f32 %v246, %v250
      %v252 = vmul.f32 %v251, 1.442695
      %v253 = vpow.pop %v252
      %v254 = vsel %vm247, %v253, 0.0
      %255 = vadd.xlane.f32.xlu0 %v254
      %v256 = vpop.xlane.xlu0 %255
      %v257 = vpack.c.bf16 %v253, %v253
      %258 = vrot.lane.b32.xlu0 %v198, 96
      %v259 = vpop.permute.xlu0 %258
      %v262 = vsel %vm247, %v257, 0
      %264 = vmatprep.subr.bf16.mxu0 0
      %265 = vmatpush1.bf16.msra.mxu0 %v259
      %266 = vmatprep.subr.bf16.mxu0 0
      %267 = vmatpush1.bf16.msra.mxu0 0
      %268 = vmatprep.subr.bf16.mxu0 0
      %269 = vmatpush1.bf16.msra.mxu0 0
      %270 = vmatprep.subr.bf16.mxu0 0
      %271 = vmatpush1.bf16.msra.mxu0 0
      %272 = vmatprep.subr.bf16.mxu0 0
      %273 = vmatpush1.bf16.msra.mxu0 0
      %274 = vmatprep.subr.bf16.mxu0 0
      %275 = vmatpush1.bf16.msra.mxu0 0
      %276 = vmatprep.subr.bf16.mxu0 0
      %277 = vmatpush1.bf16.msra.mxu0 0
      %278 = vmatprep.subr.bf16.mxu0 0
      %279 = vmatpush1.bf16.msra.mxu0 0
      %280 = vmatprep.subr.bf16.mxu0 0
      %281 = vmatpush1.bf16.msra.mxu0 0
      %282 = vmatprep.subr.bf16.mxu0 0
      %283 = vmatpush1.bf16.msra.mxu0 0
      %284 = vmatprep.subr.bf16.mxu0 0
      %285 = vmatpush1.bf16.msra.mxu0 0
      %286 = vmatprep.subr.bf16.mxu0 0
      %287 = vmatpush1.bf16.msra.mxu0 0
      %288 = vmatprep.subr.bf16.mxu0 0
      %289 = vmatpush1.bf16.msra.mxu0 0
      %290 = vmatprep.subr.bf16.mxu0 0
      %291 = vmatpush1.bf16.msra.mxu0 0
      %292 = vmatprep.subr.bf16.mxu0 0
      %293 = vmatpush1.bf16.msra.mxu0 0
      %294 = vmatprep.subr.bf16.mxu0 0
      %295 = vmatpush1.bf16.msra.mxu0 0
      %296 = vmatprep.mubr.bf16.mxu0 0
      %297 = vmatmul.mubr.bf16.gmra.mrb[0].mxu0 %v262
      %v298 = vpop.f32.mrb[0].mxu0
      %v299 = vadd.f32 0.0, %v298
      %v300 = vpop.f32.mrb[0].mxu0
      %v301 = vpop.f32.mrb[0].mxu0
      %v302 = vpop.f32.mrb[0].mxu0
      %303 = vdwg.mxu0
      %v304 = vrcp.pop %v256
      %v305 = vmul.f32 %v299, %v304
      %v307 = vunpack.c.l.b16 %v193
      %v308 = vpack.c.b16 %v307, %v307
      %309 = vrot.lane.b32.xlu0 %v308, 120
      %v310 = vpop.permute.xlu0 %309
      %311 = vrot.lane.b32.xlu0 %v198, 120
      %v312 = vpop.permute.xlu0 %311
      %v314 = vsel %vm199, %v310, 0
      %v317 = vsel %vm199, %v312, 0
      %319 = vmatprep.subr.bf16.mxu0 0
      %320 = vmatpush1.bf16.xpose.msra.mxu0 %v317
      %321 = vmatprep.subr.bf16.mxu0 0
      %322 = vmatpush1.bf16.xpose.msra.mxu0 0
      %323 = vmatprep.subr.bf16.mxu0 0
      %324 = vmatpush1.bf16.xpose.msra.mxu0 0
      %325 = vmatprep.subr.bf16.mxu0 0
      %326 = vmatpush1.bf16.xpose.msra.mxu0 0
      %327 = vmatprep.subr.bf16.mxu0 0
      %328 = vmatpush1.bf16.xpose.msra.mxu0 0
      %329 = vmatprep.subr.bf16.mxu0 0
      %330 = vmatpush1.bf16.xpose.msra.mxu0 0
      %331 = vmatprep.subr.bf16.mxu0 0
      %332 = vmatpush1.bf16.xpose.msra.mxu0 0
      %333 = vmatprep.subr.bf16.mxu0 0
      %334 = vmatpush1.bf16.xpose.msra.mxu0 0
      %335 = vmatprep.subr.bf16.mxu0 0
      %336 = vmatpush1.bf16.xpose.msra.mxu0 0
      %337 = vmatprep.subr.bf16.mxu0 0
      %338 = vmatpush1.bf16.xpose.msra.mxu0 0
      %339 = vmatprep.subr.bf16.mxu0 0
      %340 = vmatpush1.bf16.xpose.msra.mxu0 0
      %341 = vmatprep.subr.bf16.mxu0 0
      %342 = vmatpush1.bf16.xpose.msra.mxu0 0
      %343 = vmatprep.subr.bf16.mxu0 0
      %344 = vmatpush1.bf16.xpose.msra.mxu0 0
      %345 = vmatprep.subr.bf16.mxu0 0
      %346 = vmatpush1.bf16.xpose.msra.mxu0 0
      %347 = vmatprep.subr.bf16.mxu0 0
      %348 = vmatpush1.bf16.xpose.msra.mxu0 0
      %349 = vmatprep.subr.bf16.mxu0 0
      %350 = vmatpush1.bf16.xpose.msra.mxu0 0
      %351 = vmatprep.mubr.bf16.mxu0 0
      %352 = vmatmul.mubr.bf16.gmra.mrb[0].mxu0 %v314
      %v353 = vpop.f32.mrb[0].mxu0
      %v354 = vadd.f32 0.0, %v353
      %v355 = vpop.f32.mrb[0].mxu0
      %v356 = vpop.f32.mrb[0].mxu0
      %v357 = vpop.f32.mrb[0].mxu0
      %358 = vdwg.mxu0
      %v359 = vmul.f32 %v354, 0.35355338
      %v360 = vsel %vm247, %v359, -inf
      %361 = vmax.xlane.f32.xlu0 %v360
      %v362 = vpop.xlane.xlu0 %361
      %v363 = vsub.f32 %v359, %v362
      %v364 = vmul.f32 %v363, 1.442695
      %v365 = vpow.pop %v364
      %v366 = vsel %vm247, %v365, 0.0
      %367 = vadd.xlane.f32.xlu0 %v366
      %v368 = vpop.xlane.xlu0 %367
      %v369 = vpack.c.bf16 %v365, %v365
      %370 = vrot.lane.b32.xlu0 %v198, 88
      %v371 = vpop.permute.xlu0 %370
      %v374 = vsel %vm247, %v369, 0
      %376 = vmatprep.subr.bf16.mxu0 0
      %377 = vmatpush1.bf16.msra.mxu0 %v371
      %378 = vmatprep.subr.bf16.mxu0 0
      %379 = vmatpush1.bf16.msra.mxu0 0
      %380 = vmatprep.subr.bf16.mxu0 0
      %381 = vmatpush1.bf16.msra.mxu0 0
      %382 = vmatprep.subr.bf16.mxu0 0
      %383 = vmatpush1.bf16.msra.mxu0 0
      %384 = vmatprep.subr.bf16.mxu0 0
      %385 = vmatpush1.bf16.msra.mxu0 0
      %386 = vmatprep.subr.bf16.mxu0 0
      %387 = vmatpush1.bf16.msra.mxu0 0
      %388 = vmatprep.subr.bf16.mxu0 0
      %389 = vmatpush1.bf16.msra.mxu0 0
      %390 = vmatprep.subr.bf16.mxu0 0
      %391 = vmatpush1.bf16.msra.mxu0 0
      %392 = vmatprep.subr.bf16.mxu0 0
      %393 = vmatpush1.bf16.msra.mxu0 0
      %394 = vmatprep.subr.bf16.mxu0 0
      %395 = vmatpush1.bf16.msra.mxu0 0
      %396 = vmatprep.subr.bf16.mxu0 0
      %397 = vmatpush1.bf16.msra.mxu0 0
      %398 = vmatprep.subr.bf16.mxu0 0
      %399 = vmatpush1.bf16.msra.mxu0 0
      %400 = vmatprep.subr.bf16.mxu0 0
      %401 = vmatpush1.bf16.msra.mxu0 0
      %402 = vmatprep.subr.bf16.mxu0 0
      %403 = vmatpush1.bf16.msra.mxu0 0
      %404 = vmatprep.subr.bf16.mxu0 0
      %405 = vmatpush1.bf16.msra.mxu0 0
      %406 = vmatprep.subr.bf16.mxu0 0
      %407 = vmatpush1.bf16.msra.mxu0 0
      %408 = vmatprep.mubr.bf16.mxu0 0
      %409 = vmatmul.mubr.bf16.gmra.mrb[0].mxu0 %v374
      %v410 = vpop.f32.mrb[0].mxu0
      %v411 = vadd.f32 0.0, %v410
      %v412 = vpop.f32.mrb[0].mxu0
      %v413 = vpop.f32.mrb[0].mxu0
      %v414 = vpop.f32.mrb[0].mxu0
      %415 = vdwg.mxu0
      %v416 = vrcp.pop %v368
      %v417 = vmul.f32 %v411, %v416
      %419 = vrot.lane.b32.xlu0 %v417, 8
      %v420 = vpop.permute.xlu0 %419
      %v422 = vsel %vm199, %v305, %v420
      %v423 = vpack.c.bf16 %v422, %v422
      %vm424 = vcmask 125952
      %425 = vst.msk [vmem:[%s189] sm:$0xf] %vm424, %v423
      %v426 = vld [vmem:[%s177] sm:$0xf]
      %v428 = vunpack.c.l.b16 %v426
      %v429 = vpack.c.b16 %v428, %v428
      %430 = vrot.lane.b32.xlu0 %v429, 112
      %v431 = vpop.permute.xlu0 %430
      %432 = vrot.lane.b32.xlu0 %v198, 112
      %v433 = vpop.permute.xlu0 %432
      %v435 = vsel %vm199, %v431, 0
      %v438 = vsel %vm199, %v433, 0
      %440 = vmatprep.subr.bf16.mxu0 0
      %441 = vmatpush1.bf16.xpose.msra.mxu0 %v438
      %442 = vmatprep.subr.bf16.mxu0 0
      %443 = vmatpush1.bf16.xpose.msra.mxu0 0
      %444 = vmatprep.subr.bf16.mxu0 0
      %445 = vmatpush1.bf16.xpose.msra.mxu0 0
      %446 = vmatprep.subr.bf16.mxu0 0
      %447 = vmatpush1.bf16.xpose.msra.mxu0 0
      %448 = vmatprep.subr.bf16.mxu0 0
      %449 = vmatpush1.bf16.xpose.msra.mxu0 0
      %450 = vmatprep.subr.bf16.mxu0 0
      %451 = vmatpush1.bf16.xpose.msra.mxu0 0
      %452 = vmatprep.subr.bf16.mxu0 0
      %453 = vmatpush1.bf16.xpose.msra.mxu0 0
      %454 = vmatprep.subr.bf16.mxu0 0
      %455 = vmatpush1.bf16.xpose.msra.mxu0 0
      %456 = vmatprep.subr.bf16.mxu0 0
      %457 = vmatpush1.bf16.xpose.msra.mxu0 0
      %458 = vmatprep.subr.bf16.mxu0 0
      %459 = vmatpush1.bf16.xpose.msra.mxu0 0
      %460 = vmatprep.subr.bf16.mxu0 0
      %461 = vmatpush1.bf16.xpose.msra.mxu0 0
      %462 = vmatprep.subr.bf16.mxu0 0
      %463 = vmatpush1.bf16.xpose.msra.mxu0 0
      %464 = vmatprep.subr.bf16.mxu0 0
      %465 = vmatpush1.bf16.xpose.msra.mxu0 0
      %466 = vmatprep.subr.bf16.mxu0 0
      %467 = vmatpush1.bf16.xpose.msra.mxu0 0
      %468 = vmatprep.subr.bf16.mxu0 0
      %469 = vmatpush1.bf16.xpose.msra.mxu0 0
      %470 = vmatprep.subr.bf16.mxu0 0
      %471 = vmatpush1.bf16.xpose.msra.mxu0 0
      %472 = vmatprep.mubr.bf16.mxu0 0
      %473 = vmatmul.mubr.bf16.gmra.mrb[0].mxu0 %v435
      %v474 = vpop.f32.mrb[0].mxu0
      %v475 = vadd.f32 0.0, %v474
      %v476 = vpop.f32.mrb[0].mxu0
      %v477 = vpop.f32.mrb[0].mxu0
      %v478 = vpop.f32.mrb[0].mxu0
      %479 = vdwg.mxu0
      %v480 = vmul.f32 %v475, 0.35355338
      %v481 = vsel %vm247, %v480, -inf
      %482 = vmax.xlane.f32.xlu0 %v481
      %v483 = vpop.xlane.xlu0 %482
      %v484 = vsub.f32 %v480, %v483
      %v485 = vmul.f32 %v484, 1.442695
      %v486 = vpow.pop %v485
      %v487 = vsel %vm247, %v486, 0.0
      %488 = vadd.xlane.f32.xlu0 %v487
      %v489 = vpop.xlane.xlu0 %488
      %v490 = vpack.c.bf16 %v486, %v486
      %491 = vrot.lane.b32.xlu0 %v198, 80
      %v492 = vpop.permute.xlu0 %491
      %v495 = vsel %vm247, %v490, 0
      %497 = vmatprep.subr.bf16.mxu0 0
      %498 = vmatpush1.bf16.msra.mxu0 %v492
      %499 = vmatprep.subr.bf16.mxu0 0
      %500 = vmatpush1.bf16.msra.mxu0 0
      %501 = vmatprep.subr.bf16.mxu0 0
      %502 = vmatpush1.bf16.msra.mxu0 0
      %503 = vmatprep.subr.bf16.mxu0 0
      %504 = vmatpush1.bf16.msra.mxu0 0
      %505 = vmatprep.subr.bf16.mxu0 0
      %506 = vmatpush1.bf16.msra.mxu0 0
      %507 = vmatprep.subr.bf16.mxu0 0
      %508 = vmatpush1.bf16.msra.mxu0 0
      %509 = vmatprep.subr.bf16.mxu0 0
      %510 = vmatpush1.bf16.msra.mxu0 0
      %511 = vmatprep.subr.bf16.mxu0 0
      %512 = vmatpush1.bf16.msra.mxu0 0
      %513 = vmatprep.subr.bf16.mxu0 0
      %514 = vmatpush1.bf16.msra.mxu0 0
      %515 = vmatprep.subr.bf16.mxu0 0
      %516 = vmatpush1.bf16.msra.mxu0 0
      %517 = vmatprep.subr.bf16.mxu0 0
      %518 = vmatpush1.bf16.msra.mxu0 0
      %519 = vmatprep.subr.bf16.mxu0 0
      %520 = vmatpush1.bf16.msra.mxu0 0
      %521 = vmatprep.subr.bf16.mxu0 0
      %522 = vmatpush1.bf16.msra.mxu0 0
      %523 = vmatprep.subr.bf16.mxu0 0
      %524 = vmatpush1.bf16.msra.mxu0 0
      %525 = vmatprep.subr.bf16.mxu0 0
      %526 = vmatpush1.bf16.msra.mxu0 0
      %527 = vmatprep.subr.bf16.mxu0 0
      %528 = vmatpush1.bf16.msra.mxu0 0
      %529 = vmatprep.mubr.bf16.mxu0 0
      %530 = vmatmul.mubr.bf16.gmra.mrb[0].mxu0 %v495
      %v531 = vpop.f32.mrb[0].mxu0
      %v532 = vadd.f32 0.0, %v531
      %v533 = vpop.f32.mrb[0].mxu0
      %v534 = vpop.f32.mrb[0].mxu0
      %v535 = vpop.f32.mrb[0].mxu0
      %536 = vdwg.mxu0
      %v537 = vrcp.pop %v489
      %v538 = vmul.f32 %v532, %v537
      %539 = vrot.lane.b32.xlu0 %v429, 104
      %v540 = vpop.permute.xlu0 %539
      %541 = vrot.lane.b32.xlu0 %v198, 104
      %v542 = vpop.permute.xlu0 %541
      %v544 = vsel %vm199, %v540, 0
      %v547 = vsel %vm199, %v542, 0
      %549 = vmatprep.subr.bf16.mxu0 0
      %550 = vmatpush1.bf16.xpose.msra.mxu0 %v547
      %551 = vmatprep.subr.bf16.mxu0 0
      %552 = vmatpush1.bf16.xpose.msra.mxu0 0
      %553 = vmatprep.subr.bf16.mxu0 0
      %554 = vmatpush1.bf16.xpose.msra.mxu0 0
      %555 = vmatprep.subr.bf16.mxu0 0
      %556 = vmatpush1.bf16.xpose.msra.mxu0 0
      %557 = vmatprep.subr.bf16.mxu0 0
      %558 = vmatpush1.bf16.xpose.msra.mxu0 0
      %559 = vmatprep.subr.bf16.mxu0 0
      %560 = vmatpush1.bf16.xpose.msra.mxu0 0
      %561 = vmatprep.subr.bf16.mxu0 0
      %562 = vmatpush1.bf16.xpose.msra.mxu0 0
      %563 = vmatprep.subr.bf16.mxu0 0
      %564 = vmatpush1.bf16.xpose.msra.mxu0 0
      %565 = vmatprep.subr.bf16.mxu0 0
      %566 = vmatpush1.bf16.xpose.msra.mxu0 0
      %567 = vmatprep.subr.bf16.mxu0 0
      %568 = vmatpush1.bf16.xpose.msra.mxu0 0
      %569 = vmatprep.subr.bf16.mxu0 0
      %570 = vmatpush1.bf16.xpose.msra.mxu0 0
      %571 = vmatprep.subr.bf16.mxu0 0
      %572 = vmatpush1.bf16.xpose.msra.mxu0 0
      %573 = vmatprep.subr.bf16.mxu0 0
      %574 = vmatpush1.bf16.xpose.msra.mxu0 0
      %575 = vmatprep.subr.bf16.mxu0 0
      %576 = vmatpush1.bf16.xpose.msra.mxu0 0
      %577 = vmatprep.subr.bf16.mxu0 0
      %578 = vmatpush1.bf16.xpose.msra.mxu0 0
      %579 = vmatprep.subr.bf16.mxu0 0
      %580 = vmatpush1.bf16.xpose.msra.mxu0 0
      %581 = vmatprep.mubr.bf16.mxu0 0
      %582 = vmatmul.mubr.bf16.gmra.mrb[0].mxu0 %v544
      %v583 = vpop.f32.mrb[0].mxu0
      %v584 = vadd.f32 0.0, %v583
      %v585 = vpop.f32.mrb[0].mxu0
      %v586 = vpop.f32.mrb[0].mxu0
      %v587 = vpop.f32.mrb[0].mxu0
      %588 = vdwg.mxu0
      %v589 = vmul.f32 %v584, 0.35355338
      %v590 = vsel %vm247, %v589, -inf
      %591 = vmax.xlane.f32.xlu0 %v590
      %v592 = vpop.xlane.xlu0 %591
      %v593 = vsub.f32 %v589, %v592
      %v594 = vmul.f32 %v593, 1.442695
      %v595 = vpow.pop %v594
      %v596 = vsel %vm247, %v595, 0.0
      %597 = vadd.xlane.f32.xlu0 %v596
      %v598 = vpop.xlane.xlu0 %597
      %v599 = vpack.c.bf16 %v595, %v595
      %600 = vrot.lane.b32.xlu0 %v198, 72
      %v601 = vpop.permute.xlu0 %600
      %v604 = vsel %vm247, %v599, 0
      %606 = vmatprep.subr.bf16.mxu0 0
      %607 = vmatpush1.bf16.msra.mxu0 %v601
      %608 = vmatprep.subr.bf16.mxu0 0
      %609 = vmatpush1.bf16.msra.mxu0 0
      %610 = vmatprep.subr.bf16.mxu0 0
      %611 = vmatpush1.bf16.msra.mxu0 0
      %612 = vmatprep.subr.bf16.mxu0 0
      %613 = vmatpush1.bf16.msra.mxu0 0
      %614 = vmatprep.subr.bf16.mxu0 0
      %615 = vmatpush1.bf16.msra.mxu0 0
      %616 = vmatprep.subr.bf16.mxu0 0
      %617 = vmatpush1.bf16.msra.mxu0 0
      %618 = vmatprep.subr.bf16.mxu0 0
      %619 = vmatpush1.bf16.msra.mxu0 0
      %620 = vmatprep.subr.bf16.mxu0 0
      %621 = vmatpush1.bf16.msra.mxu0 0
      %622 = vmatprep.subr.bf16.mxu0 0
      %623 = vmatpush1.bf16.msra.mxu0 0
      %624 = vmatprep.subr.bf16.mxu0 0
      %625 = vmatpush1.bf16.msra.mxu0 0
      %626 = vmatprep.subr.bf16.mxu0 0
      %627 = vmatpush1.bf16.msra.mxu0 0
      %628 = vmatprep.subr.bf16.mxu0 0
      %629 = vmatpush1.bf16.msra.mxu0 0
      %630 = vmatprep.subr.bf16.mxu0 0
      %631 = vmatpush1.bf16.msra.mxu0 0
      %632 = vmatprep.subr.bf16.mxu0 0
      %633 = vmatpush1.bf16.msra.mxu0 0
      %634 = vmatprep.subr.bf16.mxu0 0
      %635 = vmatpush1.bf16.msra.mxu0 0
      %636 = vmatprep.subr.bf16.mxu0 0
      %637 = vmatpush1.bf16.msra.mxu0 0
      %638 = vmatprep.mubr.bf16.mxu0 0
      %639 = vmatmul.mubr.bf16.gmra.mrb[0].mxu0 %v604
      %v640 = vpop.f32.mrb[0].mxu0
      %v641 = vadd.f32 0.0, %v640
      %v642 = vpop.f32.mrb[0].mxu0
      %v643 = vpop.f32.mrb[0].mxu0
      %v644 = vpop.f32.mrb[0].mxu0
      %645 = vdwg.mxu0
      %v646 = vrcp.pop %v598
      %v647 = vmul.f32 %v641, %v646
      %649 = vrot.lane.b32.xlu0 %v647, 8
      %v650 = vpop.permute.xlu0 %649
      %v652 = vsel %vm199, %v538, %v650
      %v653 = vpack.c.bf16 %v652, %v652
      %v655 = vunpack.c.l.b16 %v653
      %v656 = vpack.c.b16 %v655, %v655
      %657 = vrot.lane.b32.xlu0 %v656, 16
      %v658 = vpop.permute.xlu0 %657
      %vm660 = vcmask 257152
      %661 = vst.msk [vmem:[%s189] sm:$0xf] %vm660, %v658
      %p662 = scmp.lt.s32.totalorder %s17, 1
      %s663 = scalar_select %p662, %s17, 1
      %p664 = scmp.lt.s32.totalorder %s18, 0
      %s665 = scalar_select %p664, %s18, 0
      %s666 = sadd.s32 %s665, %s663
      %s667 = smul.addr %s666, 4
      %s668 = scalar_lea.vmem %s2, %s667
      // Predicated region
      $region29: #{mbart_decoder_forward.27} parent=27 // pred_check
        %p669 = pneg %p99
      $region30: #{mbart_decoder_forward.27} parent=27 // pred_check_branch
        %671 = sbr.rel (%p669) target = $region32
      $region31: #{mbart_decoder_forward.27} parent=27 // pred_region
        _
      $region32: #{mbart_decoder_forward.27} parent=27 // pred_fallthru
        _
    $region28: #{mbart_decoder_forward.27} parent=5 // pred_fallthru
      _
    %p672 = scmp.le.s32.totalorder 2, %s8
    // Predicated region
    $region33: #{mbart_decoder_forward.27} parent=5 // pred_check
      %p673 = pneg %p672
    $region34: #{mbart_decoder_forward.27} parent=5 // pred_check_branch
      %675 = sbr.rel (%p673) target = $region36
    $region35: #{mbart_decoder_forward.27} parent=5 // pred_region
      %s676 = ssub.s32 %s8, 2
      // Predicated region
      $region37: #{mbart_decoder_forward.27} parent=35 // pred_check
        %p677 = pneg %p105
      $region38: #{mbart_decoder_forward.27} parent=35 // pred_check_branch
        %679 = sbr.rel (%p677) target = $region40
      $region39: #{mbart_decoder_forward.27} parent=35 // pred_region
        %p680 = scmp.lt.s32.totalorder %s19, 1
        %s681 = scalar_select %p680, %s19, 1
        %p682 = scmp.lt.s32.totalorder %s20, 0
        %s683 = scalar_select %p682, %s20, 0
        %s684 = sadd.s32 %s683, %s681
        %s685 = smul.addr %s684, 4
        %s686 = scalar_lea.vmem %s2, %s685
      $region40: #{mbart_decoder_forward.27} parent=35 // pred_fallthru
        _
    $region36: #{mbart_decoder_forward.27} parent=5 // pred_fallthru
      _
  $region6: #{mbart_decoder_forward.27} parent=0 // loop_footer
    %s12 = sadd.s32 1, %s8
  $region7: #{mbart_decoder_forward.27} parent=0 // loop_footer_branch
    %7 = sbr.rel target = $region3
  $region8: #{mbart_decoder_forward.27} parent=0 // loop_exit
    _

// kernel: mbart_decoder_forward.30
$region0: #{mbart_decoder_forward.30}
  #allocation0 [shape = 'u32[]', space=smem, size = 0x4, offset = 0x4, fixed_abs, tag = 'smem constant byte address 0x4 - core index']
  #allocation1 [shape = 'u32[144,128]{1,0:T(1,128)}', space=vmem, size = 0x12000, scoped, tag = 'internal scratch']
  %s0 = inlined_call_operand.vmem [shape: bf16[16,64], index: 0, kind: input, shape index: {}]
  %s1 = inlined_call_operand.vmem [shape: bf16[64,32], index: 1, kind: input, shape index: {}]
  %s2 = inlined_call_operand.vmem [shape: f32[1,32], index: 2, kind: input, shape index: {}]
  %s3 = inlined_call_operand.vmem [shape: f32[16,32], index: 3, kind: input, shape index: {}]
  %s4 = inlined_call_operand.vmem [shape: f32[16,32], index: 4, kind: output, shape index: {}]
  %s5 = sld [smem:[#allocation0]]
  $region26: #{mbart_decoder_forward.30} parent=0
    _
  %s7 = ssub.s32 1, %s5
  %s8 = scalar_select 0, %s7, %s5
  // Predicated region
  $region2: #{mbart_decoder_forward.30} parent=0 // pred_check
    _
  $region3: #{mbart_decoder_forward.30} parent=0 // pred_check_branch
    %10 = sbr.rel (0) target = $region5
  $region4: #{mbart_decoder_forward.30} parent=0 // pred_region
    _
  $region5: #{mbart_decoder_forward.30} parent=0 // pred_fallthru
    _
  // Predicated region
  $region6: #{mbart_decoder_forward.30} parent=0 // pred_check
    _
  $region7: #{mbart_decoder_forward.30} parent=0 // pred_check_branch
    %12 = sbr.rel (0) target = $region9
  $region8: #{mbart_decoder_forward.30} parent=0 // pred_region
    _
  $region9: #{mbart_decoder_forward.30} parent=0 // pred_fallthru
    _
  // Predicated region
  $region10: #{mbart_decoder_forward.30} parent=0 // pred_check
    _
  $region11: #{mbart_decoder_forward.30} parent=0 // pred_check_branch
    %14 = sbr.rel (0) target = $region13
  $region12: #{mbart_decoder_forward.30} parent=0 // pred_region
    _
  $region13: #{mbart_decoder_forward.30} parent=0 // pred_fallthru
    _
  // Predicated region
  $region14: #{mbart_decoder_forward.30} parent=0 // pred_check
    _
  $region15: #{mbart_decoder_forward.30} parent=0 // pred_check_branch
    %16 = sbr.rel (0) target = $region17
  $region16: #{mbart_decoder_forward.30} parent=0 // pred_region
    _
  $region17: #{mbart_decoder_forward.30} parent=0 // pred_fallthru
    _
  %v18 = vld [vmem:[%s1] sm:$0xf]
  %v19 = vld [vmem:[%s1 + $0x4] sm:$0xf]
  %v20 = vld [vmem:[%s1 + $0x8] sm:$0xf]
  %v21 = vld [vmem:[%s1 + $0xc] sm:$0xf]
  %v22 = vld [vmem:[%s1 + $0x10] sm:$0xf]
  %v23 = vld [vmem:[%s1 + $0x14] sm:$0xf]
  %v24 = vld [vmem:[%s1 + $0x18] sm:$0xf]
  %v25 = vld [vmem:[%s1 + $0x1c] sm:$0xf]
  %v26 = vld [vmem:[%s0] sm:$0xf]
  %v27 = vld [vmem:[%s0 + $0x4] sm:$0xf]
  %v28 = vld [vmem:[%s2] sm:$0x1]
  %v30 = vlaneseq
  %v31 = vshrl.u32 %v30, 7
  %v32 = vsub.s32 0, %v31
  %v33 = vrot.slane %v28, %v32
  %v37 = vunpack.c.l.b16 %v26
  %v38 = vunpack.c.l.b16 %v27
  %v39 = vpack.c.b16 %v38, %v37
  %v48 = vunpack.c.l.b16 %v18
  %v49 = vunpack.c.l.b16 %v19
  %v50 = vunpack.c.l.b16 %v20
  %v51 = vunpack.c.l.b16 %v21
  %v52 = vunpack.c.l.b16 %v22
  %v53 = vunpack.c.l.b16 %v23
  %v54 = vunpack.c.l.b16 %v24
  %v55 = vunpack.c.l.b16 %v25
  %v56 = vpack.c.b16 %v49, %v48
  %v57 = vpack.c.b16 %v51, %v50
  %v58 = vpack.c.b16 %v53, %v52
  %v59 = vpack.c.b16 %v55, %v54
  %vm64 = vcmask 523264
  %v66 = vsel %vm64, %v39, 0
  %68 = vmatprep.subr.bf16.mxu0 0
  %69 = vmatpush1.bf16.msra.mxu0 %v56
  %70 = vmatprep.subr.bf16.mxu0 0
  %71 = vmatpush1.bf16.msra.mxu0 %v57
  %72 = vmatprep.subr.bf16.mxu0 0
  %73 = vmatpush1.bf16.msra.mxu0 %v58
  %74 = vmatprep.subr.bf16.mxu0 0
  %75 = vmatpush1.bf16.msra.mxu0 %v59
  %76 = vmatprep.subr.bf16.mxu0 0
  %77 = vmatpush1.bf16.msra.mxu0 0
  %78 = vmatprep.subr.bf16.mxu0 0
  %79 = vmatpush1.bf16.msra.mxu0 0
  %80 = vmatprep.subr.bf16.mxu0 0
  %81 = vmatpush1.bf16.msra.mxu0 0
  %82 = vmatprep.subr.bf16.mxu0 0
  %83 = vmatpush1.bf16.msra.mxu0 0
  %84 = vmatprep.subr.bf16.mxu0 0
  %85 = vmatpush1.bf16.msra.mxu0 0
  %86 = vmatprep.subr.bf16.mxu0 0
  %87 = vmatpush1.bf16.msra.mxu0 0
  %88 = vmatprep.subr.bf16.mxu0 0
  %89 = vmatpush1.bf16.msra.mxu0 0
  %90 = vmatprep.subr.bf16.mxu0 0
  %91 = vmatpush1.bf16.msra.mxu0 0
  %92 = vmatprep.subr.bf16.mxu0 0
  %93 = vmatpush1.bf16.msra.mxu0 0
  %94 = vmatprep.subr.bf16.mxu0 0
  %95 = vmatpush1.bf16.msra.mxu0 0
  %96 = vmatprep.subr.bf16.mxu0 0
  %97 = vmatpush1.bf16.msra.mxu0 0
  %98 = vmatprep.subr.bf16.mxu0 0
  %99 = vmatpush1.bf16.msra.mxu0 0
  %100 = vmatprep.mubr.bf16.mxu0 0
  %101 = vmatmul.mubr.bf16.gmra.mrb[0].mxu0 %v66
  %v102 = vpop.f32.mrb[0].mxu0
  %v103 = vadd.f32 %v33, %v102
  %v104 = vpop.f32.mrb[0].mxu0
  %v105 = vpop.f32.mrb[0].mxu0
  %v106 = vadd.f32 %v33, %v105
  %v107 = vpop.f32.mrb[0].mxu0
  %108 = vdwg.mxu0
  %v109 = vld [vmem:[%s3] sm:$0xff]
  %v110 = vld [vmem:[%s3 + $0x8] sm:$0xff]
  %v111 = vadd.f32 %v103, %v109
  %v112 = vadd.f32 %v106, %v110
  %vm113 = vcmask 261120
  %114 = vst.msk [vmem:[%s4] sm:$0xff] %vm113, %v111
  %115 = vst.msk [vmem:[%s4 + $0x8] sm:$0xff] %vm113, %v112
  // Predicated region
  $region18: #{mbart_decoder_forward.30} parent=0 // pred_check
    _
  $region19: #{mbart_decoder_forward.30} parent=0 // pred_check_branch
    %117 = sbr.rel (0) target = $region21
  $region20: #{mbart_decoder_forward.30} parent=0 // pred_region
    _
  $region21: #{mbart_decoder_forward.30} parent=0 // pred_fallthru
    _
  // Predicated region
  $region22: #{mbart_decoder_forward.30} parent=0 // pred_check
    _
  $region23: #{mbart_decoder_forward.30} parent=0 // pred_check_branch
    %119 = sbr.rel (0) target = $region25
  $region24: #{mbart_decoder_forward.30} parent=0 // pred_region
    _
  $region25: #{mbart_decoder_forward.30} parent=0 // pred_fallthru
    _

// kernel: mbart_decoder_forward.40
$region0: #{mbart_decoder_forward.40}
  #allocation0 [shape = 'u32[]', space=smem, size = 0x4, offset = 0x4, fixed_abs, tag = 'smem constant byte address 0x4 - core index']
  #allocation1 [shape = 'u32[144,128]{1,0:T(1,128)}', space=vmem, size = 0x12000, scoped, tag = 'internal scratch']
  %s0 = inlined_call_operand.vmem [shape: f32[16,32], index: 0, kind: input, shape index: {}]
  %s1 = inlined_call_operand.vmem [shape: f32[1,32], index: 1, kind: input, shape index: {}]
  %s2 = inlined_call_operand.vmem [shape: f32[1,32], index: 2, kind: input, shape index: {}]
  %s3 = inlined_call_operand.vmem [shape: bf16[16,32], index: 3, kind: output, shape index: {}]
  %s4 = sld [smem:[#allocation0]]
  $region22: #{mbart_decoder_forward.40} parent=0
    _
  %s6 = ssub.s32 1, %s4
  %s7 = scalar_select 0, %s6, %s4
  // Predicated region
  $region2: #{mbart_decoder_forward.40} parent=0 // pred_check
    _
  $region3: #{mbart_decoder_forward.40} parent=0 // pred_check_branch
    %9 = sbr.rel (0) target = $region5
  $region4: #{mbart_decoder_forward.40} parent=0 // pred_region
    _
  $region5: #{mbart_decoder_forward.40} parent=0 // pred_fallthru
    _
  // Predicated region
  $region6: #{mbart_decoder_forward.40} parent=0 // pred_check
    _
  $region7: #{mbart_decoder_forward.40} parent=0 // pred_check_branch
    %11 = sbr.rel (0) target = $region9
  $region8: #{mbart_decoder_forward.40} parent=0 // pred_region
    _
  $region9: #{mbart_decoder_forward.40} parent=0 // pred_fallthru
    _
  // Predicated region
  $region10: #{mbart_decoder_forward.40} parent=0 // pred_check
    _
  $region11: #{mbart_decoder_forward.40} parent=0 // pred_check_branch
    %13 = sbr.rel (0) target = $region13
  $region12: #{mbart_decoder_forward.40} parent=0 // pred_region
    _
  $region13: #{mbart_decoder_forward.40} parent=0 // pred_fallthru
    _
  %v14 = vld [vmem:[%s0] sm:$0xff]
  %v15 = vld [vmem:[%s0 + $0x8] sm:$0xff]
  %vm16 = vcmask 261120
  %v17 = vsel %vm16, %v14, 0.0
  %18 = vadd.xlane.f32.xlu0 %v17
  %v19 = vpop.xlane.xlu0 %18
  %v20 = vsel %vm16, %v15, 0.0
  %21 = vadd.xlane.f32.xlu0 %v20
  %v22 = vpop.xlane.xlu0 %21
  %v23 = vrcp.pop 32.0
  %v24 = vmul.f32 %v19, %v23
  %v25 = vmul.f32 %v22, %v23
  %v26 = vsub.f32 %v14, %v24
  %v27 = vsub.f32 %v15, %v25
  %v28 = vmul.f32 %v26, %v26
  %v29 = vmul.f32 %v27, %v27
  %v30 = vsel %vm16, %v28, 0.0
  %31 = vadd.xlane.f32.xlu0 %v30
  %v32 = vpop.xlane.xlu0 %31
  %v33 = vsel %vm16, %v29, 0.0
  %34 = vadd.xlane.f32.xlu0 %v33
  %v35 = vpop.xlane.xlu0 %34
  %v36 = vmul.f32 %v32, %v23
  %v37 = vmul.f32 %v35, %v23
  %v38 = vadd.f32 %v36, 1e-05
  %v39 = vadd.f32 %v37, 1e-05
  %v40 = vrsqrt.pop %v38
  %v41 = vrsqrt.pop %v39
  %v42 = vmul.f32 %v26, %v40
  %v43 = vmul.f32 %v27, %v41
  %v44 = vld [vmem:[%s1] sm:$0x1]
  %v46 = vlaneseq
  %v47 = vshrl.u32 %v46, 7
  %v48 = vsub.s32 0, %v47
  %v49 = vrot.slane %v44, %v48
  %v51 = vmul.f32 %v42, %v49
  %v52 = vmul.f32 %v43, %v49
  %v53 = vld [vmem:[%s2] sm:$0x1]
  %v55 = vlaneseq
  %v56 = vshrl.u32 %v55, 7
  %v57 = vsub.s32 0, %v56
  %v58 = vrot.slane %v53, %v57
  %v60 = vadd.f32 %v51, %v58
  %v61 = vadd.f32 %v52, %v58
  %v62 = vpack.c.bf16 %v61, %v60
  %v64 = vunpack.c.l.b16 %v62
  %v65 = vunpack.c.h.b16 %v62
  %v66 = vpack.c.b16 %v64, %v64
  %v67 = vpack.c.b16 %v65, %v65
  %vm70 = vcmask 257024
  %71 = vst.msk [vmem:[%s3] sm:$0xf] %vm70, %v66
  %72 = vst.msk [vmem:[%s3 + $0x4] sm:$0xf] %vm70, %v67
  // Predicated region
  $region14: #{mbart_decoder_forward.40} parent=0 // pred_check
    _
  $region15: #{mbart_decoder_forward.40} parent=0 // pred_check_branch
    %74 = sbr.rel (0) target = $region17
  $region16: #{mbart_decoder_forward.40} parent=0 // pred_region
    _
  $region17: #{mbart_decoder_forward.40} parent=0 // pred_fallthru
    _
  // Predicated region
  $region18: #{mbart_decoder_forward.40} parent=0 // pred_check
    _
  $region19: #{mbart_decoder_forward.40} parent=0 // pred_check_branch
    %76 = sbr.rel (0) target = $region21
  $region20: #{mbart_decoder_forward.40} parent=0 // pred_region
    _
  $region21: #{mbart_decoder_forward.40} parent=0 // pred_fallthru
    _

// kernel: mbart_decoder_forward.29
$region0: #{mbart_decoder_forward.29}
  #allocation0 [shape = 'u32[]', space=smem, size = 0x4, offset = 0x4, fixed_abs, tag = 'smem constant byte address 0x4 - core index']
  #allocation1 [shape = 'u32[144,128]{1,0:T(1,128)}', space=vmem, size = 0x12000, scoped, tag = 'internal scratch']
  #allocation2 [shape = 'bf16[16,32]{1,0:T(16,128)(2,1)}', space=vmem, size = 0x1000, scoped, tag = 'scratch operand']
  %s0 = inlined_call_operand.vmem [shape: f32[16,32], index: 0, kind: input, shape index: {}]
  %s1 = inlined_call_operand.vmem [shape: f32[1,32], index: 1, kind: input, shape index: {}]
  %s2 = inlined_call_operand.vmem [shape: f32[1,32], index: 2, kind: input, shape index: {}]
  %s3 = inlined_call_operand.vmem [shape: bf16[32,64], index: 3, kind: input, shape index: {}]
  %s4 = inlined_call_operand.vmem [shape: f32[1,64], index: 4, kind: input, shape index: {}]
  %s5 = inlined_call_operand.vmem [shape: bf16[16,64], index: 5, kind: output, shape index: {}]
  %s6 = sld [smem:[#allocation0]]
  $region34: #{mbart_decoder_forward.29} parent=0
    _
  %s8 = ssub.s32 1, %s6
  %s9 = scalar_select 0, %s8, %s6
  // Predicated region
  $region2: #{mbart_decoder_forward.29} parent=0 // pred_check
    _
  $region3: #{mbart_decoder_forward.29} parent=0 // pred_check_branch
    %11 = sbr.rel (0) target = $region5
  $region4: #{mbart_decoder_forward.29} parent=0 // pred_region
    _
  $region5: #{mbart_decoder_forward.29} parent=0 // pred_fallthru
    _
  // Predicated region
  $region6: #{mbart_decoder_forward.29} parent=0 // pred_check
    _
  $region7: #{mbart_decoder_forward.29} parent=0 // pred_check_branch
    %13 = sbr.rel (0) target = $region9
  $region8: #{mbart_decoder_forward.29} parent=0 // pred_region
    _
  $region9: #{mbart_decoder_forward.29} parent=0 // pred_fallthru
    _
  // Predicated region
  $region10: #{mbart_decoder_forward.29} parent=0 // pred_check
    _
  $region11: #{mbart_decoder_forward.29} parent=0 // pred_check_branch
    %15 = sbr.rel (0) target = $region13
  $region12: #{mbart_decoder_forward.29} parent=0 // pred_region
    _
  $region13: #{mbart_decoder_forward.29} parent=0 // pred_fallthru
    _
  // Predicated region
  $region14: #{mbart_decoder_forward.29} parent=0 // pred_check
    _
  $region15: #{mbart_decoder_forward.29} parent=0 // pred_check_branch
    %17 = sbr.rel (0) target = $region17
  $region16: #{mbart_decoder_forward.29} parent=0 // pred_region
    _
  $region17: #{mbart_decoder_forward.29} parent=0 // pred_fallthru
    _
  // Predicated region
  $region18: #{mbart_decoder_forward.29} parent=0 // pred_check
    _
  $region19: #{mbart_decoder_forward.29} parent=0 // pred_check_branch
    %19 = sbr.rel (0) target = $region21
  $region20: #{mbart_decoder_forward.29} parent=0 // pred_region
    _
  $region21: #{mbart_decoder_forward.29} parent=0 // pred_fallthru
    _
  %p21 = scmp.eq.s32.totalorder 0, 0
  // Predicated region
  $region22: #{mbart_decoder_forward.29} parent=0 // pred_check
    %p22 = pneg %p21
  $region23: #{mbart_decoder_forward.29} parent=0 // pred_check_branch
    %24 = sbr.rel (%p22) target = $region25
  $region24: #{mbart_decoder_forward.29} parent=0 // pred_region
    %v25 = vld [vmem:[%s0] sm:$0xff]
    %v26 = vld [vmem:[%s0 + $0x8] sm:$0xff]
    %vm27 = vcmask 261120
    %v28 = vsel %vm27, %v25, 0.0
    %29 = vadd.xlane.f32.xlu0 %v28
    %v30 = vpop.xlane.xlu0 %29
    %v31 = vsel %vm27, %v26, 0.0
    %32 = vadd.xlane.f32.xlu0 %v31
    %v33 = vpop.xlane.xlu0 %32
    %v34 = vrcp.pop 32.0
    %v35 = vmul.f32 %v30, %v34
    %v36 = vmul.f32 %v33, %v34
    %v37 = vsub.f32 %v25, %v35
    %v38 = vsub.f32 %v26, %v36
    %v39 = vmul.f32 %v37, %v37
    %v40 = vmul.f32 %v38, %v38
    %v41 = vsel %vm27, %v39, 0.0
    %42 = vadd.xlane.f32.xlu0 %v41
    %v43 = vpop.xlane.xlu0 %42
    %v44 = vsel %vm27, %v40, 0.0
    %45 = vadd.xlane.f32.xlu0 %v44
    %v46 = vpop.xlane.xlu0 %45
    %v47 = vmul.f32 %v43, %v34
    %v48 = vmul.f32 %v46, %v34
    %v49 = vadd.f32 %v47, 1e-05
    %v50 = vadd.f32 %v48, 1e-05
    %v51 = vrsqrt.pop %v49
    %v52 = vrsqrt.pop %v50
    %v53 = vmul.f32 %v37, %v51
    %v54 = vmul.f32 %v38, %v52
    %v55 = vld [vmem:[%s1] sm:$0x1]
    %v57 = vlaneseq
    %v58 = vshrl.u32 %v57, 7
    %v59 = vsub.s32 0, %v58
    %v60 = vrot.slane %v55, %v59
    %v62 = vmul.f32 %v53, %v60
    %v63 = vmul.f32 %v54, %v60
    %v64 = vld [vmem:[%s2] sm:$0x1]
    %v66 = vlaneseq
    %v67 = vshrl.u32 %v66, 7
    %v68 = vsub.s32 0, %v67
    %v69 = vrot.slane %v64, %v68
    %v71 = vadd.f32 %v62, %v69
    %v72 = vadd.f32 %v63, %v69
    %v73 = vpack.c.bf16 %v72, %v71
    %74 = vst.msk [vmem:[#allocation2] sm:$0xff] %vm27, %v73
  $region25: #{mbart_decoder_forward.29} parent=0 // pred_fallthru
    _
  %v75 = vld [vmem:[%s3] sm:$0xf]
  %v76 = vld [vmem:[%s3 + $0x4] sm:$0xf]
  %v77 = vld [vmem:[%s3 + $0x8] sm:$0xf]
  %v78 = vld [vmem:[%s3 + $0xc] sm:$0xf]
  %v79 = vld [vmem:[#allocation2] sm:$0xff]
  %v80 = vld [vmem:[%s4] sm:$0x1]
  %v82 = vlaneseq
  %v83 = vshrl.u32 %v82, 7
  %v84 = vsub.s32 0, %v83
  %v85 = vrot.slane %v80, %v84
  %v91 = vunpack.c.l.b16 %v75
  %v92 = vunpack.c.l.b16 %v76
  %v93 = vunpack.c.l.b16 %v77
  %v94 = vunpack.c.l.b16 %v78
  %v95 = vpack.c.b16 %v92, %v91
  %v96 = vpack.c.b16 %v94, %v93
  %vm99 = vcmask 261120
  %v101 = vsel %vm99, %v79, 0
  %103 = vmatprep.subr.bf16.mxu0 0
  %104 = vmatpush1.bf16.msra.mxu0 %v95
  %105 = vmatprep.subr.bf16.mxu0 0
  %106 = vmatpush1.bf16.msra.mxu0 %v96
  %107 = vmatprep.subr.bf16.mxu0 0
  %108 = vmatpush1.bf16.msra.mxu0 0
  %109 = vmatprep.subr.bf16.mxu0 0
  %110 = vmatpush1.bf16.msra.mxu0 0
  %111 = vmatprep.subr.bf16.mxu0 0
  %112 = vmatpush1.bf16.msra.mxu0 0
  %113 = vmatprep.subr.bf16.mxu0 0
  %114 = vmatpush1.bf16.msra.mxu0 0
  %115 = vmatprep.subr.bf16.mxu0 0
  %116 = vmatpush1.bf16.msra.mxu0 0
  %117 = vmatprep.subr.bf16.mxu0 0
  %118 = vmatpush1.bf16.msra.mxu0 0
  %119 = vmatprep.subr.bf16.mxu0 0
  %120 = vmatpush1.bf16.msra.mxu0 0
  %121 = vmatprep.subr.bf16.mxu0 0
  %122 = vmatpush1.bf16.msra.mxu0 0
  %123 = vmatprep.subr.bf16.mxu0 0
  %124 = vmatpush1.bf16.msra.mxu0 0
  %125 = vmatprep.subr.bf16.mxu0 0
  %126 = vmatpush1.bf16.msra.mxu0 0
  %127 = vmatprep.subr.bf16.mxu0 0
  %128 = vmatpush1.bf16.msra.mxu0 0
  %129 = vmatprep.subr.bf16.mxu0 0
  %130 = vmatpush1.bf16.msra.mxu0 0
  %131 = vmatprep.subr.bf16.mxu0 0
  %132 = vmatpush1.bf16.msra.mxu0 0
  %133 = vmatprep.subr.bf16.mxu0 0
  %134 = vmatpush1.bf16.msra.mxu0 0
  %135 = vmatprep.mubr.bf16.mxu0 0
  %136 = vmatmul.mubr.bf16.gmra.mrb[0].mxu0 %v101
  %v137 = vpop.f32.mrb[0].mxu0
  %v138 = vadd.f32 %v85, %v137
  %v139 = vpop.f32.mrb[0].mxu0
  %v140 = vpop.f32.mrb[0].mxu0
  %v141 = vadd.f32 %v85, %v140
  %v142 = vpop.f32.mrb[0].mxu0
  %143 = vdwg.mxu0
  %v144 = vmul.f32 %v138, 0.5
  %v145 = vmul.f32 %v141, 0.5
  %v146 = vmul.f32 %v138, 0.70710677
  %v147 = vmul.f32 %v141, 0.70710677
  %vm148 = vcmp.ge.f32.partialorder %v146, 0.0
  %vm149 = vcmp.ge.f32.partialorder %v147, 0.0
  %v150 = vsel %vm148, 1.0, -1.0
  %v151 = vsel %vm149, 1.0, -1.0
  %v152 = vand.u32 2147483647, %v146
  %v153 = vand.u32 2147483647, %v147
  %v154 = vmul.f32 %v152, 0.3275911
  %v155 = vmul.f32 %v153, 0.3275911
  %v156 = vadd.f32 %v154, 1.0
  %v157 = vadd.f32 %v155, 1.0
  %v158 = vrcp.pop %v156
  %v159 = vmul.f32 1.0, %v158
  %v160 = vrcp.pop %v157
  %v161 = vmul.f32 1.0, %v160
  %v162 = vmul.f32 %v159, 1.0614054
  %v163 = vmul.f32 %v161, 1.0614054
  %v164 = vadd.f32 %v162, -1.4531521
  %v165 = vadd.f32 %v163, -1.4531521
  %v166 = vmul.f32 %v164, %v159
  %v167 = vmul.f32 %v165, %v161
  %v168 = vadd.f32 %v166, 1.4214138
  %v169 = vadd.f32 %v167, 1.4214138
  %v170 = vmul.f32 %v168, %v159
  %v171 = vmul.f32 %v169, %v161
  %v172 = vadd.f32 %v170, -0.28449672
  %v173 = vadd.f32 %v171, -0.28449672
  %v174 = vmul.f32 %v172, %v159
  %v175 = vmul.f32 %v173, %v161
  %v176 = vadd.f32 %v174, 0.2548296
  %v177 = vadd.f32 %v175, 0.2548296
  %v178 = vmul.f32 %v176, %v159
  %v179 = vmul.f32 %v177, %v161
  %v180 = vsub.f32 0.0, %v152
  %v181 = vsub.f32 0.0, %v153
  %v182 = vmul.f32 %v180, %v152
  %v183 = vmul.f32 %v181, %v153
  %v184 = vmul.f32 %v182, 1.442695
  %v185 = vpow.pop %v184
  %v186 = vmul.f32 %v183, 1.442695
  %v187 = vpow.pop %v186
  %v188 = vmul.f32 %v178, %v185
  %v189 = vmul.f32 %v179, %v187
  %v190 = vsub.f32 1.0, %v188
  %v191 = vsub.f32 1.0, %v189
  %v192 = vmul.f32 %v150, %v190
  %v193 = vmul.f32 %v151, %v191
  %v194 = vadd.f32 %v192, 1.0
  %v195 = vadd.f32 %v193, 1.0
  %v196 = vmul.f32 %v144, %v194
  %v197 = vmul.f32 %v145, %v195
  %v198 = vpack.c.bf16 %v197, %v196
  %v200 = vunpack.c.l.b16 %v198
  %v201 = vunpack.c.h.b16 %v198
  %v202 = vpack.c.b16 %v200, %v200
  %v203 = vpack.c.b16 %v201, %v201
  %vm206 = vcmask 519168
  %207 = vst.msk [vmem:[%s5] sm:$0xf] %vm206, %v202
  %208 = vst.msk [vmem:[%s5 + $0x4] sm:$0xf] %vm206, %v203
  // Predicated region
  $region26: #{mbart_decoder_forward.29} parent=0 // pred_check
    _
  $region27: #{mbart_decoder_forward.29} parent=0 // pred_check_branch
    %210 = sbr.rel (0) target = $region29
  $region28: #{mbart_decoder_forward.29} parent=0 // pred_region
    _
  $region29: #{mbart_decoder_forward.29} parent=0 // pred_fallthru
    _
  // Predicated region
  $region30: #{mbart_decoder_forward.29} parent=0 // pred_check
    _
  $region31: #{mbart_decoder_forward.29} parent=0 // pred_check_branch
    %212 = sbr.rel (0) target = $region33
  $region32: #{mbart_decoder_forward.29} parent=0 // pred_region
    _
  $region33: #{mbart_decoder_forward.29} parent=0 // pred_fallthru
    _

// kernel: mbart_decoder_forward.41
$region0: #{mbart_decoder_forward.41}
  #allocation0 [shape = 'u32[]', space=smem, size = 0x4, offset = 0x4, fixed_abs, tag = 'smem constant byte address 0x4 - core index']
  #allocation1 [shape = 'u32[144,128]{1,0:T(1,128)}', space=vmem, size = 0x12000, scoped, tag = 'internal scratch']
  #allocation2 [shape = 'f32[16,64]{1,0:T(8,128)}', space=vmem, size = 0x2000, scoped, tag = 'scratch operand']
  %s0 = inlined_call_operand.vmem [shape: bf16[16,32], index: 0, kind: input, shape index: {}]
  %s1 = inlined_call_operand.vmem [shape: bf16[64,32], index: 1, kind: input, shape index: {}]
  %s2 = inlined_call_operand.hbm [shape: f32[16,64], index: 2, kind: output, shape index: {}]
  %s3 = sld [smem:[#allocation0]]
  $region26: #{mbart_decoder_forward.41} parent=0
    _
  %s5 = ssub.s32 1, %s3
  %s6 = scalar_select 0, %s5, %s3
  $region1: #{mbart_decoder_forward.41} parent=0
    #allocation3 [shape = 'u8[8192]{0}', space=vmem, size = 0x2000, scoped, tag = 'output window, operand 0, single buffered']
    #allocation4 [shape = 's32[1]{0}', space=sflag, size = 0x4, scoped, tag = 'scoped memory for mbart_decoder_forward.41']
    %7 = vsyncpa [#allocation4], 0
    // Predicated region
    $region2: #{mbart_decoder_forward.41} parent=1 // pred_check
      _
    $region3: #{mbart_decoder_forward.41} parent=1 // pred_check_branch
      %9 = sbr.rel (0) target = $region5
    $region4: #{mbart_decoder_forward.41} parent=1 // pred_region
      _
    $region5: #{mbart_decoder_forward.41} parent=1 // pred_fallthru
      _
    // Predicated region
    $region6: #{mbart_decoder_forward.41} parent=1 // pred_check
      _
    $region7: #{mbart_decoder_forward.41} parent=1 // pred_check_branch
      %11 = sbr.rel (0) target = $region9
    $region8: #{mbart_decoder_forward.41} parent=1 // pred_region
      _
    $region9: #{mbart_decoder_forward.41} parent=1 // pred_fallthru
      _
    %p13 = scmp.eq.s32.totalorder 0, 0
    // Predicated region
    $region10: #{mbart_decoder_forward.41} parent=1 // pred_check
      %p14 = pneg %p13
    $region11: #{mbart_decoder_forward.41} parent=1 // pred_check_branch
      %16 = sbr.rel (%p14) target = $region13
    $region12: #{mbart_decoder_forward.41} parent=1 // pred_region
      %vm17 = vcmask 523264
      %18 = vst.msk [vmem:[#allocation2] sm:$0xff] %vm17, 0.0
      %19 = vst.msk [vmem:[#allocation2 + $0x8] sm:$0xff] %vm17, 0.0
    $region13: #{mbart_decoder_forward.41} parent=1 // pred_fallthru
      _
    %v20 = vld [vmem:[%s0] sm:$0xf]
    %v21 = vld [vmem:[%s0 + $0x4] sm:$0xf]
    %v22 = vld [vmem:[%s1] sm:$0xf]
    %v23 = vld [vmem:[%s1 + $0x4] sm:$0xf]
    %v24 = vld [vmem:[%s1 + $0x8] sm:$0xf]
    %v25 = vld [vmem:[%s1 + $0xc] sm:$0xf]
    %v26 = vld [vmem:[%s1 + $0x10] sm:$0xf]
    %v27 = vld [vmem:[%s1 + $0x14] sm:$0xf]
    %v28 = vld [vmem:[%s1 + $0x18] sm:$0xf]
    %v29 = vld [vmem:[%s1 + $0x1c] sm:$0xf]
    %v30 = vld [vmem:[#allocation2] sm:$0xff]
    %v31 = vld [vmem:[#allocation2 + $0x8] sm:$0xff]
    %v34 = vunpack.c.l.b16 %v20
    %v35 = vunpack.c.l.b16 %v21
    %v36 = vpack.c.b16 %v35, %v34
    %v45 = vunpack.c.l.b16 %v22
    %v46 = vunpack.c.l.b16 %v23
    %v47 = vunpack.c.l.b16 %v24
    %v48 = vunpack.c.l.b16 %v25
    %v49 = vunpack.c.l.b16 %v26
    %v50 = vunpack.c.l.b16 %v27
    %v51 = vunpack.c.l.b16 %v28
    %v52 = vunpack.c.l.b16 %v29
    %v53 = vpack.c.b16 %v46, %v45
    %v54 = vpack.c.b16 %v48, %v47
    %v55 = vpack.c.b16 %v50, %v49
    %v56 = vpack.c.b16 %v52, %v51
    %vm57 = vcmask 261120
    %v59 = vsel %vm57, %v36, 0
    %v62 = vsel %vm57, %v53, 0
    %v65 = vsel %vm57, %v54, 0
    %v68 = vsel %vm57, %v55, 0
    %v71 = vsel %vm57, %v56, 0
    %73 = vmatprep.subr.bf16.mxu0 0
    %74 = vmatpush1.bf16.xpose.msra.mxu0 %v62
    %75 = vmatprep.subr.bf16.mxu0 0
    %76 = vmatpush1.bf16.xpose.msra.mxu0 %v65
    %77 = vmatprep.subr.bf16.mxu0 0
    %78 = vmatpush1.bf16.xpose.msra.mxu0 %v68
    %79 = vmatprep.subr.bf16.mxu0 0
    %80 = vmatpush1.bf16.xpose.msra.mxu0 %v71
    %81 = vmatprep.subr.bf16.mxu0 0
    %82 = vmatpush1.bf16.xpose.msra.mxu0 0
    %83 = vmatprep.subr.bf16.mxu0 0
    %84 = vmatpush1.bf16.xpose.msra.mxu0 0
    %85 = vmatprep.subr.bf16.mxu0 0
    %86 = vmatpush1.bf16.xpose.msra.mxu0 0
    %87 = vmatprep.subr.bf16.mxu0 0
    %88 = vmatpush1.bf16.xpose.msra.mxu0 0
    %89 = vmatprep.subr.bf16.mxu0 0
    %90 = vmatpush1.bf16.xpose.msra.mxu0 0
    %91 = vmatprep.subr.bf16.mxu0 0
    %92 = vmatpush1.bf16.xpose.msra.mxu0 0
    %93 = vmatprep.subr.bf16.mxu0 0
    %94 = vmatpush1.bf16.xpose.msra.mxu0 0
    %95 = vmatprep.subr.bf16.mxu0 0
    %96 = vmatpush1.bf16.xpose.msra.mxu0 0
    %97 = vmatprep.subr.bf16.mxu0 0
    %98 = vmatpush1.bf16.xpose.msra.mxu0 0
    %99 = vmatprep.subr.bf16.mxu0 0
    %100 = vmatpush1.bf16.xpose.msra.mxu0 0
    %101 = vmatprep.subr.bf16.mxu0 0
    %102 = vmatpush1.bf16.xpose.msra.mxu0 0
    %103 = vmatprep.subr.bf16.mxu0 0
    %104 = vmatpush1.bf16.xpose.msra.mxu0 0
    %105 = vmatprep.mubr.bf16.mxu0 0
    %106 = vmatmul.mubr.bf16.gmra.mrb[0].mxu0 %v59
    %v107 = vpop.f32.mrb[0].mxu0
    %v108 = vadd.f32 0.0, %v107
    %v109 = vpop.f32.mrb[0].mxu0
    %v110 = vpop.f32.mrb[0].mxu0
    %v111 = vadd.f32 0.0, %v110
    %v112 = vpop.f32.mrb[0].mxu0
    %113 = vdwg.mxu0
    %v114 = vadd.f32 %v30, %v108
    %v115 = vadd.f32 %v31, %v111
    %vm116 = vcmask 523264
    %117 = vst.msk [vmem:[#allocation2] sm:$0xff] %vm116, %v114
    %118 = vst.msk [vmem:[#allocation2 + $0x8] sm:$0xff] %vm116, %v115
    // Predicated region
    $region14: #{mbart_decoder_forward.41} parent=1 // pred_check
      %p119 = pneg %p13
    $region15: #{mbart_decoder_forward.41} parent=1 // pred_check_branch
      %121 = sbr.rel (%p119) target = $region17
    $region16: #{mbart_decoder_forward.41} parent=1 // pred_region
      %v122 = vld [vmem:[#allocation2] sm:$0xff]
      %v123 = vld [vmem:[#allocation2 + $0x8] sm:$0xff]
      %124 = vst.msk [vmem:[#allocation3] sm:$0xff] %vm116, %v122
      %125 = vst.msk [vmem:[#allocation3 + $0x8] sm:$0xff] %vm116, %v123
    $region17: #{mbart_decoder_forward.41} parent=1 // pred_fallthru
      _
    // Predicated region
    $region18: #{mbart_decoder_forward.41} parent=1 // pred_check
      _
    $region19: #{mbart_decoder_forward.41} parent=1 // pred_check_branch
      %127 = sbr.rel (0) target = $region21
    $region20: #{mbart_decoder_forward.41} parent=1 // pred_region
      %s129 = ssub.s32 256, 256
      %130 = vsyncadd [#allocation4], %s129
      %s131 = sshll.u32 [#allocation3], 4
      %s132 = int_to_ptr.vmem [resolvable:$true] %s131
      %137 = dma.vmem_to_hbm [thread:$0]  %s132, 256, %s2, [#allocation4], 128, 128, 8
    $region21: #{mbart_decoder_forward.41} parent=1 // pred_fallthru
      _
    // Predicated region
    $region22: #{mbart_decoder_forward.41} parent=1 // pred_check
      _
    $region23: #{mbart_decoder_forward.41} parent=1 // pred_check_branch
      %139 = sbr.rel (0) target = $region25
    $region24: #{mbart_decoder_forward.41} parent=1 // pred_region
      %140 = dma.done [#allocation4], 256
    $region25: #{mbart_decoder_forward.41} parent=1 // pred_fallthru
      _
    %141 = vsyncpa [#allocation4], 1

</llo_original>
